<compile_context>
chip_gen: v6e
topology: v6e:2x2x1
jax: 0.10.0
libtpu: 0.0.40
codegen_flags: <defaults>
</compile_context>

<pallas_src>
import functools

import jax
import jax.numpy as jnp
from jax.experimental import pallas as pl
from jax.experimental.pallas import tpu as pltpu

HIDDEN = 32        # hidden_channels
IN_FEATS = 2       # GraphConv(2, hidden)
NUM_CLASSES = 3    # importance / state heads

_LANE = 128
_SUBLANE = 8


def _round_up(n, m):
    return ((n + m - 1) // m) * m


def _vmem_limit_bytes():
    """Generation-aware scoped-VMEM limit: ~3/4 of physical, capped at 100 MiB."""
    try:
        cap = pltpu.get_tpu_info().vmem_capacity_bytes
    except Exception:
        cap = 64 * 1024 * 1024           # conservative (v7x physical)
    return int(min(cap * 3 // 4, 100 * 1024 * 1024))


def _plan(n):
    """Choose (n_pad, tm, tk, vmem_limit) for an n-node (batched) graph."""
    vmem = _vmem_limit_bytes()
    n128 = _round_up(max(int(n), 1), _LANE)
    n_pad, tm = n128, _LANE
    for t in (512, 256):                  # prefer big row tiles if padding <~25%
        cand = _round_up(n, t)
        if cand <= int(n128 * 1.25):
            n_pad, tm = cand, t
            break
    a_budget = vmem // 3                  # room for double-buffered int8 A tiles
    if 2 * tm * n_pad <= a_budget:
        tk = n_pad                        # full-extent k: one lane-dense stripe/step
    else:
        tk = next(t for t in (2048, 1024, 512, 256, 128) if n_pad % t == 0)
        while 2 * tm * tk > a_budget and tm > _LANE:
            tm //= 2
    return n_pad, tm, tk, vmem


# ---------------------------------------------------------------------------
# GraphConv layer kernel (layers 1 & 2):
#   out = [relu]( (A @ h_src) @ wr + h_root @ wo + b )
# Grid: (row_tiles [parallel], k_tiles [arbitrary]); f32 acc resident per row.
# A tiles arrive as int8 and are cast to bf16 in VMEM (VALU has huge slack).
# ---------------------------------------------------------------------------
def _graph_conv_kernel(a_ref, hsrc_ref, hroot_ref, wr_ref, wo_ref, b_ref,
                       out_ref, acc_ref, *, apply_relu):
    k = pl.program_id(1)

    @pl.when(k == 0)
    def _():
        acc_ref[...] = jnp.zeros_like(acc_ref)

    a = a_ref[...].astype(jnp.float32).astype(jnp.bfloat16)   # int8 -> bf16 (exact)
    acc_ref[...] += jnp.dot(a, hsrc_ref[...], preferred_element_type=jnp.float32)

    @pl.when(k == pl.num_programs(1) - 1)
    def _():
        h = (jnp.dot(acc_ref[...], wr_ref[...], preferred_element_type=jnp.float32)
             + jnp.dot(hroot_ref[...].astype(jnp.float32), wo_ref[...],
                       preferred_element_type=jnp.float32)
             + b_ref[...])
        if apply_relu:
            h = jnp.maximum(h, 0.0)
        out_ref[...] = h.astype(out_ref.dtype)


def _graph_conv(adj_i8, h_src, h_root, wr, wo, b, *, apply_relu, tm, tk,
                vmem_limit):
    n_pad = adj_i8.shape[0]
    f = h_src.shape[1]
    fr = h_root.shape[1]
    hidden = wr.shape[1]
    grid = (n_pad // tm, n_pad // tk)

    flops = 2 * n_pad * n_pad * f + 2 * n_pad * (f + fr) * hidden
    bytes_accessed = (adj_i8.size                                   # int8 A, once
                      + (1 if tk == n_pad else grid[0]) * h_src.size * 2
                      + h_root.size * h_root.dtype.itemsize
                      + (wr.size + wo.size + b.size) * 4
                      + n_pad * hidden * 2)                         # bf16 output

    kernel = functools.partial(_graph_conv_kernel, apply_relu=apply_relu)
    return pl.pallas_call(
        kernel,
        out_shape=jax.ShapeDtypeStruct((n_pad, hidden), jnp.bfloat16),
        grid_spec=pltpu.PrefetchScalarGridSpec(
            num_scalar_prefetch=0,
            grid=grid,
            in_specs=[
                pl.BlockSpec((tm, tk), lambda r, k: (r, k)),       # A tile (int8)
                pl.BlockSpec((tk, f), lambda r, k: (k, 0)),        # h_src k-tile (bf16)
                pl.BlockSpec((tm, fr), lambda r, k: (r, 0)),       # root row tile
                pl.BlockSpec((f, hidden), lambda r, k: (0, 0)),    # wr
                pl.BlockSpec((fr, hidden), lambda r, k: (0, 0)),   # wo
                pl.BlockSpec((1, hidden), lambda r, k: (0, 0)),    # b
            ],
            out_specs=pl.BlockSpec((tm, hidden), lambda r, k: (r, 0)),
            scratch_shapes=[pltpu.VMEM((tm, f), jnp.float32)],
        ),
        compiler_params=pltpu.CompilerParams(
            dimension_semantics=("parallel", "arbitrary"),
            vmem_limit_bytes=vmem_limit,
        ),
        cost_estimate=pl.CostEstimate(flops=flops, transcendentals=0,
                                      bytes_accessed=bytes_accessed),
    )(adj_i8, h_src, h_root, wr, wo, b)


# ---------------------------------------------------------------------------
# Layer 3 + global_mean_pool + both heads, fused into one kernel.
# Per row tile (at k == last) the per-graph one-hot is built from batch ids and
# folded into a (g_pad, hidden) sum scratch; the heads run on the last step.
# Row axis is 'arbitrary' (cross-row-tile accumulation -> no v7x megacore race).
# ---------------------------------------------------------------------------
def _conv3_pool_heads_kernel(a_ref, hsrc_ref, hroot_ref, bid_ref,
                             wr_ref, wo_ref, b_ref,
                             wimp_ref, bimp_ref, wstx_ref, wsti_ref, bst_ref,
                             imp_ref, st_ref,
                             acc_ref, sum_ref, cnt_ref):
    r = pl.program_id(0)
    k = pl.program_id(1)
    last_k = k == pl.num_programs(1) - 1
    last_r = r == pl.num_programs(0) - 1

    @pl.when(jnp.logical_and(r == 0, k == 0))
    def _():
        sum_ref[...] = jnp.zeros_like(sum_ref)
        cnt_ref[...] = jnp.zeros_like(cnt_ref)

    @pl.when(k == 0)
    def _():
        acc_ref[...] = jnp.zeros_like(acc_ref)

    a = a_ref[...].astype(jnp.float32).astype(jnp.bfloat16)   # int8 -> bf16 (exact)
    acc_ref[...] += jnp.dot(a, hsrc_ref[...], preferred_element_type=jnp.float32)

    @pl.when(last_k)
    def _():
        # conv3 epilogue (no relu), kept in VMEM -- h3 never touches HBM.
        h3 = (jnp.dot(acc_ref[...], wr_ref[...], preferred_element_type=jnp.float32)
              + jnp.dot(hroot_ref[...].astype(jnp.float32), wo_ref[...],
                        preferred_element_type=jnp.float32)
              + b_ref[...])
        bids = bid_ref[...]                                    # [1, tm], -1 == pad
        g_pad = sum_ref.shape[0]
        gid = jax.lax.broadcasted_iota(jnp.int32, (g_pad, bids.shape[1]), 0)
        onehot = (gid == bids).astype(jnp.float32)             # [g_pad, tm]
        sum_ref[...] += jnp.dot(onehot, h3, preferred_element_type=jnp.float32)
        cnt_ref[...] += jnp.sum(onehot, axis=1, keepdims=True)

    @pl.when(jnp.logical_and(last_k, last_r))
    def _():
        pooled = sum_ref[...] / jnp.maximum(cnt_ref[...], 1.0)          # [g_pad, H]
        imp = (jnp.dot(pooled, wimp_ref[...], preferred_element_type=jnp.float32)
               + bimp_ref[...])
        # state head on cat(pooled, importance) expressed as split-weight dots.
        st = (jnp.dot(pooled, wstx_ref[...], preferred_element_type=jnp.float32)
              + jnp.dot(imp, wsti_ref[...], preferred_element_type=jnp.float32)
              + bst_ref[...])
        imp_ref[...] = imp
        st_ref[...] = st


def _conv3_pool_heads(adj_i8, h_src, h_root, bid, wr, wo, b,
                      wimp, bimp, wstx, wsti, bst, *, g_pad, tm, tk, vmem_limit):
    n_pad = adj_i8.shape[0]
    f = h_src.shape[1]
    fr = h_root.shape[1]
    hidden = wr.shape[1]
    grid = (n_pad // tm, n_pad // tk)

    flops = (2 * n_pad * n_pad * f + 2 * n_pad * (f + fr) * hidden
             + 2 * g_pad * n_pad * hidden + 4 * g_pad * hidden * NUM_CLASSES)
    bytes_accessed = (adj_i8.size
                      + (1 if tk == n_pad else grid[0]) * h_src.size * 2
                      + h_root.size * 2 + bid.size * 4
                      + (wr.size + wo.size + b.size + wimp.size + bimp.size
                         + wstx.size + wsti.size + bst.size) * 4
                      + 2 * g_pad * NUM_CLASSES * 4)

    return pl.pallas_call(
        _conv3_pool_heads_kernel,
        out_shape=(jax.ShapeDtypeStruct((g_pad, NUM_CLASSES), jnp.float32),
                   jax.ShapeDtypeStruct((g_pad, NUM_CLASSES), jnp.float32)),
        grid_spec=pltpu.PrefetchScalarGridSpec(
            num_scalar_prefetch=0,
            grid=grid,
            in_specs=[
                pl.BlockSpec((tm, tk), lambda r, k: (r, k)),            # A (int8)
                pl.BlockSpec((tk, f), lambda r, k: (k, 0)),             # h_src tile
                pl.BlockSpec((tm, fr), lambda r, k: (r, 0)),            # root tile
                pl.BlockSpec((1, tm), lambda r, k: (0, r)),             # batch ids
                pl.BlockSpec((f, hidden), lambda r, k: (0, 0)),         # wr3
                pl.BlockSpec((fr, hidden), lambda r, k: (0, 0)),        # wo3
                pl.BlockSpec((1, hidden), lambda r, k: (0, 0)),         # b3
                pl.BlockSpec((hidden, NUM_CLASSES), lambda r, k: (0, 0)),   # wimp
                pl.BlockSpec((1, NUM_CLASSES), lambda r, k: (0, 0)),        # bimp
                pl.BlockSpec((hidden, NUM_CLASSES), lambda r, k: (0, 0)),   # wstx
                pl.BlockSpec((NUM_CLASSES, NUM_CLASSES), lambda r, k: (0, 0)),  # wsti
                pl.BlockSpec((1, NUM_CLASSES), lambda r, k: (0, 0)),        # bst
            ],
            out_specs=(pl.BlockSpec((g_pad, NUM_CLASSES), lambda r, k: (0, 0)),
                       pl.BlockSpec((g_pad, NUM_CLASSES), lambda r, k: (0, 0))),
            scratch_shapes=[pltpu.VMEM((tm, f), jnp.float32),
                            pltpu.VMEM((g_pad, hidden), jnp.float32),
                            pltpu.VMEM((g_pad, 1), jnp.float32)],
        ),
        compiler_params=pltpu.CompilerParams(
            # Row axis must be 'arbitrary': per-graph pooled sums accumulate across
            # row tiles (cross-core accumulation would race under v7x megacore).
            dimension_semantics=("arbitrary", "arbitrary"),
            vmem_limit_bytes=vmem_limit,
        ),
        cost_estimate=pl.CostEstimate(flops=flops, transcendentals=0,
                                      bytes_accessed=bytes_accessed),
    )(adj_i8, h_src, h_root, bid, wr, wo, b, wimp, bimp, wstx, wsti, bst)


# ---------------------------------------------------------------------------
# Graph preparation (build once per graph, reuse across forward calls).
# ---------------------------------------------------------------------------
def prepare_graph(x, edge_index, batch, *, n_pad):
    """Padded int8 adjacency (block-diagonal over batched graphs, 'add' aggregation
    over incoming edges), padded f32 node features and int32 batch ids.
    NOTE: int8 adjacency is exact only for edge multiplicity <= 127 (always true
    for simple graphs)."""
    x = x.astype(jnp.float32)
    n = x.shape[0]
    src, dst = edge_index[0], edge_index[1]
    adj = (jnp.zeros((n_pad, n_pad), jnp.int32)
           .at[dst, src].add(1)
           .astype(jnp.int8))
    x_pad = jnp.zeros((n_pad, IN_FEATS), jnp.float32).at[:n].set(x)
    bid = (jnp.full((1, n_pad), -1, jnp.int32)
           .at[0, :n].set(batch.astype(jnp.int32)))
    return adj, x_pad, bid


# ---------------------------------------------------------------------------
# Forward pass
# ---------------------------------------------------------------------------
def gnn_forward_prepared(adj_i8, x_pad, bid, params, *, num_graphs, tm, tk,
                         vmem_limit):
    """Forward pass on a pre-built (cached) padded graph."""
    # Layer 1 reassociated: A @ (x @ wr1) -- tiny [N,2]@[2,32] projection in the
    # wrapper makes the streamed operand / accumulator 32 lanes wide.
    xr = (x_pad @ params["wr1"]).astype(jnp.bfloat16)
    eye_h = jnp.eye(HIDDEN, dtype=jnp.float32)

    h1 = _graph_conv(adj_i8, xr, x_pad, eye_h, params["wo1"], params["b1"],
                     apply_relu=True, tm=tm, tk=tk, vmem_limit=vmem_limit)
    h2 = _graph_conv(adj_i8, h1, h1, params["wr2"], params["wo2"], params["b2"],
                     apply_relu=True, tm=tm, tk=tk, vmem_limit=vmem_limit)

    g_pad = _round_up(max(num_graphs, 1), _SUBLANE)
    imp_p, st_p = _conv3_pool_heads(
        adj_i8, h2, h2, bid, params["wr3"], params["wo3"], params["b3"],
        params["wimp"], params["bimp"], params["wstx"], params["wsti"],
        params["bst"], g_pad=g_pad, tm=tm, tk=tk, vmem_limit=vmem_limit)
    return imp_p[:num_graphs], st_p[:num_graphs]


def gnn_forward(x, edge_index, batch, params, *, num_graphs):
    """Convenience wrapper (rebuilds the adjacency each call).  For repeated calls
    on the same graph, call prepare_graph once and use gnn_forward_prepared."""
    n_pad, tm, tk, vmem = _plan(x.shape[0])
    adj, x_pad, bid = prepare_graph(x, edge_index, batch, n_pad=n_pad)
    return gnn_forward_prepared(adj, x_pad, bid, params, num_graphs=num_graphs,
                                tm=tm, tk=tk, vmem_limit=vmem)


# ---------------------------------------------------------------------------
# Parameters (PyTorch-Linear-style init; weights stored [in, out], bias [1, out])
# ---------------------------------------------------------------------------
def init_params(key, hidden=HIDDEN):
    def lin(k, fan_in, fan_out, bias=True):
        kw, kb = jax.random.split(k)
        bound = 1.0 / (fan_in ** 0.5)
        w = jax.random.uniform(kw, (fan_in, fan_out), jnp.float32, -bound, bound)
        b = (jax.random.uniform(kb, (1, fan_out), jnp.float32, -bound, bound)
             if bias else None)
        return w, b

    keys = jax.random.split(key, 8)
    wr1, b1 = lin(keys[0], IN_FEATS, hidden)
    wo1, _ = lin(keys[1], IN_FEATS, hidden, bias=False)
    wr2, b2 = lin(keys[2], hidden, hidden)
    wo2, _ = lin(keys[3], hidden, hidden, bias=False)
    wr3, b3 = lin(keys[4], hidden, hidden)
    wo3, _ = lin(keys[5], hidden, hidden, bias=False)
    wimp, bimp = lin(keys[6], hidden, NUM_CLASSES)
    wst, bst = lin(keys[7], hidden + NUM_CLASSES, NUM_CLASSES)
    return dict(wr1=wr1, wo1=wo1, b1=b1,
                wr2=wr2, wo2=wo2, b2=b2,
                wr3=wr3, wo3=wo3, b3=b3,
                wimp=wimp, bimp=bimp,
                wstx=wst[:hidden, :], wsti=wst[hidden:, :], bst=bst)


# ---------------------------------------------------------------------------
# Pure-JAX reference (original f32 semantics).
# ---------------------------------------------------------------------------
def _reference_forward(x, edge_index, batch, params, num_graphs):
    x = x.astype(jnp.float32)
    n = x.shape[0]
    src, dst = edge_index[0], edge_index[1]
    adj = jnp.zeros((n, n), jnp.float32).at[dst, src].add(1.0)

    def conv(h, wr, wo, b):
        return jnp.dot(adj, h) @ wr + h @ wo + b

    h = jax.nn.relu(conv(x, params["wr1"], params["wo1"], params["b1"]))
    h = jax.nn.relu(conv(h, params["wr2"], params["wo2"], params["b2"]))
    h = conv(h, params["wr3"], params["wo3"], params["b3"])
    counts = jnp.zeros((num_graphs,), jnp.float32).at[batch].add(1.0)
    onehot = (jnp.arange(num_graphs)[:, None] == batch[None, :]).astype(jnp.float32)
    pooled = (onehot @ h) / jnp.maximum(counts, 1.0)[:, None]
    imp = pooled @ params["wimp"] + params["bimp"]
    st = pooled @ params["wstx"] + imp @ params["wsti"] + params["bst"]
    return imp, st


if __name__ == "__main__":
    key = jax.random.PRNGKey(0)
    k_x, k_e, k_p = jax.random.split(key, 3)

    N, E, G = 16, 32, 2
    x = jax.random.normal(k_x, (N, IN_FEATS), jnp.float32)
    edge_index = jax.random.randint(k_e, (2, E), 0, N, dtype=jnp.int32)
    batch = jnp.concatenate([jnp.zeros((N // 2,), jnp.int32),
                             jnp.ones((N // 2,), jnp.int32)])
    params = init_params(k_p)

    # Build the padded graph once (cached), then run the jitted forward on it.
    n_pad, tm, tk, vmem = _plan(N)
    adj, x_pad, bid = prepare_graph(x, edge_index, batch, n_pad=n_pad)

    fwd = jax.jit(functools.partial(gnn_forward_prepared, num_graphs=G,
                                    tm=tm, tk=tk, vmem_limit=vmem))
    importance, state = fwd(adj, x_pad, bid, params)
    jax.block_until_ready((importance, state))

    assert importance.shape == (G, NUM_CLASSES) and importance.dtype == jnp.float32
    assert state.shape == (G, NUM_CLASSES) and state.dtype == jnp.float32

    imp_ref, st_ref = _reference_forward(x, edge_index, batch, params, G)
    # Tolerance 2e-2 (tightened from 5e-2): accounts for the deliberate bf16
    # storage of hidden activations; adjacency (int8) and heads stay exact/f32.
    assert bool(jnp.allclose(importance, imp_ref, rtol=2e-2, atol=2e-2)), (
        float(jnp.max(jnp.abs(importance - imp_ref))))
    assert bool(jnp.allclose(state, st_ref, rtol=2e-2, atol=2e-2)), (
        float(jnp.max(jnp.abs(state - st_ref))))
    print("KERNEL_OK")
</pallas_src>

<mosaic_0001>
module attributes {stable_mosaic.version = 11 : i64} {
  func.func @_graph_conv_kernel(%arg0: i32, %arg1: i32, %arg2: memref<128x128xi8, #tpu.memory_space<vmem>>, %arg3: memref<128x32xbf16, #tpu.memory_space<vmem>>, %arg4: memref<128x32xbf16, #tpu.memory_space<vmem>>, %arg5: memref<32x32xf32, #tpu.memory_space<vmem>>, %arg6: memref<32x32xf32, #tpu.memory_space<vmem>>, %arg7: memref<1x32xf32, #tpu.memory_space<vmem>>, %arg8: memref<128x32xbf16, #tpu.memory_space<vmem>>, %arg9: memref<128x32xf32, #tpu.memory_space<vmem>>) attributes {dimension_semantics = [#tpu.dimension_semantics<parallel>, #tpu.dimension_semantics<arbitrary>], iteration_bounds = array<i64: 1, 1>, scalar_prefetch = 0 : i64, scratch_operands = 1 : i64, tpu.core_type = #tpu.core_type<tc>, window_params = [{transform_indices = @transform_0, window_bounds = array<i64: 128, 128>}, {transform_indices = @transform_1, window_bounds = array<i64: 128, 32>}, {transform_indices = @transform_2, window_bounds = array<i64: 128, 32>}, {pipeline_mode = #tpu.pipeline_mode<synchronous>, transform_indices = @transform_3, window_bounds = array<i64: 32, 32>}, {pipeline_mode = #tpu.pipeline_mode<synchronous>, transform_indices = @transform_4, window_bounds = array<i64: 32, 32>}, {pipeline_mode = #tpu.pipeline_mode<synchronous>, transform_indices = @transform_5, window_bounds = array<i64: 1, 32>}, {transform_indices = @transform_6, window_bounds = array<i64: 128, 32>}]} {
    %c0_i32 = arith.constant 0 : i32
    %0 = arith.cmpi eq, %arg1, %c0_i32 : i32
    %1 = arith.extui %0 : i1 to i32
    %c0_i32_0 = arith.constant 0 : i32
    %2 = arith.cmpi ne, %1, %c0_i32_0 : i32
    scf.if %2 {
      %cst_10 = arith.constant 0.000000e+00 : f32
      %14 = vector.broadcast %cst_10 : f32 to vector<128x32xf32>
      %c0_11 = arith.constant 0 : index
      %c0_12 = arith.constant 0 : index
      %15 = vector.load %arg9[%c0_11, %c0_12] : memref<128x32xf32, #tpu.memory_space<vmem>>, vector<128x32xf32>
      tpu.vector_store %arg9[%c0_11, %c0_12], %14 {strides = array<i32>} : memref<128x32xf32, #tpu.memory_space<vmem>>, vector<128x32xf32>,
    } else {
    }
    %c0 = arith.constant 0 : index
    %c0_1 = arith.constant 0 : index
    %3 = vector.load %arg2[%c0, %c0_1] : memref<128x128xi8, #tpu.memory_space<vmem>>, vector<128x128xi8>
    %4 = arith.sitofp %3 : vector<128x128xi8> to vector<128x128xf32>
    %5 = arith.truncf %4 : vector<128x128xf32> to vector<128x128xbf16>
    %c0_2 = arith.constant 0 : index
    %c0_3 = arith.constant 0 : index
    %6 = vector.load %arg9[%c0_2, %c0_3] : memref<128x32xf32, #tpu.memory_space<vmem>>, vector<128x32xf32>
    %c0_4 = arith.constant 0 : index
    %c0_5 = arith.constant 0 : index
    %7 = vector.load %arg3[%c0_4, %c0_5] : memref<128x32xbf16, #tpu.memory_space<vmem>>, vector<128x32xbf16>
    %cst = arith.constant dense<0.000000e+00> : vector<128x32xf32>
    %8 = tpu.matmul %5, %7, %cst {dimension_numbers = #tpu.dot_dimension_numbers<[1], [0], [0], [1], [0, 0, 1, 1], [], []>} : vector<128x128xbf16>, vector<128x32xbf16>, vector<128x32xf32> -> vector<128x32xf32>
    %9 = arith.addf %6, %8 : vector<128x32xf32>
    %c0_6 = arith.constant 0 : index
    %c0_7 = arith.constant 0 : index
    %10 = vector.load %arg9[%c0_6, %c0_7] : memref<128x32xf32, #tpu.memory_space<vmem>>, vector<128x32xf32>
    tpu.vector_store %arg9[%c0_6, %c0_7], %9 {strides = array<i32>} : memref<128x32xf32, #tpu.memory_space<vmem>>, vector<128x32xf32>,
    %c0_i32_8 = arith.constant 0 : i32
    %11 = arith.cmpi eq, %arg1, %c0_i32_8 : i32
    %12 = arith.extui %11 : i1 to i32
    %c0_i32_9 = arith.constant 0 : i32
    %13 = arith.cmpi ne, %12, %c0_i32_9 : i32
    scf.if %13 {
      %c0_10 = arith.constant 0 : index
      %c0_11 = arith.constant 0 : index
      %14 = vector.load %arg9[%c0_10, %c0_11] : memref<128x32xf32, #tpu.memory_space<vmem>>, vector<128x32xf32>
      %c0_12 = arith.constant 0 : index
      %c0_13 = arith.constant 0 : index
      %15 = vector.load %arg5[%c0_12, %c0_13] : memref<32x32xf32, #tpu.memory_space<vmem>>, vector<32x32xf32>
      %cst_14 = arith.constant dense<0.000000e+00> : vector<128x32xf32>
      %16 = tpu.matmul %14, %15, %cst_14 {dimension_numbers = #tpu.dot_dimension_numbers<[1], [0], [0], [1], [0, 0, 1, 1], [], []>} : vector<128x32xf32>, vector<32x32xf32>, vector<128x32xf32> -> vector<128x32xf32>
      %c0_15 = arith.constant 0 : index
      %c0_16 = arith.constant 0 : index
      %17 = vector.load %arg4[%c0_15, %c0_16] : memref<128x32xbf16, #tpu.memory_space<vmem>>, vector<128x32xbf16>
      %18 = arith.extf %17 : vector<128x32xbf16> to vector<128x32xf32>
      %c0_17 = arith.constant 0 : index
      %c0_18 = arith.constant 0 : index
      %19 = vector.load %arg6[%c0_17, %c0_18] : memref<32x32xf32, #tpu.memory_space<vmem>>, vector<32x32xf32>
      %cst_19 = arith.constant dense<0.000000e+00> : vector<128x32xf32>
      %20 = tpu.matmul %18, %19, %cst_19 {dimension_numbers = #tpu.dot_dimension_numbers<[1], [0], [0], [1], [0, 0, 1, 1], [], []>} : vector<128x32xf32>, vector<32x32xf32>, vector<128x32xf32> -> vector<128x32xf32>
      %21 = arith.addf %16, %20 : vector<128x32xf32>
      %c0_20 = arith.constant 0 : index
      %c0_21 = arith.constant 0 : index
      %22 = vector.load %arg7[%c0_20, %c0_21] : memref<1x32xf32, #tpu.memory_space<vmem>>, vector<1x32xf32>
      %23 = vector.broadcast %22 : vector<1x32xf32> to vector<128x32xf32>
      %24 = arith.addf %21, %23 : vector<128x32xf32>
      %cst_22 = arith.constant 0.000000e+00 : f32
      %25 = vector.broadcast %cst_22 : f32 to vector<128x32xf32>
      %26 = arith.maximumf %24, %25 : vector<128x32xf32>
      %27 = arith.truncf %26 : vector<128x32xf32> to vector<128x32xbf16>
      %c0_23 = arith.constant 0 : index
      %c0_24 = arith.constant 0 : index
      %28 = vector.load %arg8[%c0_23, %c0_24] : memref<128x32xbf16, #tpu.memory_space<vmem>>, vector<128x32xbf16>
      tpu.vector_store %arg8[%c0_23, %c0_24], %27 {strides = array<i32>} : memref<128x32xbf16, #tpu.memory_space<vmem>>, vector<128x32xbf16>,
    } else {
    }
    return
  }
  func.func @transform_0(%arg0: i32, %arg1: i32) -> (i32, i32) {
    %c0_i32 = arith.constant 0 : i32
    return %arg0, %arg1 : i32, i32
  }
  func.func @transform_1(%arg0: i32, %arg1: i32) -> (i32, i32) {
    %c0_i32 = arith.constant 0 : i32
    %c0_i32_0 = arith.constant 0 : i32
    return %arg1, %c0_i32 : i32, i32
  }
  func.func @transform_2(%arg0: i32, %arg1: i32) -> (i32, i32) {
    %c0_i32 = arith.constant 0 : i32
    %c0_i32_0 = arith.constant 0 : i32
    return %arg0, %c0_i32 : i32, i32
  }
  func.func @transform_3(%arg0: i32, %arg1: i32) -> (i32, i32) {
    %c0_i32 = arith.constant 0 : i32
    %c0_i32_0 = arith.constant 0 : i32
    %c0_i32_1 = arith.constant 0 : i32
    return %c0_i32, %c0_i32_0 : i32, i32
  }
  func.func @transform_4(%arg0: i32, %arg1: i32) -> (i32, i32) {
    %c0_i32 = arith.constant 0 : i32
    %c0_i32_0 = arith.constant 0 : i32
    %c0_i32_1 = arith.constant 0 : i32
    return %c0_i32, %c0_i32_0 : i32, i32
  }
  func.func @transform_5(%arg0: i32, %arg1: i32) -> (i32, i32) {
    %c0_i32 = arith.constant 0 : i32
    %c0_i32_0 = arith.constant 0 : i32
    %c0_i32_1 = arith.constant 0 : i32
    return %c0_i32, %c0_i32_0 : i32, i32
  }
  func.func @transform_6(%arg0: i32, %arg1: i32) -> (i32, i32) {
    %c0_i32 = arith.constant 0 : i32
    %c0_i32_0 = arith.constant 0 : i32
    return %arg0, %c0_i32 : i32, i32
  }
}

module attributes {stable_mosaic.version = 11 : i64} {
  func.func @_graph_conv_kernel(%arg0: i32, %arg1: i32, %arg2: memref<128x128xi8, #tpu.memory_space<vmem>>, %arg3: memref<128x32xbf16, #tpu.memory_space<vmem>>, %arg4: memref<128x2xf32, #tpu.memory_space<vmem>>, %arg5: memref<32x32xf32, #tpu.memory_space<vmem>>, %arg6: memref<2x32xf32, #tpu.memory_space<vmem>>, %arg7: memref<1x32xf32, #tpu.memory_space<vmem>>, %arg8: memref<128x32xbf16, #tpu.memory_space<vmem>>, %arg9: memref<128x32xf32, #tpu.memory_space<vmem>>) attributes {dimension_semantics = [#tpu.dimension_semantics<parallel>, #tpu.dimension_semantics<arbitrary>], iteration_bounds = array<i64: 1, 1>, scalar_prefetch = 0 : i64, scratch_operands = 1 : i64, tpu.core_type = #tpu.core_type<tc>, window_params = [{transform_indices = @transform_0, window_bounds = array<i64: 128, 128>}, {transform_indices = @transform_1, window_bounds = array<i64: 128, 32>}, {transform_indices = @transform_2, window_bounds = array<i64: 128, 2>}, {pipeline_mode = #tpu.pipeline_mode<synchronous>, transform_indices = @transform_3, window_bounds = array<i64: 32, 32>}, {pipeline_mode = #tpu.pipeline_mode<synchronous>, transform_indices = @transform_4, window_bounds = array<i64: 2, 32>}, {pipeline_mode = #tpu.pipeline_mode<synchronous>, transform_indices = @transform_5, window_bounds = array<i64: 1, 32>}, {transform_indices = @transform_6, window_bounds = array<i64: 128, 32>}]} {
    %c0_i32 = arith.constant 0 : i32
    %0 = arith.cmpi eq, %arg1, %c0_i32 : i32
    %1 = arith.extui %0 : i1 to i32
    %c0_i32_0 = arith.constant 0 : i32
    %2 = arith.cmpi ne, %1, %c0_i32_0 : i32
    scf.if %2 {
      %cst_10 = arith.constant 0.000000e+00 : f32
      %14 = vector.broadcast %cst_10 : f32 to vector<128x32xf32>
      %c0_11 = arith.constant 0 : index
      %c0_12 = arith.constant 0 : index
      %15 = vector.load %arg9[%c0_11, %c0_12] : memref<128x32xf32, #tpu.memory_space<vmem>>, vector<128x32xf32>
      tpu.vector_store %arg9[%c0_11, %c0_12], %14 {strides = array<i32>} : memref<128x32xf32, #tpu.memory_space<vmem>>, vector<128x32xf32>,
    } else {
    }
    %c0 = arith.constant 0 : index
    %c0_1 = arith.constant 0 : index
    %3 = vector.load %arg2[%c0, %c0_1] : memref<128x128xi8, #tpu.memory_space<vmem>>, vector<128x128xi8>
    %4 = arith.sitofp %3 : vector<128x128xi8> to vector<128x128xf32>
    %5 = arith.truncf %4 : vector<128x128xf32> to vector<128x128xbf16>
    %c0_2 = arith.constant 0 : index
    %c0_3 = arith.constant 0 : index
    %6 = vector.load %arg9[%c0_2, %c0_3] : memref<128x32xf32, #tpu.memory_space<vmem>>, vector<128x32xf32>
    %c0_4 = arith.constant 0 : index
    %c0_5 = arith.constant 0 : index
    %7 = vector.load %arg3[%c0_4, %c0_5] : memref<128x32xbf16, #tpu.memory_space<vmem>>, vector<128x32xbf16>
    %cst = arith.constant dense<0.000000e+00> : vector<128x32xf32>
    %8 = tpu.matmul %5, %7, %cst {dimension_numbers = #tpu.dot_dimension_numbers<[1], [0], [0], [1], [0, 0, 1, 1], [], []>} : vector<128x128xbf16>, vector<128x32xbf16>, vector<128x32xf32> -> vector<128x32xf32>
    %9 = arith.addf %6, %8 : vector<128x32xf32>
    %c0_6 = arith.constant 0 : index
    %c0_7 = arith.constant 0 : index
    %10 = vector.load %arg9[%c0_6, %c0_7] : memref<128x32xf32, #tpu.memory_space<vmem>>, vector<128x32xf32>
    tpu.vector_store %arg9[%c0_6, %c0_7], %9 {strides = array<i32>} : memref<128x32xf32, #tpu.memory_space<vmem>>, vector<128x32xf32>,
    %c0_i32_8 = arith.constant 0 : i32
    %11 = arith.cmpi eq, %arg1, %c0_i32_8 : i32
    %12 = arith.extui %11 : i1 to i32
    %c0_i32_9 = arith.constant 0 : i32
    %13 = arith.cmpi ne, %12, %c0_i32_9 : i32
    scf.if %13 {
      %c0_10 = arith.constant 0 : index
      %c0_11 = arith.constant 0 : index
      %14 = vector.load %arg9[%c0_10, %c0_11] : memref<128x32xf32, #tpu.memory_space<vmem>>, vector<128x32xf32>
      %c0_12 = arith.constant 0 : index
      %c0_13 = arith.constant 0 : index
      %15 = vector.load %arg5[%c0_12, %c0_13] : memref<32x32xf32, #tpu.memory_space<vmem>>, vector<32x32xf32>
      %cst_14 = arith.constant dense<0.000000e+00> : vector<128x32xf32>
      %16 = tpu.matmul %14, %15, %cst_14 {dimension_numbers = #tpu.dot_dimension_numbers<[1], [0], [0], [1], [0, 0, 1, 1], [], []>} : vector<128x32xf32>, vector<32x32xf32>, vector<128x32xf32> -> vector<128x32xf32>
      %c0_15 = arith.constant 0 : index
      %c0_16 = arith.constant 0 : index
      %17 = vector.load %arg4[%c0_15, %c0_16] : memref<128x2xf32, #tpu.memory_space<vmem>>, vector<128x2xf32>
      %c0_17 = arith.constant 0 : index
      %c0_18 = arith.constant 0 : index
      %18 = vector.load %arg6[%c0_17, %c0_18] : memref<2x32xf32, #tpu.memory_space<vmem>>, vector<2x32xf32>
      %cst_19 = arith.constant dense<0.000000e+00> : vector<128x32xf32>
      %19 = tpu.matmul %17, %18, %cst_19 {dimension_numbers = #tpu.dot_dimension_numbers<[1], [0], [0], [1], [0, 0, 1, 1], [], []>} : vector<128x2xf32>, vector<2x32xf32>, vector<128x32xf32> -> vector<128x32xf32>
      %20 = arith.addf %16, %19 : vector<128x32xf32>
      %c0_20 = arith.constant 0 : index
      %c0_21 = arith.constant 0 : index
      %21 = vector.load %arg7[%c0_20, %c0_21] : memref<1x32xf32, #tpu.memory_space<vmem>>, vector<1x32xf32>
      %22 = vector.broadcast %21 : vector<1x32xf32> to vector<128x32xf32>
      %23 = arith.addf %20, %22 : vector<128x32xf32>
      %cst_22 = arith.constant 0.000000e+00 : f32
      %24 = vector.broadcast %cst_22 : f32 to vector<128x32xf32>
      %25 = arith.maximumf %23, %24 : vector<128x32xf32>
      %26 = arith.truncf %25 : vector<128x32xf32> to vector<128x32xbf16>
      %c0_23 = arith.constant 0 : index
      %c0_24 = arith.constant 0 : index
      %27 = vector.load %arg8[%c0_23, %c0_24] : memref<128x32xbf16, #tpu.memory_space<vmem>>, vector<128x32xbf16>
      tpu.vector_store %arg8[%c0_23, %c0_24], %26 {strides = array<i32>} : memref<128x32xbf16, #tpu.memory_space<vmem>>, vector<128x32xbf16>,
    } else {
    }
    return
  }
  func.func @transform_0(%arg0: i32, %arg1: i32) -> (i32, i32) {
    %c0_i32 = arith.constant 0 : i32
    return %arg0, %arg1 : i32, i32
  }
  func.func @transform_1(%arg0: i32, %arg1: i32) -> (i32, i32) {
    %c0_i32 = arith.constant 0 : i32
    %c0_i32_0 = arith.constant 0 : i32
    return %arg1, %c0_i32 : i32, i32
  }
  func.func @transform_2(%arg0: i32, %arg1: i32) -> (i32, i32) {
    %c0_i32 = arith.constant 0 : i32
    %c0_i32_0 = arith.constant 0 : i32
    return %arg0, %c0_i32 : i32, i32
  }
  func.func @transform_3(%arg0: i32, %arg1: i32) -> (i32, i32) {
    %c0_i32 = arith.constant 0 : i32
    %c0_i32_0 = arith.constant 0 : i32
    %c0_i32_1 = arith.constant 0 : i32
    return %c0_i32, %c0_i32_0 : i32, i32
  }
  func.func @transform_4(%arg0: i32, %arg1: i32) -> (i32, i32) {
    %c0_i32 = arith.constant 0 : i32
    %c0_i32_0 = arith.constant 0 : i32
    %c0_i32_1 = arith.constant 0 : i32
    return %c0_i32, %c0_i32_0 : i32, i32
  }
  func.func @transform_5(%arg0: i32, %arg1: i32) -> (i32, i32) {
    %c0_i32 = arith.constant 0 : i32
    %c0_i32_0 = arith.constant 0 : i32
    %c0_i32_1 = arith.constant 0 : i32
    return %c0_i32, %c0_i32_0 : i32, i32
  }
  func.func @transform_6(%arg0: i32, %arg1: i32) -> (i32, i32) {
    %c0_i32 = arith.constant 0 : i32
    %c0_i32_0 = arith.constant 0 : i32
    return %arg0, %c0_i32 : i32, i32
  }
}

module attributes {stable_mosaic.version = 11 : i64} {
  func.func @_conv3_pool_heads_kernel(%arg0: i32, %arg1: i32, %arg2: memref<128x128xi8, #tpu.memory_space<vmem>>, %arg3: memref<128x32xbf16, #tpu.memory_space<vmem>>, %arg4: memref<128x32xbf16, #tpu.memory_space<vmem>>, %arg5: memref<1x128xi32, #tpu.memory_space<vmem>>, %arg6: memref<32x32xf32, #tpu.memory_space<vmem>>, %arg7: memref<32x32xf32, #tpu.memory_space<vmem>>, %arg8: memref<1x32xf32, #tpu.memory_space<vmem>>, %arg9: memref<32x3xf32, #tpu.memory_space<vmem>>, %arg10: memref<1x3xf32, #tpu.memory_space<vmem>>, %arg11: memref<32x3xf32, #tpu.memory_space<vmem>>, %arg12: memref<3x3xf32, #tpu.memory_space<vmem>>, %arg13: memref<1x3xf32, #tpu.memory_space<vmem>>, %arg14: memref<8x3xf32, #tpu.memory_space<vmem>>, %arg15: memref<8x3xf32, #tpu.memory_space<vmem>>, %arg16: memref<128x32xf32, #tpu.memory_space<vmem>>, %arg17: memref<8x32xf32, #tpu.memory_space<vmem>>, %arg18: memref<8x1xf32, #tpu.memory_space<vmem>>) attributes {dimension_semantics = [#tpu.dimension_semantics<arbitrary>, #tpu.dimension_semantics<arbitrary>], iteration_bounds = array<i64: 1, 1>, scalar_prefetch = 0 : i64, scratch_operands = 3 : i64, tpu.core_type = #tpu.core_type<tc>, window_params = [{transform_indices = @transform_0, window_bounds = array<i64: 128, 128>}, {transform_indices = @transform_1, window_bounds = array<i64: 128, 32>}, {transform_indices = @transform_2, window_bounds = array<i64: 128, 32>}, {transform_indices = @transform_3, window_bounds = array<i64: 1, 128>}, {pipeline_mode = #tpu.pipeline_mode<synchronous>, transform_indices = @transform_4, window_bounds = array<i64: 32, 32>}, {pipeline_mode = #tpu.pipeline_mode<synchronous>, transform_indices = @transform_5, window_bounds = array<i64: 32, 32>}, {pipeline_mode = #tpu.pipeline_mode<synchronous>, transform_indices = @transform_6, window_bounds = array<i64: 1, 32>}, {pipeline_mode = #tpu.pipeline_mode<synchronous>, transform_indices = @transform_7, window_bounds = array<i64: 32, 3>}, {pipeline_mode = #tpu.pipeline_mode<synchronous>, transform_indices = @transform_8, window_bounds = array<i64: 1, 3>}, {pipeline_mode = #tpu.pipeline_mode<synchronous>, transform_indices = @transform_9, window_bounds = array<i64: 32, 3>}, {pipeline_mode = #tpu.pipeline_mode<synchronous>, transform_indices = @transform_10, window_bounds = array<i64: 3, 3>}, {pipeline_mode = #tpu.pipeline_mode<synchronous>, transform_indices = @transform_11, window_bounds = array<i64: 1, 3>}, {pipeline_mode = #tpu.pipeline_mode<synchronous>, transform_indices = @transform_12, window_bounds = array<i64: 8, 3>}, {pipeline_mode = #tpu.pipeline_mode<synchronous>, transform_indices = @transform_13, window_bounds = array<i64: 8, 3>}]} {
    %c0_i32 = arith.constant 0 : i32
    %0 = arith.cmpi eq, %arg1, %c0_i32 : i32
    %c0_i32_0 = arith.constant 0 : i32
    %1 = arith.cmpi eq, %arg0, %c0_i32_0 : i32
    %c0_i32_1 = arith.constant 0 : i32
    %2 = arith.cmpi eq, %arg0, %c0_i32_1 : i32
    %c0_i32_2 = arith.constant 0 : i32
    %3 = arith.cmpi eq, %arg1, %c0_i32_2 : i32
    %4 = arith.andi %2, %3 : i1
    %5 = arith.extui %4 : i1 to i32
    %c0_i32_3 = arith.constant 0 : i32
    %6 = arith.cmpi ne, %5, %c0_i32_3 : i32
    scf.if %6 {
      %cst_15 = arith.constant 0.000000e+00 : f32
      %23 = vector.broadcast %cst_15 : f32 to vector<8x32xf32>
      %c0_16 = arith.constant 0 : index
      %c0_17 = arith.constant 0 : index
      %24 = vector.load %arg17[%c0_16, %c0_17] : memref<8x32xf32, #tpu.memory_space<vmem>>, vector<8x32xf32>
      tpu.vector_store %arg17[%c0_16, %c0_17], %23 {strides = array<i32>} : memref<8x32xf32, #tpu.memory_space<vmem>>, vector<8x32xf32>,
      %cst_18 = arith.constant 0.000000e+00 : f32
      %25 = vector.broadcast %cst_18 : f32 to vector<8x1xf32>
      %c0_19 = arith.constant 0 : index
      %c0_20 = arith.constant 0 : index
      %26 = vector.load %arg18[%c0_19, %c0_20] : memref<8x1xf32, #tpu.memory_space<vmem>>, vector<8x1xf32>
      tpu.vector_store %arg18[%c0_19, %c0_20], %25 {strides = array<i32>} : memref<8x1xf32, #tpu.memory_space<vmem>>, vector<8x1xf32>,
    } else {
    }
    %c0_i32_4 = arith.constant 0 : i32
    %7 = arith.cmpi eq, %arg1, %c0_i32_4 : i32
    %8 = arith.extui %7 : i1 to i32
    %c0_i32_5 = arith.constant 0 : i32
    %9 = arith.cmpi ne, %8, %c0_i32_5 : i32
    scf.if %9 {
      %cst_15 = arith.constant 0.000000e+00 : f32
      %23 = vector.broadcast %cst_15 : f32 to vector<128x32xf32>
      %c0_16 = arith.constant 0 : index
      %c0_17 = arith.constant 0 : index
      %24 = vector.load %arg16[%c0_16, %c0_17] : memref<128x32xf32, #tpu.memory_space<vmem>>, vector<128x32xf32>
      tpu.vector_store %arg16[%c0_16, %c0_17], %23 {strides = array<i32>} : memref<128x32xf32, #tpu.memory_space<vmem>>, vector<128x32xf32>,
    } else {
    }
    %c0 = arith.constant 0 : index
    %c0_6 = arith.constant 0 : index
    %10 = vector.load %arg2[%c0, %c0_6] : memref<128x128xi8, #tpu.memory_space<vmem>>, vector<128x128xi8>
    %11 = arith.sitofp %10 : vector<128x128xi8> to vector<128x128xf32>
    %12 = arith.truncf %11 : vector<128x128xf32> to vector<128x128xbf16>
    %c0_7 = arith.constant 0 : index
    %c0_8 = arith.constant 0 : index
    %13 = vector.load %arg16[%c0_7, %c0_8] : memref<128x32xf32, #tpu.memory_space<vmem>>, vector<128x32xf32>
    %c0_9 = arith.constant 0 : index
    %c0_10 = arith.constant 0 : index
    %14 = vector.load %arg3[%c0_9, %c0_10] : memref<128x32xbf16, #tpu.memory_space<vmem>>, vector<128x32xbf16>
    %cst = arith.constant dense<0.000000e+00> : vector<128x32xf32>
    %15 = tpu.matmul %12, %14, %cst {dimension_numbers = #tpu.dot_dimension_numbers<[1], [0], [0], [1], [0, 0, 1, 1], [], []>} : vector<128x128xbf16>, vector<128x32xbf16>, vector<128x32xf32> -> vector<128x32xf32>
    %16 = arith.addf %13, %15 : vector<128x32xf32>
    %c0_11 = arith.constant 0 : index
    %c0_12 = arith.constant 0 : index
    %17 = vector.load %arg16[%c0_11, %c0_12] : memref<128x32xf32, #tpu.memory_space<vmem>>, vector<128x32xf32>
    tpu.vector_store %arg16[%c0_11, %c0_12], %16 {strides = array<i32>} : memref<128x32xf32, #tpu.memory_space<vmem>>, vector<128x32xf32>,
    %18 = arith.extui %0 : i1 to i32
    %c0_i32_13 = arith.constant 0 : i32
    %19 = arith.cmpi ne, %18, %c0_i32_13 : i32
    scf.if %19 {
      %c0_15 = arith.constant 0 : index
      %c0_16 = arith.constant 0 : index
      %23 = vector.load %arg16[%c0_15, %c0_16] : memref<128x32xf32, #tpu.memory_space<vmem>>, vector<128x32xf32>
      %c0_17 = arith.constant 0 : index
      %c0_18 = arith.constant 0 : index
      %24 = vector.load %arg6[%c0_17, %c0_18] : memref<32x32xf32, #tpu.memory_space<vmem>>, vector<32x32xf32>
      %cst_19 = arith.constant dense<0.000000e+00> : vector<128x32xf32>
      %25 = tpu.matmul %23, %24, %cst_19 {dimension_numbers = #tpu.dot_dimension_numbers<[1], [0], [0], [1], [0, 0, 1, 1], [], []>} : vector<128x32xf32>, vector<32x32xf32>, vector<128x32xf32> -> vector<128x32xf32>
      %c0_20 = arith.constant 0 : index
      %c0_21 = arith.constant 0 : index
      %26 = vector.load %arg4[%c0_20, %c0_21] : memref<128x32xbf16, #tpu.memory_space<vmem>>, vector<128x32xbf16>
      %27 = arith.extf %26 : vector<128x32xbf16> to vector<128x32xf32>
      %c0_22 = arith.constant 0 : index
      %c0_23 = arith.constant 0 : index
      %28 = vector.load %arg7[%c0_22, %c0_23] : memref<32x32xf32, #tpu.memory_space<vmem>>, vector<32x32xf32>
      %cst_24 = arith.constant dense<0.000000e+00> : vector<128x32xf32>
      %29 = tpu.matmul %27, %28, %cst_24 {dimension_numbers = #tpu.dot_dimension_numbers<[1], [0], [0], [1], [0, 0, 1, 1], [], []>} : vector<128x32xf32>, vector<32x32xf32>, vector<128x32xf32> -> vector<128x32xf32>
      %30 = arith.addf %25, %29 : vector<128x32xf32>
      %c0_25 = arith.constant 0 : index
      %c0_26 = arith.constant 0 : index
      %31 = vector.load %arg8[%c0_25, %c0_26] : memref<1x32xf32, #tpu.memory_space<vmem>>, vector<1x32xf32>
      %32 = vector.broadcast %31 : vector<1x32xf32> to vector<128x32xf32>
      %33 = arith.addf %30, %32 : vector<128x32xf32>
      %c0_27 = arith.constant 0 : index
      %c0_28 = arith.constant 0 : index
      %34 = vector.load %arg5[%c0_27, %c0_28] : memref<1x128xi32, #tpu.memory_space<vmem>>, vector<1x128xi32>
      %35 = tpu.iota {dimensions = array<i32: 0>} : vector<8x128xi32>
      %36 = vector.broadcast %34 : vector<1x128xi32> to vector<8x128xi32>
      %37 = arith.cmpi eq, %35, %36 : vector<8x128xi32>
      %38 = arith.extui %37 : vector<8x128xi1> to vector<8x128xi32>
      %39 = arith.sitofp %38 : vector<8x128xi32> to vector<8x128xf32>
      %c0_29 = arith.constant 0 : index
      %c0_30 = arith.constant 0 : index
      %40 = vector.load %arg17[%c0_29, %c0_30] : memref<8x32xf32, #tpu.memory_space<vmem>>, vector<8x32xf32>
      %cst_31 = arith.constant dense<0.000000e+00> : vector<8x32xf32>
      %41 = tpu.matmul %39, %33, %cst_31 {dimension_numbers = #tpu.dot_dimension_numbers<[1], [0], [0], [1], [0, 0, 1, 1], [], []>} : vector<8x128xf32>, vector<128x32xf32>, vector<8x32xf32> -> vector<8x32xf32>
      %42 = arith.addf %40, %41 : vector<8x32xf32>
      %c0_32 = arith.constant 0 : index
      %c0_33 = arith.constant 0 : index
      %43 = vector.load %arg17[%c0_32, %c0_33] : memref<8x32xf32, #tpu.memory_space<vmem>>, vector<8x32xf32>
      tpu.vector_store %arg17[%c0_32, %c0_33], %42 {strides = array<i32>} : memref<8x32xf32, #tpu.memory_space<vmem>>, vector<8x32xf32>,
      %c0_34 = arith.constant 0 : index
      %c0_35 = arith.constant 0 : index
      %44 = vector.load %arg18[%c0_34, %c0_35] : memref<8x1xf32, #tpu.memory_space<vmem>>, vector<8x1xf32>
      %cst_36 = arith.constant dense<0.000000e+00> : vector<8xf32>
      %45 = vector.multi_reduction <add>, %39, %cst_36 [1] : vector<8x128xf32> to vector<8xf32>
      %46 = vector.shape_cast %45 : vector<8xf32> to vector<8x1xf32>
      %47 = arith.addf %44, %46 : vector<8x1xf32>
      %c0_37 = arith.constant 0 : index
      %c0_38 = arith.constant 0 : index
      %48 = vector.load %arg18[%c0_37, %c0_38] : memref<8x1xf32, #tpu.memory_space<vmem>>, vector<8x1xf32>
      tpu.vector_store %arg18[%c0_37, %c0_38], %47 {strides = array<i32>} : memref<8x1xf32, #tpu.memory_space<vmem>>, vector<8x1xf32>,
    } else {
    }
    %20 = arith.andi %0, %1 : i1
    %21 = arith.extui %20 : i1 to i32
    %c0_i32_14 = arith.constant 0 : i32
    %22 = arith.cmpi ne, %21, %c0_i32_14 : i32
    scf.if %22 {
      %c0_15 = arith.constant 0 : index
      %c0_16 = arith.constant 0 : index
      %23 = vector.load %arg17[%c0_15, %c0_16] : memref<8x32xf32, #tpu.memory_space<vmem>>, vector<8x32xf32>
      %c0_17 = arith.constant 0 : index
      %c0_18 = arith.constant 0 : index
      %24 = vector.load %arg18[%c0_17, %c0_18] : memref<8x1xf32, #tpu.memory_space<vmem>>, vector<8x1xf32>
      %cst_19 = arith.constant 1.000000e+00 : f32
      %25 = vector.broadcast %cst_19 : f32 to vector<8x1xf32>
      %26 = arith.maximumf %24, %25 : vector<8x1xf32>
      %27 = vector.broadcast %26 : vector<8x1xf32> to vector<8x32xf32>
      %28 = arith.divf %23, %27 : vector<8x32xf32>
      %c0_20 = arith.constant 0 : index
      %c0_21 = arith.constant 0 : index
      %29 = vector.load %arg9[%c0_20, %c0_21] : memref<32x3xf32, #tpu.memory_space<vmem>>, vector<32x3xf32>
      %cst_22 = arith.constant dense<0.000000e+00> : vector<8x3xf32>
      %30 = tpu.matmul %28, %29, %cst_22 {dimension_numbers = #tpu.dot_dimension_numbers<[1], [0], [0], [1], [0, 0, 1, 1], [], []>} : vector<8x32xf32>, vector<32x3xf32>, vector<8x3xf32> -> vector<8x3xf32>
      %c0_23 = arith.constant 0 : index
      %c0_24 = arith.constant 0 : index
      %31 = vector.load %arg10[%c0_23, %c0_24] : memref<1x3xf32, #tpu.memory_space<vmem>>, vector<1x3xf32>
      %32 = vector.broadcast %31 : vector<1x3xf32> to vector<8x3xf32>
      %33 = arith.addf %30, %32 : vector<8x3xf32>
      %c0_25 = arith.constant 0 : index
      %c0_26 = arith.constant 0 : index
      %34 = vector.load %arg11[%c0_25, %c0_26] : memref<32x3xf32, #tpu.memory_space<vmem>>, vector<32x3xf32>
      %cst_27 = arith.constant dense<0.000000e+00> : vector<8x3xf32>
      %35 = tpu.matmul %28, %34, %cst_27 {dimension_numbers = #tpu.dot_dimension_numbers<[1], [0], [0], [1], [0, 0, 1, 1], [], []>} : vector<8x32xf32>, vector<32x3xf32>, vector<8x3xf32> -> vector<8x3xf32>
      %c0_28 = arith.constant 0 : index
      %c0_29 = arith.constant 0 : index
      %36 = vector.load %arg12[%c0_28, %c0_29] : memref<3x3xf32, #tpu.memory_space<vmem>>, vector<3x3xf32>
      %cst_30 = arith.constant dense<0.000000e+00> : vector<8x3xf32>
      %37 = tpu.matmul %33, %36, %cst_30 {dimension_numbers = #tpu.dot_dimension_numbers<[1], [0], [0], [1], [0, 0, 1, 1], [], []>} : vector<8x3xf32>, vector<3x3xf32>, vector<8x3xf32> -> vector<8x3xf32>
      %38 = arith.addf %35, %37 : vector<8x3xf32>
      %c0_31 = arith.constant 0 : index
      %c0_32 = arith.constant 0 : index
      %39 = vector.load %arg13[%c0_31, %c0_32] : memref<1x3xf32, #tpu.memory_space<vmem>>, vector<1x3xf32>
      %40 = vector.broadcast %39 : vector<1x3xf32> to vector<8x3xf32>
      %41 = arith.addf %38, %40 : vector<8x3xf32>
      %c0_33 = arith.constant 0 : index
      %c0_34 = arith.constant 0 : index
      %42 = vector.load %arg14[%c0_33, %c0_34] : memref<8x3xf32, #tpu.memory_space<vmem>>, vector<8x3xf32>
      tpu.vector_store %arg14[%c0_33, %c0_34], %33 {strides = array<i32>} : memref<8x3xf32, #tpu.memory_space<vmem>>, vector<8x3xf32>,
      %c0_35 = arith.constant 0 : index
      %c0_36 = arith.constant 0 : index
      %43 = vector.load %arg15[%c0_35, %c0_36] : memref<8x3xf32, #tpu.memory_space<vmem>>, vector<8x3xf32>
      tpu.vector_store %arg15[%c0_35, %c0_36], %41 {strides = array<i32>} : memref<8x3xf32, #tpu.memory_space<vmem>>, vector<8x3xf32>,
    } else {
    }
    return
  }
  func.func @transform_0(%arg0: i32, %arg1: i32) -> (i32, i32) {
    %c0_i32 = arith.constant 0 : i32
    return %arg0, %arg1 : i32, i32
  }
  func.func @transform_1(%arg0: i32, %arg1: i32) -> (i32, i32) {
    %c0_i32 = arith.constant 0 : i32
    %c0_i32_0 = arith.constant 0 : i32
    return %arg1, %c0_i32 : i32, i32
  }
  func.func @transform_2(%arg0: i32, %arg1: i32) -> (i32, i32) {
    %c0_i32 = arith.constant 0 : i32
    %c0_i32_0 = arith.constant 0 : i32
    return %arg0, %c0_i32 : i32, i32
  }
  func.func @transform_3(%arg0: i32, %arg1: i32) -> (i32, i32) {
    %c0_i32 = arith.constant 0 : i32
    %c0_i32_0 = arith.constant 0 : i32
    return %c0_i32, %arg0 : i32, i32
  }
  func.func @transform_4(%arg0: i32, %arg1: i32) -> (i32, i32) {
    %c0_i32 = arith.constant 0 : i32
    %c0_i32_0 = arith.constant 0 : i32
    %c0_i32_1 = arith.constant 0 : i32
    return %c0_i32, %c0_i32_0 : i32, i32
  }
  func.func @transform_5(%arg0: i32, %arg1: i32) -> (i32, i32) {
    %c0_i32 = arith.constant 0 : i32
    %c0_i32_0 = arith.constant 0 : i32
    %c0_i32_1 = arith.constant 0 : i32
    return %c0_i32, %c0_i32_0 : i32, i32
  }
  func.func @transform_6(%arg0: i32, %arg1: i32) -> (i32, i32) {
    %c0_i32 = arith.constant 0 : i32
    %c0_i32_0 = arith.constant 0 : i32
    %c0_i32_1 = arith.constant 0 : i32
    return %c0_i32, %c0_i32_0 : i32, i32
  }
  func.func @transform_7(%arg0: i32, %arg1: i32) -> (i32, i32) {
    %c0_i32 = arith.constant 0 : i32
    %c0_i32_0 = arith.constant 0 : i32
    %c0_i32_1 = arith.constant 0 : i32
    return %c0_i32, %c0_i32_0 : i32, i32
  }
  func.func @transform_8(%arg0: i32, %arg1: i32) -> (i32, i32) {
    %c0_i32 = arith.constant 0 : i32
    %c0_i32_0 = arith.constant 0 : i32
    %c0_i32_1 = arith.constant 0 : i32
    return %c0_i32, %c0_i32_0 : i32, i32
  }
  func.func @transform_9(%arg0: i32, %arg1: i32) -> (i32, i32) {
    %c0_i32 = arith.constant 0 : i32
    %c0_i32_0 = arith.constant 0 : i32
    %c0_i32_1 = arith.constant 0 : i32
    return %c0_i32, %c0_i32_0 : i32, i32
  }
  func.func @transform_10(%arg0: i32, %arg1: i32) -> (i32, i32) {
    %c0_i32 = arith.constant 0 : i32
    %c0_i32_0 = arith.constant 0 : i32
    %c0_i32_1 = arith.constant 0 : i32
    return %c0_i32, %c0_i32_0 : i32, i32
  }
  func.func @transform_11(%arg0: i32, %arg1: i32) -> (i32, i32) {
    %c0_i32 = arith.constant 0 : i32
    %c0_i32_0 = arith.constant 0 : i32
    %c0_i32_1 = arith.constant 0 : i32
    return %c0_i32, %c0_i32_0 : i32, i32
  }
  func.func @transform_12(%arg0: i32, %arg1: i32) -> (i32, i32) {
    %c0_i32 = arith.constant 0 : i32
    %c0_i32_0 = arith.constant 0 : i32
    %c0_i32_1 = arith.constant 0 : i32
    return %c0_i32, %c0_i32_0 : i32, i32
  }
  func.func @transform_13(%arg0: i32, %arg1: i32) -> (i32, i32) {
    %c0_i32 = arith.constant 0 : i32
    %c0_i32_0 = arith.constant 0 : i32
    %c0_i32_1 = arith.constant 0 : i32
    return %c0_i32, %c0_i32_0 : i32, i32
  }
}

</mosaic_0001>

<llo_original>
// kernel: gnn_forward_prepared.5
$region0: #{gnn_forward_prepared.5}
  #allocation0 [shape = 'u32[]', space=smem, size = 0x4, offset = 0x4, fixed_abs, tag = 'smem constant byte address 0x4 - core index']
  #allocation1 [shape = 'u32[144,128]{1,0:T(1,128)}', space=vmem, size = 0x12000, scoped, tag = 'internal scratch']
  #allocation2 [shape = 'f32[128,32]{1,0:T(8,128)}', space=vmem, size = 0x10000, scoped, tag = 'scratch operand']
  #allocation3 [shape = 'f32[8,32]{1,0:T(8,128)}', space=vmem, size = 0x1000, scoped, tag = 'scratch operand']
  #allocation4 [shape = 'f32[8,1]{1,0:T(8,128)}', space=vmem, size = 0x1000, scoped, tag = 'scratch operand']
  %s0 = inlined_call_operand.vmem [shape: s8[128,128], index: 0, kind: input, shape index: {}]
  %s1 = inlined_call_operand.vmem [shape: bf16[128,32], index: 1, kind: input, shape index: {}, may-alias: {1,2}]
  %s2 = inlined_call_operand.vmem [shape: bf16[128,32], index: 2, kind: input, shape index: {}, may-alias: {1,2}]
  %s3 = inlined_call_operand.vmem [shape: s32[1,128], index: 3, kind: input, shape index: {}]
  %s4 = inlined_call_operand.vmem [shape: f32[32,32], index: 4, kind: input, shape index: {}]
  %s5 = inlined_call_operand.vmem [shape: f32[32,32], index: 5, kind: input, shape index: {}]
  %s6 = inlined_call_operand.vmem [shape: f32[1,32], index: 6, kind: input, shape index: {}]
  %s7 = inlined_call_operand.vmem [shape: f32[32,3], index: 7, kind: input, shape index: {}]
  %s8 = inlined_call_operand.vmem [shape: f32[1,3], index: 8, kind: input, shape index: {}]
  %s9 = inlined_call_operand.vmem [shape: f32[32,3], index: 9, kind: input, shape index: {}]
  %s10 = inlined_call_operand.vmem [shape: f32[3,3], index: 10, kind: input, shape index: {}]
  %s11 = inlined_call_operand.vmem [shape: f32[1,3], index: 11, kind: input, shape index: {}]
  %s12 = inlined_call_operand.vmem [shape: f32[8,3], index: 12, kind: output, shape index: {0}]
  %s13 = inlined_call_operand.vmem [shape: f32[8,3], index: 13, kind: output, shape index: {1}]
  %14 = xla_tuple %s12, %s13
  %s15 = sld [smem:[#allocation0]]
  $region82: #{gnn_forward_prepared.5} parent=0
    _
  %s17 = ssub.s32 1, %s15
  %s18 = scalar_select 0, %s17, %s15
  // Predicated region
  $region2: #{gnn_forward_prepared.5} parent=0 // pred_check
    _
  $region3: #{gnn_forward_prepared.5} parent=0 // pred_check_branch
    %20 = sbr.rel (0) target = $region5
  $region4: #{gnn_forward_prepared.5} parent=0 // pred_region
    _
  $region5: #{gnn_forward_prepared.5} parent=0 // pred_fallthru
    _
  // Predicated region
  $region6: #{gnn_forward_prepared.5} parent=0 // pred_check
    _
  $region7: #{gnn_forward_prepared.5} parent=0 // pred_check_branch
    %22 = sbr.rel (0) target = $region9
  $region8: #{gnn_forward_prepared.5} parent=0 // pred_region
    _
  $region9: #{gnn_forward_prepared.5} parent=0 // pred_fallthru
    _
  // Predicated region
  $region10: #{gnn_forward_prepared.5} parent=0 // pred_check
    _
  $region11: #{gnn_forward_prepared.5} parent=0 // pred_check_branch
    %24 = sbr.rel (0) target = $region13
  $region12: #{gnn_forward_prepared.5} parent=0 // pred_region
    _
  $region13: #{gnn_forward_prepared.5} parent=0 // pred_fallthru
    _
  // Predicated region
  $region14: #{gnn_forward_prepared.5} parent=0 // pred_check
    _
  $region15: #{gnn_forward_prepared.5} parent=0 // pred_check_branch
    %26 = sbr.rel (0) target = $region17
  $region16: #{gnn_forward_prepared.5} parent=0 // pred_region
    _
  $region17: #{gnn_forward_prepared.5} parent=0 // pred_fallthru
    _
  // Predicated region
  $region18: #{gnn_forward_prepared.5} parent=0 // pred_check
    _
  $region19: #{gnn_forward_prepared.5} parent=0 // pred_check_branch
    %28 = sbr.rel (0) target = $region21
  $region20: #{gnn_forward_prepared.5} parent=0 // pred_region
    _
  $region21: #{gnn_forward_prepared.5} parent=0 // pred_fallthru
    _
  // Predicated region
  $region22: #{gnn_forward_prepared.5} parent=0 // pred_check
    _
  $region23: #{gnn_forward_prepared.5} parent=0 // pred_check_branch
    %30 = sbr.rel (0) target = $region25
  $region24: #{gnn_forward_prepared.5} parent=0 // pred_region
    _
  $region25: #{gnn_forward_prepared.5} parent=0 // pred_fallthru
    _
  // Predicated region
  $region26: #{gnn_forward_prepared.5} parent=0 // pred_check
    _
  $region27: #{gnn_forward_prepared.5} parent=0 // pred_check_branch
    %32 = sbr.rel (0) target = $region29
  $region28: #{gnn_forward_prepared.5} parent=0 // pred_region
    _
  $region29: #{gnn_forward_prepared.5} parent=0 // pred_fallthru
    _
  // Predicated region
  $region30: #{gnn_forward_prepared.5} parent=0 // pred_check
    _
  $region31: #{gnn_forward_prepared.5} parent=0 // pred_check_branch
    %34 = sbr.rel (0) target = $region33
  $region32: #{gnn_forward_prepared.5} parent=0 // pred_region
    _
  $region33: #{gnn_forward_prepared.5} parent=0 // pred_fallthru
    _
  // Predicated region
  $region34: #{gnn_forward_prepared.5} parent=0 // pred_check
    _
  $region35: #{gnn_forward_prepared.5} parent=0 // pred_check_branch
    %36 = sbr.rel (0) target = $region37
  $region36: #{gnn_forward_prepared.5} parent=0 // pred_region
    _
  $region37: #{gnn_forward_prepared.5} parent=0 // pred_fallthru
    _
  // Predicated region
  $region38: #{gnn_forward_prepared.5} parent=0 // pred_check
    _
  $region39: #{gnn_forward_prepared.5} parent=0 // pred_check_branch
    %38 = sbr.rel (0) target = $region41
  $region40: #{gnn_forward_prepared.5} parent=0 // pred_region
    _
  $region41: #{gnn_forward_prepared.5} parent=0 // pred_fallthru
    _
  // Predicated region
  $region42: #{gnn_forward_prepared.5} parent=0 // pred_check
    _
  $region43: #{gnn_forward_prepared.5} parent=0 // pred_check_branch
    %40 = sbr.rel (0) target = $region45
  $region44: #{gnn_forward_prepared.5} parent=0 // pred_region
    _
  $region45: #{gnn_forward_prepared.5} parent=0 // pred_fallthru
    _
  // Predicated region
  $region46: #{gnn_forward_prepared.5} parent=0 // pred_check
    _
  $region47: #{gnn_forward_prepared.5} parent=0 // pred_check_branch
    %42 = sbr.rel (0) target = $region49
  $region48: #{gnn_forward_prepared.5} parent=0 // pred_region
    _
  $region49: #{gnn_forward_prepared.5} parent=0 // pred_fallthru
    _
  %p44 = scmp.eq.s32.totalorder 0, 0
  %p45 = scmp.eq.s32.totalorder 0, 0
  %p46 = pnand %p45, %p44
  %p47 = pneg %p46
  // Predicated region
  $region50: #{gnn_forward_prepared.5} parent=0 // pred_check
    _
  $region51: #{gnn_forward_prepared.5} parent=0 // pred_check_branch
    %49 = sbr.rel (%p46) target = $region53
  $region52: #{gnn_forward_prepared.5} parent=0 // pred_region
    %vm50 = vcmask 261120
    %51 = vst.msk [vmem:[#allocation3] sm:$0xff] %vm50, 0.0
    %vm52 = vcmask 7168
    %53 = vst.msk [vmem:[#allocation4] sm:$0xff] %vm52, 0.0
  $region53: #{gnn_forward_prepared.5} parent=0 // pred_fallthru
    _
  // Predicated region
  $region54: #{gnn_forward_prepared.5} parent=0 // pred_check
    %p54 = pneg %p44
  $region55: #{gnn_forward_prepared.5} parent=0 // pred_check_branch
    %56 = sbr.rel (%p54) target = $region57
  $region56: #{gnn_forward_prepared.5} parent=0 // pred_region
    %vm57 = vcmask 261120
    %58 = vst.msk [vmem:[#allocation2] sm:$0xff] %vm57, 0.0
    %59 = vst.msk [vmem:[#allocation2 + $0x8] sm:$0xff] %vm57, 0.0
    %60 = vst.msk [vmem:[#allocation2 + $0x10] sm:$0xff] %vm57, 0.0
    %61 = vst.msk [vmem:[#allocation2 + $0x18] sm:$0xff] %vm57, 0.0
    %62 = vst.msk [vmem:[#allocation2 + $0x20] sm:$0xff] %vm57, 0.0
    %63 = vst.msk [vmem:[#allocation2 + $0x28] sm:$0xff] %vm57, 0.0
    %64 = vst.msk [vmem:[#allocation2 + $0x30] sm:$0xff] %vm57, 0.0
    %65 = vst.msk [vmem:[#allocation2 + $0x38] sm:$0xff] %vm57, 0.0
    %66 = vst.msk [vmem:[#allocation2 + $0x40] sm:$0xff] %vm57, 0.0
    %67 = vst.msk [vmem:[#allocation2 + $0x48] sm:$0xff] %vm57, 0.0
    %68 = vst.msk [vmem:[#allocation2 + $0x50] sm:$0xff] %vm57, 0.0
    %69 = vst.msk [vmem:[#allocation2 + $0x58] sm:$0xff] %vm57, 0.0
    %70 = vst.msk [vmem:[#allocation2 + $0x60] sm:$0xff] %vm57, 0.0
    %71 = vst.msk [vmem:[#allocation2 + $0x68] sm:$0xff] %vm57, 0.0
    %72 = vst.msk [vmem:[#allocation2 + $0x70] sm:$0xff] %vm57, 0.0
    %73 = vst.msk [vmem:[#allocation2 + $0x78] sm:$0xff] %vm57, 0.0
  $region57: #{gnn_forward_prepared.5} parent=0 // pred_fallthru
    _
  %v74 = vld [vmem:[%s0] sm:$0xff]
  %v75 = vld [vmem:[%s0 + $0x8] sm:$0xff]
  %v76 = vld [vmem:[%s0 + $0x10] sm:$0xff]
  %v77 = vld [vmem:[%s0 + $0x18] sm:$0xff]
  %v78 = vunpack.c.l.s8.bf16 %v74
  %v79 = vunpack.c.h.s8.bf16 %v74
  %v80 = vunpack.c.l.s8.bf16 %v75
  %v81 = vunpack.c.h.s8.bf16 %v75
  %v82 = vunpack.c.l.s8.bf16 %v76
  %v83 = vunpack.c.h.s8.bf16 %v76
  %v84 = vunpack.c.l.s8.bf16 %v77
  %v85 = vunpack.c.h.s8.bf16 %v77
  %v86 = vld [vmem:[#allocation2] sm:$0xff]
  %v87 = vld [vmem:[#allocation2 + $0x8] sm:$0xff]
  %v88 = vld [vmem:[#allocation2 + $0x10] sm:$0xff]
  %v89 = vld [vmem:[#allocation2 + $0x18] sm:$0xff]
  %v90 = vld [vmem:[#allocation2 + $0x20] sm:$0xff]
  %v91 = vld [vmem:[#allocation2 + $0x28] sm:$0xff]
  %v92 = vld [vmem:[#allocation2 + $0x30] sm:$0xff]
  %v93 = vld [vmem:[#allocation2 + $0x38] sm:$0xff]
  %v94 = vld [vmem:[#allocation2 + $0x40] sm:$0xff]
  %v95 = vld [vmem:[#allocation2 + $0x48] sm:$0xff]
  %v96 = vld [vmem:[#allocation2 + $0x50] sm:$0xff]
  %v97 = vld [vmem:[#allocation2 + $0x58] sm:$0xff]
  %v98 = vld [vmem:[#allocation2 + $0x60] sm:$0xff]
  %v99 = vld [vmem:[#allocation2 + $0x68] sm:$0xff]
  %v100 = vld [vmem:[#allocation2 + $0x70] sm:$0xff]
  %v101 = vld [vmem:[#allocation2 + $0x78] sm:$0xff]
  %v102 = vld [vmem:[%s1] sm:$0xf]
  %v103 = vld [vmem:[%s1 + $0x4] sm:$0xf]
  %v104 = vld [vmem:[%s1 + $0x8] sm:$0xf]
  %v105 = vld [vmem:[%s1 + $0xc] sm:$0xf]
  %v106 = vld [vmem:[%s1 + $0x10] sm:$0xf]
  %v107 = vld [vmem:[%s1 + $0x14] sm:$0xf]
  %v108 = vld [vmem:[%s1 + $0x18] sm:$0xf]
  %v109 = vld [vmem:[%s1 + $0x1c] sm:$0xf]
  %v110 = vld [vmem:[%s1 + $0x20] sm:$0xf]
  %v111 = vld [vmem:[%s1 + $0x24] sm:$0xf]
  %v112 = vld [vmem:[%s1 + $0x28] sm:$0xf]
  %v113 = vld [vmem:[%s1 + $0x2c] sm:$0xf]
  %v114 = vld [vmem:[%s1 + $0x30] sm:$0xf]
  %v115 = vld [vmem:[%s1 + $0x34] sm:$0xf]
  %v116 = vld [vmem:[%s1 + $0x38] sm:$0xf]
  %v117 = vld [vmem:[%s1 + $0x3c] sm:$0xf]
  %v134 = vunpack.c.l.b16 %v102
  %v135 = vunpack.c.l.b16 %v103
  %v136 = vunpack.c.l.b16 %v104
  %v137 = vunpack.c.l.b16 %v105
  %v138 = vunpack.c.l.b16 %v106
  %v139 = vunpack.c.l.b16 %v107
  %v140 = vunpack.c.l.b16 %v108
  %v141 = vunpack.c.l.b16 %v109
  %v142 = vunpack.c.l.b16 %v110
  %v143 = vunpack.c.l.b16 %v111
  %v144 = vunpack.c.l.b16 %v112
  %v145 = vunpack.c.l.b16 %v113
  %v146 = vunpack.c.l.b16 %v114
  %v147 = vunpack.c.l.b16 %v115
  %v148 = vunpack.c.l.b16 %v116
  %v149 = vunpack.c.l.b16 %v117
  %v150 = vpack.c.b16 %v135, %v134
  %v151 = vpack.c.b16 %v137, %v136
  %v152 = vpack.c.b16 %v139, %v138
  %v153 = vpack.c.b16 %v141, %v140
  %v154 = vpack.c.b16 %v143, %v142
  %v155 = vpack.c.b16 %v145, %v144
  %v156 = vpack.c.b16 %v147, %v146
  %v157 = vpack.c.b16 %v149, %v148
  %166 = vmatprep.subr.bf16.mxu0 0
  %167 = vmatpush1.bf16.msra.mxu0 %v157
  %168 = vmatprep.subr.bf16.mxu0 0
  %169 = vmatpush1.bf16.msra.mxu0 %v156
  %170 = vmatprep.subr.bf16.mxu0 0
  %171 = vmatpush1.bf16.msra.mxu0 %v155
  %172 = vmatprep.subr.bf16.mxu0 0
  %173 = vmatpush1.bf16.msra.mxu0 %v154
  %174 = vmatprep.subr.bf16.mxu0 0
  %175 = vmatpush1.bf16.msra.mxu0 %v153
  %176 = vmatprep.subr.bf16.mxu0 0
  %177 = vmatpush1.bf16.msra.mxu0 %v152
  %178 = vmatprep.subr.bf16.mxu0 0
  %179 = vmatpush1.bf16.msra.mxu0 %v151
  %180 = vmatprep.subr.bf16.mxu0 0
  %181 = vmatpush1.bf16.msra.mxu0 %v150
  %182 = vmatprep.subr.bf16.mxu0 0
  %183 = vmatpush2.bf16.msra.mxu0 0
  %184 = vmatprep.subr.bf16.mxu0 0
  %185 = vmatpush2.bf16.msra.mxu0 0
  %186 = vmatprep.subr.bf16.mxu0 0
  %187 = vmatpush2.bf16.msra.mxu0 0
  %188 = vmatprep.subr.bf16.mxu0 0
  %189 = vmatpush2.bf16.msra.mxu0 0
  %190 = vmatprep.subr.bf16.mxu0 0
  %191 = vmatpush2.bf16.msra.mxu0 0
  %192 = vmatprep.subr.bf16.mxu0 0
  %193 = vmatpush2.bf16.msra.mxu0 0
  %194 = vmatprep.subr.bf16.mxu0 0
  %195 = vmatpush2.bf16.msra.mxu0 0
  %196 = vmatprep.subr.bf16.mxu0 0
  %197 = vmatpush2.bf16.msra.mxu0 0
  %198 = vmatprep.mubr.bf16.mxu0 0
  %199 = vmatmul.mubr.bf16.gmra.mxu0 %v78
  %v200 = vpop.f32.mrf.mxu0
  %v201 = vadd.f32 0.0, %v200
  %v202 = vpop.f32.mrf.mxu0
  %v203 = vpop.f32.mrf.mxu0
  %v204 = vadd.f32 0.0, %v203
  %v205 = vpop.f32.mrf.mxu0
  %206 = vmatprep.mubr.bf16.mxu0 0
  %207 = vmatmul.mubr.bf16.gmra.mxu0 %v79
  %v208 = vpop.f32.mrf.mxu0
  %v209 = vadd.f32 0.0, %v208
  %v210 = vpop.f32.mrf.mxu0
  %v211 = vpop.f32.mrf.mxu0
  %v212 = vadd.f32 0.0, %v211
  %v213 = vpop.f32.mrf.mxu0
  %214 = vmatprep.mubr.bf16.mxu0 0
  %215 = vmatmul.mubr.bf16.gmra.mxu0 %v80
  %v216 = vpop.f32.mrf.mxu0
  %v217 = vadd.f32 0.0, %v216
  %v218 = vpop.f32.mrf.mxu0
  %v219 = vpop.f32.mrf.mxu0
  %v220 = vadd.f32 0.0, %v219
  %v221 = vpop.f32.mrf.mxu0
  %222 = vmatprep.mubr.bf16.mxu0 0
  %223 = vmatmul.mubr.bf16.gmra.mxu0 %v81
  %v224 = vpop.f32.mrf.mxu0
  %v225 = vadd.f32 0.0, %v224
  %v226 = vpop.f32.mrf.mxu0
  %v227 = vpop.f32.mrf.mxu0
  %v228 = vadd.f32 0.0, %v227
  %v229 = vpop.f32.mrf.mxu0
  %230 = vmatprep.mubr.bf16.mxu0 0
  %231 = vmatmul.mubr.bf16.gmra.mxu0 %v82
  %v232 = vpop.f32.mrf.mxu0
  %v233 = vadd.f32 0.0, %v232
  %v234 = vpop.f32.mrf.mxu0
  %v235 = vpop.f32.mrf.mxu0
  %v236 = vadd.f32 0.0, %v235
  %v237 = vpop.f32.mrf.mxu0
  %238 = vmatprep.mubr.bf16.mxu0 0
  %239 = vmatmul.mubr.bf16.gmra.mxu0 %v83
  %v240 = vpop.f32.mrf.mxu0
  %v241 = vadd.f32 0.0, %v240
  %v242 = vpop.f32.mrf.mxu0
  %v243 = vpop.f32.mrf.mxu0
  %v244 = vadd.f32 0.0, %v243
  %v245 = vpop.f32.mrf.mxu0
  %246 = vmatprep.mubr.bf16.mxu0 0
  %247 = vmatmul.mubr.bf16.gmra.mxu0 %v84
  %v248 = vpop.f32.mrf.mxu0
  %v249 = vadd.f32 0.0, %v248
  %v250 = vpop.f32.mrf.mxu0
  %v251 = vpop.f32.mrf.mxu0
  %v252 = vadd.f32 0.0, %v251
  %v253 = vpop.f32.mrf.mxu0
  %254 = vmatprep.mubr.bf16.mxu0 0
  %255 = vmatmul.mubr.bf16.gmra.mxu0 %v85
  %v256 = vpop.f32.mrf.mxu0
  %v257 = vadd.f32 0.0, %v256
  %v258 = vpop.f32.mrf.mxu0
  %v259 = vpop.f32.mrf.mxu0
  %v260 = vadd.f32 0.0, %v259
  %v261 = vpop.f32.mrf.mxu0
  %262 = vdwg.mxu0
  %v263 = vadd.f32 %v86, %v201
  %v264 = vadd.f32 %v87, %v204
  %v265 = vadd.f32 %v88, %v209
  %v266 = vadd.f32 %v89, %v212
  %v267 = vadd.f32 %v90, %v217
  %v268 = vadd.f32 %v91, %v220
  %v269 = vadd.f32 %v92, %v225
  %v270 = vadd.f32 %v93, %v228
  %v271 = vadd.f32 %v94, %v233
  %v272 = vadd.f32 %v95, %v236
  %v273 = vadd.f32 %v96, %v241
  %v274 = vadd.f32 %v97, %v244
  %v275 = vadd.f32 %v98, %v249
  %v276 = vadd.f32 %v99, %v252
  %v277 = vadd.f32 %v100, %v257
  %v278 = vadd.f32 %v101, %v260
  %vm279 = vcmask 261120
  %280 = vst.msk [vmem:[#allocation2] sm:$0xff] %vm279, %v263
  %281 = vst.msk [vmem:[#allocation2 + $0x8] sm:$0xff] %vm279, %v264
  %282 = vst.msk [vmem:[#allocation2 + $0x10] sm:$0xff] %vm279, %v265
  %283 = vst.msk [vmem:[#allocation2 + $0x18] sm:$0xff] %vm279, %v266
  %284 = vst.msk [vmem:[#allocation2 + $0x20] sm:$0xff] %vm279, %v267
  %285 = vst.msk [vmem:[#allocation2 + $0x28] sm:$0xff] %vm279, %v268
  %286 = vst.msk [vmem:[#allocation2 + $0x30] sm:$0xff] %vm279, %v269
  %287 = vst.msk [vmem:[#allocation2 + $0x38] sm:$0xff] %vm279, %v270
  %288 = vst.msk [vmem:[#allocation2 + $0x40] sm:$0xff] %vm279, %v271
  %289 = vst.msk [vmem:[#allocation2 + $0x48] sm:$0xff] %vm279, %v272
  %290 = vst.msk [vmem:[#allocation2 + $0x50] sm:$0xff] %vm279, %v273
  %291 = vst.msk [vmem:[#allocation2 + $0x58] sm:$0xff] %vm279, %v274
  %292 = vst.msk [vmem:[#allocation2 + $0x60] sm:$0xff] %vm279, %v275
  %293 = vst.msk [vmem:[#allocation2 + $0x68] sm:$0xff] %vm279, %v276
  %294 = vst.msk [vmem:[#allocation2 + $0x70] sm:$0xff] %vm279, %v277
  %295 = vst.msk [vmem:[#allocation2 + $0x78] sm:$0xff] %vm279, %v278
  // Predicated region
  $region58: #{gnn_forward_prepared.5} parent=0 // pred_check
    %p296 = pneg %p44
  $region59: #{gnn_forward_prepared.5} parent=0 // pred_check_branch
    %298 = sbr.rel (%p296) target = $region61
  $region60: #{gnn_forward_prepared.5} parent=0 // pred_region
    %v299 = vld [vmem:[#allocation2] sm:$0xff]
    %v300 = vld [vmem:[#allocation2 + $0x8] sm:$0xff]
    %v301 = vld [vmem:[#allocation2 + $0x10] sm:$0xff]
    %v302 = vld [vmem:[#allocation2 + $0x18] sm:$0xff]
    %v303 = vld [vmem:[#allocation2 + $0x20] sm:$0xff]
    %v304 = vld [vmem:[#allocation2 + $0x28] sm:$0xff]
    %v305 = vld [vmem:[#allocation2 + $0x30] sm:$0xff]
    %v306 = vld [vmem:[#allocation2 + $0x38] sm:$0xff]
    %v307 = vld [vmem:[#allocation2 + $0x40] sm:$0xff]
    %v308 = vld [vmem:[#allocation2 + $0x48] sm:$0xff]
    %v309 = vld [vmem:[#allocation2 + $0x50] sm:$0xff]
    %v310 = vld [vmem:[#allocation2 + $0x58] sm:$0xff]
    %v311 = vld [vmem:[#allocation2 + $0x60] sm:$0xff]
    %v312 = vld [vmem:[#allocation2 + $0x68] sm:$0xff]
    %v313 = vld [vmem:[#allocation2 + $0x70] sm:$0xff]
    %v314 = vld [vmem:[#allocation2 + $0x78] sm:$0xff]
    %v315 = vld [vmem:[%s4] sm:$0xff]
    %v316 = vld [vmem:[%s4 + $0x8] sm:$0xff]
    %v317 = vld [vmem:[%s4 + $0x10] sm:$0xff]
    %v318 = vld [vmem:[%s4 + $0x18] sm:$0xff]
    %v319 = vld [vmem:[%s2] sm:$0xf]
    %v320 = vld [vmem:[%s2 + $0x4] sm:$0xf]
    %v321 = vld [vmem:[%s2 + $0x8] sm:$0xf]
    %v322 = vld [vmem:[%s2 + $0xc] sm:$0xf]
    %v323 = vld [vmem:[%s2 + $0x10] sm:$0xf]
    %v324 = vld [vmem:[%s2 + $0x14] sm:$0xf]
    %v325 = vld [vmem:[%s2 + $0x18] sm:$0xf]
    %v326 = vld [vmem:[%s2 + $0x1c] sm:$0xf]
    %v327 = vld [vmem:[%s2 + $0x20] sm:$0xf]
    %v328 = vld [vmem:[%s2 + $0x24] sm:$0xf]
    %v329 = vld [vmem:[%s2 + $0x28] sm:$0xf]
    %v330 = vld [vmem:[%s2 + $0x2c] sm:$0xf]
    %v331 = vld [vmem:[%s2 + $0x30] sm:$0xf]
    %v332 = vld [vmem:[%s2 + $0x34] sm:$0xf]
    %v333 = vld [vmem:[%s2 + $0x38] sm:$0xf]
    %v334 = vld [vmem:[%s2 + $0x3c] sm:$0xf]
    %v335 = vunpack.c.l.bf16 %v319
    %v336 = vunpack.c.l.bf16 %v320
    %v337 = vunpack.c.l.bf16 %v321
    %v338 = vunpack.c.l.bf16 %v322
    %v339 = vunpack.c.l.bf16 %v323
    %v340 = vunpack.c.l.bf16 %v324
    %v341 = vunpack.c.l.bf16 %v325
    %v342 = vunpack.c.l.bf16 %v326
    %v343 = vunpack.c.l.bf16 %v327
    %v344 = vunpack.c.l.bf16 %v328
    %v345 = vunpack.c.l.bf16 %v329
    %v346 = vunpack.c.l.bf16 %v330
    %v347 = vunpack.c.l.bf16 %v331
    %v348 = vunpack.c.l.bf16 %v332
    %v349 = vunpack.c.l.bf16 %v333
    %v350 = vunpack.c.l.bf16 %v334
    %v351 = vld [vmem:[%s5] sm:$0xff]
    %v352 = vld [vmem:[%s5 + $0x8] sm:$0xff]
    %v353 = vld [vmem:[%s5 + $0x10] sm:$0xff]
    %v354 = vld [vmem:[%s5 + $0x18] sm:$0xff]
    %v356 = vsel %vm279, %v335, 0
    %v359 = vsel %vm279, %v336, 0
    %v362 = vsel %vm279, %v337, 0
    %v365 = vsel %vm279, %v338, 0
    %v368 = vsel %vm279, %v339, 0
    %v371 = vsel %vm279, %v340, 0
    %v374 = vsel %vm279, %v341, 0
    %v377 = vsel %vm279, %v342, 0
    %v380 = vsel %vm279, %v343, 0
    %v383 = vsel %vm279, %v344, 0
    %v386 = vsel %vm279, %v345, 0
    %v389 = vsel %vm279, %v346, 0
    %v392 = vsel %vm279, %v347, 0
    %v395 = vsel %vm279, %v348, 0
    %v398 = vsel %vm279, %v349, 0
    %v401 = vsel %vm279, %v350, 0
    %403 = vmatprep.subr.mxu0 0.0
    %404 = vmatpush1.msra.mxu0 0.0
    %405 = vmatprep.subr.mxu0 0.0
    %406 = vmatpush1.msra.mxu0 0.0
    %407 = vmatprep.subr.mxu0 0.0
    %408 = vmatpush1.msra.mxu0 0.0
    %409 = vmatprep.subr.mxu0 0.0
    %410 = vmatpush1.msra.mxu0 0.0
    %411 = vmatprep.subr.mxu0 0.0
    %412 = vmatpush1.msra.mxu0 0.0
    %413 = vmatprep.subr.mxu0 0.0
    %414 = vmatpush1.msra.mxu0 0.0
    %415 = vmatprep.subr.mxu0 0.0
    %416 = vmatpush1.msra.mxu0 0.0
    %417 = vmatprep.subr.mxu0 0.0
    %418 = vmatpush1.msra.mxu0 0.0
    %419 = vmatprep.subr.mxu0 0.0
    %420 = vmatpush1.msra.mxu0 0.0
    %421 = vmatprep.subr.mxu0 0.0
    %422 = vmatpush1.msra.mxu0 0.0
    %423 = vmatprep.subr.mxu0 0.0
    %424 = vmatpush1.msra.mxu0 0.0
    %425 = vmatprep.subr.mxu0 0.0
    %426 = vmatpush1.msra.mxu0 0.0
    %427 = vmatprep.subr.mxu0 0.0
    %428 = vmatpush1.msra.mxu0 %v354
    %429 = vmatprep.subr.mxu0 0.0
    %430 = vmatpush1.msra.mxu0 %v353
    %431 = vmatprep.subr.mxu0 0.0
    %432 = vmatpush1.msra.mxu0 %v352
    %433 = vmatprep.subr.mxu0 0.0
    %434 = vmatpush1.msra.mxu0 %v351
    %435 = vmatprep.subr.mxu0 0.0
    %436 = vmatpush2.msra.mxu0 0.0
    %437 = vmatprep.subr.mxu0 0.0
    %438 = vmatpush2.msra.mxu0 0.0
    %439 = vmatprep.subr.mxu0 0.0
    %440 = vmatpush2.msra.mxu0 0.0
    %441 = vmatprep.subr.mxu0 0.0
    %442 = vmatpush2.msra.mxu0 0.0
    %443 = vmatprep.subr.mxu0 0.0
    %444 = vmatpush2.msra.mxu0 0.0
    %445 = vmatprep.subr.mxu0 0.0
    %446 = vmatpush2.msra.mxu0 0.0
    %447 = vmatprep.subr.mxu0 0.0
    %448 = vmatpush2.msra.mxu0 0.0
    %449 = vmatprep.subr.mxu0 0.0
    %450 = vmatpush2.msra.mxu0 0.0
    %451 = vmatprep.subr.mxu0 0.0
    %452 = vmatpush2.msra.mxu0 0.0
    %453 = vmatprep.subr.mxu0 0.0
    %454 = vmatpush2.msra.mxu0 0.0
    %455 = vmatprep.subr.mxu0 0.0
    %456 = vmatpush2.msra.mxu0 0.0
    %457 = vmatprep.subr.mxu0 0.0
    %458 = vmatpush2.msra.mxu0 0.0
    %459 = vmatprep.subr.mxu0 0.0
    %460 = vmatpush2.msra.mxu0 0.0
    %461 = vmatprep.subr.mxu0 0.0
    %462 = vmatpush2.msra.mxu0 0.0
    %463 = vmatprep.subr.mxu0 0.0
    %464 = vmatpush2.msra.mxu0 0.0
    %465 = vmatprep.subr.mxu0 0.0
    %466 = vmatpush2.msra.mxu0 0.0
    %467 = vmatprep.mubr.f32.mxu0 0.0
    %468 = vmatmul.mubr.f32.gmra.mxu0 %v356
    %v469 = vpop.f32.mrf.mxu0
    %v470 = vadd.f32 0.0, %v469
    %v471 = vpop.f32.mrf.mxu0
    %472 = vmatprep.mubr.f32.mxu0 0.0
    %473 = vmatmul.mubr.f32.gmra.mxu0 %v359
    %v474 = vpop.f32.mrf.mxu0
    %v475 = vadd.f32 0.0, %v474
    %v476 = vpop.f32.mrf.mxu0
    %477 = vmatprep.mubr.f32.mxu0 0.0
    %478 = vmatmul.mubr.f32.gmra.mxu0 %v362
    %v479 = vpop.f32.mrf.mxu0
    %v480 = vadd.f32 0.0, %v479
    %v481 = vpop.f32.mrf.mxu0
    %482 = vmatprep.mubr.f32.mxu0 0.0
    %483 = vmatmul.mubr.f32.gmra.mxu0 %v365
    %v484 = vpop.f32.mrf.mxu0
    %v485 = vadd.f32 0.0, %v484
    %v486 = vpop.f32.mrf.mxu0
    %487 = vmatprep.mubr.f32.mxu0 0.0
    %488 = vmatmul.mubr.f32.gmra.mxu0 %v368
    %v489 = vpop.f32.mrf.mxu0
    %v490 = vadd.f32 0.0, %v489
    %v491 = vpop.f32.mrf.mxu0
    %492 = vmatprep.mubr.f32.mxu0 0.0
    %493 = vmatmul.mubr.f32.gmra.mxu0 %v371
    %v494 = vpop.f32.mrf.mxu0
    %v495 = vadd.f32 0.0, %v494
    %v496 = vpop.f32.mrf.mxu0
    %497 = vmatprep.mubr.f32.mxu0 0.0
    %498 = vmatmul.mubr.f32.gmra.mxu0 %v374
    %v499 = vpop.f32.mrf.mxu0
    %v500 = vadd.f32 0.0, %v499
    %v501 = vpop.f32.mrf.mxu0
    %502 = vmatprep.mubr.f32.mxu0 0.0
    %503 = vmatmul.mubr.f32.gmra.mxu0 %v377
    %v504 = vpop.f32.mrf.mxu0
    %v505 = vadd.f32 0.0, %v504
    %v506 = vpop.f32.mrf.mxu0
    %507 = vmatprep.mubr.f32.mxu0 0.0
    %508 = vmatmul.mubr.f32.gmra.mxu0 %v380
    %v509 = vpop.f32.mrf.mxu0
    %v510 = vadd.f32 0.0, %v509
    %v511 = vpop.f32.mrf.mxu0
    %512 = vmatprep.mubr.f32.mxu0 0.0
    %513 = vmatmul.mubr.f32.gmra.mxu0 %v383
    %v514 = vpop.f32.mrf.mxu0
    %v515 = vadd.f32 0.0, %v514
    %v516 = vpop.f32.mrf.mxu0
    %517 = vmatprep.mubr.f32.mxu0 0.0
    %518 = vmatmul.mubr.f32.gmra.mxu0 %v386
    %v519 = vpop.f32.mrf.mxu0
    %v520 = vadd.f32 0.0, %v519
    %v521 = vpop.f32.mrf.mxu0
    %522 = vmatprep.mubr.f32.mxu0 0.0
    %523 = vmatmul.mubr.f32.gmra.mxu0 %v389
    %v524 = vpop.f32.mrf.mxu0
    %v525 = vadd.f32 0.0, %v524
    %v526 = vpop.f32.mrf.mxu0
    %527 = vmatprep.mubr.f32.mxu0 0.0
    %528 = vmatmul.mubr.f32.gmra.mxu0 %v392
    %v529 = vpop.f32.mrf.mxu0
    %v530 = vadd.f32 0.0, %v529
    %v531 = vpop.f32.mrf.mxu0
    %532 = vmatprep.mubr.f32.mxu0 0.0
    %533 = vmatmul.mubr.f32.gmra.mxu0 %v395
    %v534 = vpop.f32.mrf.mxu0
    %v535 = vadd.f32 0.0, %v534
    %v536 = vpop.f32.mrf.mxu0
    %537 = vmatprep.mubr.f32.mxu0 0.0
    %538 = vmatmul.mubr.f32.gmra.mxu0 %v398
    %v539 = vpop.f32.mrf.mxu0
    %v540 = vadd.f32 0.0, %v539
    %v541 = vpop.f32.mrf.mxu0
    %542 = vmatprep.mubr.f32.mxu0 0.0
    %543 = vmatmul.mubr.f32.gmra.mxu0 %v401
    %v544 = vpop.f32.mrf.mxu0
    %v545 = vadd.f32 0.0, %v544
    %v546 = vpop.f32.mrf.mxu0
    %547 = vdwg.mxu0
    %v549 = vsel %vm279, %v299, 0
    %v552 = vsel %vm279, %v300, 0
    %v555 = vsel %vm279, %v301, 0
    %v558 = vsel %vm279, %v302, 0
    %v561 = vsel %vm279, %v303, 0
    %v564 = vsel %vm279, %v304, 0
    %v567 = vsel %vm279, %v305, 0
    %v570 = vsel %vm279, %v306, 0
    %v573 = vsel %vm279, %v307, 0
    %v576 = vsel %vm279, %v308, 0
    %v579 = vsel %vm279, %v309, 0
    %v582 = vsel %vm279, %v310, 0
    %v585 = vsel %vm279, %v311, 0
    %v588 = vsel %vm279, %v312, 0
    %v591 = vsel %vm279, %v313, 0
    %v594 = vsel %vm279, %v314, 0
    %596 = vmatprep.subr.mxu0 0.0
    %597 = vmatpush1.msra.mxu0 0.0
    %598 = vmatprep.subr.mxu0 0.0
    %599 = vmatpush1.msra.mxu0 0.0
    %600 = vmatprep.subr.mxu0 0.0
    %601 = vmatpush1.msra.mxu0 0.0
    %602 = vmatprep.subr.mxu0 0.0
    %603 = vmatpush1.msra.mxu0 0.0
    %604 = vmatprep.subr.mxu0 0.0
    %605 = vmatpush1.msra.mxu0 0.0
    %606 = vmatprep.subr.mxu0 0.0
    %607 = vmatpush1.msra.mxu0 0.0
    %608 = vmatprep.subr.mxu0 0.0
    %609 = vmatpush1.msra.mxu0 0.0
    %610 = vmatprep.subr.mxu0 0.0
    %611 = vmatpush1.msra.mxu0 0.0
    %612 = vmatprep.subr.mxu0 0.0
    %613 = vmatpush1.msra.mxu0 0.0
    %614 = vmatprep.subr.mxu0 0.0
    %615 = vmatpush1.msra.mxu0 0.0
    %616 = vmatprep.subr.mxu0 0.0
    %617 = vmatpush1.msra.mxu0 0.0
    %618 = vmatprep.subr.mxu0 0.0
    %619 = vmatpush1.msra.mxu0 0.0
    %620 = vmatprep.subr.mxu0 0.0
    %621 = vmatpush1.msra.mxu0 %v318
    %622 = vmatprep.subr.mxu0 0.0
    %623 = vmatpush1.msra.mxu0 %v317
    %624 = vmatprep.subr.mxu0 0.0
    %625 = vmatpush1.msra.mxu0 %v316
    %626 = vmatprep.subr.mxu0 0.0
    %627 = vmatpush1.msra.mxu0 %v315
    %628 = vmatprep.subr.mxu0 0.0
    %629 = vmatpush2.msra.mxu0 0.0
    %630 = vmatprep.subr.mxu0 0.0
    %631 = vmatpush2.msra.mxu0 0.0
    %632 = vmatprep.subr.mxu0 0.0
    %633 = vmatpush2.msra.mxu0 0.0
    %634 = vmatprep.subr.mxu0 0.0
    %635 = vmatpush2.msra.mxu0 0.0
    %636 = vmatprep.subr.mxu0 0.0
    %637 = vmatpush2.msra.mxu0 0.0
    %638 = vmatprep.subr.mxu0 0.0
    %639 = vmatpush2.msra.mxu0 0.0
    %640 = vmatprep.subr.mxu0 0.0
    %641 = vmatpush2.msra.mxu0 0.0
    %642 = vmatprep.subr.mxu0 0.0
    %643 = vmatpush2.msra.mxu0 0.0
    %644 = vmatprep.subr.mxu0 0.0
    %645 = vmatpush2.msra.mxu0 0.0
    %646 = vmatprep.subr.mxu0 0.0
    %647 = vmatpush2.msra.mxu0 0.0
    %648 = vmatprep.subr.mxu0 0.0
    %649 = vmatpush2.msra.mxu0 0.0
    %650 = vmatprep.subr.mxu0 0.0
    %651 = vmatpush2.msra.mxu0 0.0
    %652 = vmatprep.subr.mxu0 0.0
    %653 = vmatpush2.msra.mxu0 0.0
    %654 = vmatprep.subr.mxu0 0.0
    %655 = vmatpush2.msra.mxu0 0.0
    %656 = vmatprep.subr.mxu0 0.0
    %657 = vmatpush2.msra.mxu0 0.0
    %658 = vmatprep.subr.mxu0 0.0
    %659 = vmatpush2.msra.mxu0 0.0
    %660 = vmatprep.mubr.f32.mxu0 0.0
    %661 = vmatmul.mubr.f32.gmra.mxu0 %v549
    %v662 = vpop.f32.mrf.mxu0
    %v663 = vadd.f32 %v470, %v662
    %v664 = vpop.f32.mrf.mxu0
    %665 = vmatprep.mubr.f32.mxu0 0.0
    %666 = vmatmul.mubr.f32.gmra.mxu0 %v552
    %v667 = vpop.f32.mrf.mxu0
    %v668 = vadd.f32 %v475, %v667
    %v669 = vpop.f32.mrf.mxu0
    %670 = vmatprep.mubr.f32.mxu0 0.0
    %671 = vmatmul.mubr.f32.gmra.mxu0 %v555
    %v672 = vpop.f32.mrf.mxu0
    %v673 = vadd.f32 %v480, %v672
    %v674 = vpop.f32.mrf.mxu0
    %675 = vmatprep.mubr.f32.mxu0 0.0
    %676 = vmatmul.mubr.f32.gmra.mxu0 %v558
    %v677 = vpop.f32.mrf.mxu0
    %v678 = vadd.f32 %v485, %v677
    %v679 = vpop.f32.mrf.mxu0
    %680 = vmatprep.mubr.f32.mxu0 0.0
    %681 = vmatmul.mubr.f32.gmra.mxu0 %v561
    %v682 = vpop.f32.mrf.mxu0
    %v683 = vadd.f32 %v490, %v682
    %v684 = vpop.f32.mrf.mxu0
    %685 = vmatprep.mubr.f32.mxu0 0.0
    %686 = vmatmul.mubr.f32.gmra.mxu0 %v564
    %v687 = vpop.f32.mrf.mxu0
    %v688 = vadd.f32 %v495, %v687
    %v689 = vpop.f32.mrf.mxu0
    %690 = vmatprep.mubr.f32.mxu0 0.0
    %691 = vmatmul.mubr.f32.gmra.mxu0 %v567
    %v692 = vpop.f32.mrf.mxu0
    %v693 = vadd.f32 %v500, %v692
    %v694 = vpop.f32.mrf.mxu0
    %695 = vmatprep.mubr.f32.mxu0 0.0
    %696 = vmatmul.mubr.f32.gmra.mxu0 %v570
    %v697 = vpop.f32.mrf.mxu0
    %v698 = vadd.f32 %v505, %v697
    %v699 = vpop.f32.mrf.mxu0
    %700 = vmatprep.mubr.f32.mxu0 0.0
    %701 = vmatmul.mubr.f32.gmra.mxu0 %v573
    %v702 = vpop.f32.mrf.mxu0
    %v703 = vadd.f32 %v510, %v702
    %v704 = vpop.f32.mrf.mxu0
    %705 = vmatprep.mubr.f32.mxu0 0.0
    %706 = vmatmul.mubr.f32.gmra.mxu0 %v576
    %v707 = vpop.f32.mrf.mxu0
    %v708 = vadd.f32 %v515, %v707
    %v709 = vpop.f32.mrf.mxu0
    %710 = vmatprep.mubr.f32.mxu0 0.0
    %711 = vmatmul.mubr.f32.gmra.mxu0 %v579
    %v712 = vpop.f32.mrf.mxu0
    %v713 = vadd.f32 %v520, %v712
    %v714 = vpop.f32.mrf.mxu0
    %715 = vmatprep.mubr.f32.mxu0 0.0
    %716 = vmatmul.mubr.f32.gmra.mxu0 %v582
    %v717 = vpop.f32.mrf.mxu0
    %v718 = vadd.f32 %v525, %v717
    %v719 = vpop.f32.mrf.mxu0
    %720 = vmatprep.mubr.f32.mxu0 0.0
    %721 = vmatmul.mubr.f32.gmra.mxu0 %v585
    %v722 = vpop.f32.mrf.mxu0
    %v723 = vadd.f32 %v530, %v722
    %v724 = vpop.f32.mrf.mxu0
    %725 = vmatprep.mubr.f32.mxu0 0.0
    %726 = vmatmul.mubr.f32.gmra.mxu0 %v588
    %v727 = vpop.f32.mrf.mxu0
    %v728 = vadd.f32 %v535, %v727
    %v729 = vpop.f32.mrf.mxu0
    %730 = vmatprep.mubr.f32.mxu0 0.0
    %731 = vmatmul.mubr.f32.gmra.mxu0 %v591
    %v732 = vpop.f32.mrf.mxu0
    %v733 = vadd.f32 %v540, %v732
    %v734 = vpop.f32.mrf.mxu0
    %735 = vmatprep.mubr.f32.mxu0 0.0
    %736 = vmatmul.mubr.f32.gmra.mxu0 %v594
    %v737 = vpop.f32.mrf.mxu0
    %v738 = vadd.f32 %v545, %v737
    %v739 = vpop.f32.mrf.mxu0
    %740 = vdwg.mxu0
    %v741 = vld [vmem:[%s6] sm:$0x1]
    %v743 = vlaneseq
    %v744 = vshrl.u32 %v743, 7
    %v745 = vsub.s32 0, %v744
    %v746 = vrot.slane %v741, %v745
    %v748 = vadd.f32 %v663, %v746
    %v749 = vadd.f32 %v668, %v746
    %v750 = vadd.f32 %v673, %v746
    %v751 = vadd.f32 %v678, %v746
    %v752 = vadd.f32 %v683, %v746
    %v753 = vadd.f32 %v688, %v746
    %v754 = vadd.f32 %v693, %v746
    %v755 = vadd.f32 %v698, %v746
    %v756 = vadd.f32 %v703, %v746
    %v757 = vadd.f32 %v708, %v746
    %v758 = vadd.f32 %v713, %v746
    %v759 = vadd.f32 %v718, %v746
    %v760 = vadd.f32 %v723, %v746
    %v761 = vadd.f32 %v728, %v746
    %v762 = vadd.f32 %v733, %v746
    %v763 = vadd.f32 %v738, %v746
    %v764 = vld [vmem:[%s3] sm:$0x1]
    %v765 = vlaneseq
    %v766 = vshrl.u32 %v765, 7
    %v767 = vlaneseq
    %v768 = vshrl.u32 %v767, 7
    %v769 = vsub.s32 0, %v768
    %v770 = vrot.slane %v764, %v769
    %vm771 = vcmp.eq.s32.totalorder %v766, %v770
    %v772 = vsel %vm771, 1, 0
    %v773 = vcvt.s32.f32 %v772
    %v774 = vld [vmem:[#allocation3] sm:$0xff]
    %775 = vmatprep.subr.mxu0 0.0
    %776 = vmatpush1.msra.mxu0 %v763
    %777 = vmatprep.subr.mxu0 0.0
    %778 = vmatpush1.msra.mxu0 %v762
    %779 = vmatprep.subr.mxu0 0.0
    %780 = vmatpush1.msra.mxu0 %v761
    %781 = vmatprep.subr.mxu0 0.0
    %782 = vmatpush1.msra.mxu0 %v760
    %783 = vmatprep.subr.mxu0 0.0
    %784 = vmatpush1.msra.mxu0 %v759
    %785 = vmatprep.subr.mxu0 0.0
    %786 = vmatpush1.msra.mxu0 %v758
    %787 = vmatprep.subr.mxu0 0.0
    %788 = vmatpush1.msra.mxu0 %v757
    %789 = vmatprep.subr.mxu0 0.0
    %790 = vmatpush1.msra.mxu0 %v756
    %791 = vmatprep.subr.mxu0 0.0
    %792 = vmatpush1.msra.mxu0 %v755
    %793 = vmatprep.subr.mxu0 0.0
    %794 = vmatpush1.msra.mxu0 %v754
    %795 = vmatprep.subr.mxu0 0.0
    %796 = vmatpush1.msra.mxu0 %v753
    %797 = vmatprep.subr.mxu0 0.0
    %798 = vmatpush1.msra.mxu0 %v752
    %799 = vmatprep.subr.mxu0 0.0
    %800 = vmatpush1.msra.mxu0 %v751
    %801 = vmatprep.subr.mxu0 0.0
    %802 = vmatpush1.msra.mxu0 %v750
    %803 = vmatprep.subr.mxu0 0.0
    %804 = vmatpush1.msra.mxu0 %v749
    %805 = vmatprep.subr.mxu0 0.0
    %806 = vmatpush1.msra.mxu0 %v748
    %807 = vmatprep.subr.mxu0 0.0
    %808 = vmatpush2.msra.mxu0 0.0
    %809 = vmatprep.subr.mxu0 0.0
    %810 = vmatpush2.msra.mxu0 0.0
    %811 = vmatprep.subr.mxu0 0.0
    %812 = vmatpush2.msra.mxu0 0.0
    %813 = vmatprep.subr.mxu0 0.0
    %814 = vmatpush2.msra.mxu0 0.0
    %815 = vmatprep.subr.mxu0 0.0
    %816 = vmatpush2.msra.mxu0 0.0
    %817 = vmatprep.subr.mxu0 0.0
    %818 = vmatpush2.msra.mxu0 0.0
    %819 = vmatprep.subr.mxu0 0.0
    %820 = vmatpush2.msra.mxu0 0.0
    %821 = vmatprep.subr.mxu0 0.0
    %822 = vmatpush2.msra.mxu0 0.0
    %823 = vmatprep.subr.mxu0 0.0
    %824 = vmatpush2.msra.mxu0 0.0
    %825 = vmatprep.subr.mxu0 0.0
    %826 = vmatpush2.msra.mxu0 0.0
    %827 = vmatprep.subr.mxu0 0.0
    %828 = vmatpush2.msra.mxu0 0.0
    %829 = vmatprep.subr.mxu0 0.0
    %830 = vmatpush2.msra.mxu0 0.0
    %831 = vmatprep.subr.mxu0 0.0
    %832 = vmatpush2.msra.mxu0 0.0
    %833 = vmatprep.subr.mxu0 0.0
    %834 = vmatpush2.msra.mxu0 0.0
    %835 = vmatprep.subr.mxu0 0.0
    %836 = vmatpush2.msra.mxu0 0.0
    %837 = vmatprep.subr.mxu0 0.0
    %838 = vmatpush2.msra.mxu0 0.0
    %839 = vmatprep.mubr.f32.mxu0 0.0
    %840 = vmatmul.mubr.f32.gmra.mxu0 %v773
    %v841 = vpop.f32.mrf.mxu0
    %v842 = vadd.f32 0.0, %v841
    %v843 = vpop.f32.mrf.mxu0
    %844 = vdwg.mxu0
    %v845 = vadd.f32 %v774, %v842
    %846 = vst.msk [vmem:[#allocation3] sm:$0xff] %vm279, %v845
    %v847 = vld [vmem:[#allocation4] sm:$0xff]
    %848 = vadd.xlane.f32.xlu0 %v773
    %v849 = vpop.xlane.xlu0 %848
    %v850 = vadd.f32 %v847, %v849
    %vm851 = vcmask 7168
    %852 = vst.msk [vmem:[#allocation4] sm:$0xff] %vm851, %v850
  $region61: #{gnn_forward_prepared.5} parent=0 // pred_fallthru
    _
  // Predicated region
  $region62: #{gnn_forward_prepared.5} parent=0 // pred_check
    _
  $region63: #{gnn_forward_prepared.5} parent=0 // pred_check_branch
    %854 = sbr.rel (%p46) target = $region65
  $region64: #{gnn_forward_prepared.5} parent=0 // pred_region
    %v855 = vld [vmem:[#allocation3] sm:$0xff]
    %v856 = vld [vmem:[#allocation4] sm:$0xff]
    %v857 = vmax.f32 %v856, 1.0
    %859 = vset.pattern.permute.xlu0 0
    %860 = vperm.xlu0 %859, %v857
    %v861 = vpop.permute.xlu0 %860
    %v863 = vrcp.pop %v861
    %v864 = vmul.f32 %v855, %v863
    %v865 = vld [vmem:[%s7] sm:$0xff]
    %v866 = vld [vmem:[%s7 + $0x8] sm:$0xff]
    %v867 = vld [vmem:[%s7 + $0x10] sm:$0xff]
    %v868 = vld [vmem:[%s7 + $0x18] sm:$0xff]
    %v869 = vld [vmem:[%s8] sm:$0x1]
    %v871 = vlaneseq
    %v872 = vshrl.u32 %v871, 7
    %v873 = vsub.s32 0, %v872
    %v874 = vrot.slane %v869, %v873
    %v877 = vsel %vm279, %v864, 0
    %879 = vmatprep.subr.mxu0 0.0
    %880 = vmatpush1.msra.mxu0 0.0
    %881 = vmatprep.subr.mxu0 0.0
    %882 = vmatpush1.msra.mxu0 0.0
    %883 = vmatprep.subr.mxu0 0.0
    %884 = vmatpush1.msra.mxu0 0.0
    %885 = vmatprep.subr.mxu0 0.0
    %886 = vmatpush1.msra.mxu0 0.0
    %887 = vmatprep.subr.mxu0 0.0
    %888 = vmatpush1.msra.mxu0 0.0
    %889 = vmatprep.subr.mxu0 0.0
    %890 = vmatpush1.msra.mxu0 0.0
    %891 = vmatprep.subr.mxu0 0.0
    %892 = vmatpush1.msra.mxu0 0.0
    %893 = vmatprep.subr.mxu0 0.0
    %894 = vmatpush1.msra.mxu0 0.0
    %895 = vmatprep.subr.mxu0 0.0
    %896 = vmatpush1.msra.mxu0 0.0
    %897 = vmatprep.subr.mxu0 0.0
    %898 = vmatpush1.msra.mxu0 0.0
    %899 = vmatprep.subr.mxu0 0.0
    %900 = vmatpush1.msra.mxu0 0.0
    %901 = vmatprep.subr.mxu0 0.0
    %902 = vmatpush1.msra.mxu0 0.0
    %903 = vmatprep.subr.mxu0 0.0
    %904 = vmatpush1.msra.mxu0 %v868
    %905 = vmatprep.subr.mxu0 0.0
    %906 = vmatpush1.msra.mxu0 %v867
    %907 = vmatprep.subr.mxu0 0.0
    %908 = vmatpush1.msra.mxu0 %v866
    %909 = vmatprep.subr.mxu0 0.0
    %910 = vmatpush1.msra.mxu0 %v865
    %911 = vmatprep.subr.mxu0 0.0
    %912 = vmatpush2.msra.mxu0 0.0
    %913 = vmatprep.subr.mxu0 0.0
    %914 = vmatpush2.msra.mxu0 0.0
    %915 = vmatprep.subr.mxu0 0.0
    %916 = vmatpush2.msra.mxu0 0.0
    %917 = vmatprep.subr.mxu0 0.0
    %918 = vmatpush2.msra.mxu0 0.0
    %919 = vmatprep.subr.mxu0 0.0
    %920 = vmatpush2.msra.mxu0 0.0
    %921 = vmatprep.subr.mxu0 0.0
    %922 = vmatpush2.msra.mxu0 0.0
    %923 = vmatprep.subr.mxu0 0.0
    %924 = vmatpush2.msra.mxu0 0.0
    %925 = vmatprep.subr.mxu0 0.0
    %926 = vmatpush2.msra.mxu0 0.0
    %927 = vmatprep.subr.mxu0 0.0
    %928 = vmatpush2.msra.mxu0 0.0
    %929 = vmatprep.subr.mxu0 0.0
    %930 = vmatpush2.msra.mxu0 0.0
    %931 = vmatprep.subr.mxu0 0.0
    %932 = vmatpush2.msra.mxu0 0.0
    %933 = vmatprep.subr.mxu0 0.0
    %934 = vmatpush2.msra.mxu0 0.0
    %935 = vmatprep.subr.mxu0 0.0
    %936 = vmatpush2.msra.mxu0 0.0
    %937 = vmatprep.subr.mxu0 0.0
    %938 = vmatpush2.msra.mxu0 0.0
    %939 = vmatprep.subr.mxu0 0.0
    %940 = vmatpush2.msra.mxu0 0.0
    %941 = vmatprep.subr.mxu0 0.0
    %942 = vmatpush2.msra.mxu0 0.0
    %943 = vmatprep.mubr.f32.mxu0 0.0
    %944 = vmatmul.mubr.f32.gmra.mxu0 %v877
    %v945 = vpop.f32.mrf.mxu0
    %v946 = vadd.f32 %v874, %v945
    %v947 = vpop.f32.mrf.mxu0
    %948 = vdwg.mxu0
    %v949 = vld [vmem:[%s9] sm:$0xff]
    %v950 = vld [vmem:[%s9 + $0x8] sm:$0xff]
    %v951 = vld [vmem:[%s9 + $0x10] sm:$0xff]
    %v952 = vld [vmem:[%s9 + $0x18] sm:$0xff]
    %v953 = vld [vmem:[%s10] sm:$0x7]
    %vm954 = vcmask 23552
    %v956 = vsel %vm954, %v946, 0
    %vm958 = vcmask 1042432
    %v960 = vsel %vm958, %v953, 0
    %962 = vmatprep.subr.mxu0 0.0
    %963 = vmatpush1.msra.mxu0 0.0
    %964 = vmatprep.subr.mxu0 0.0
    %965 = vmatpush1.msra.mxu0 0.0
    %966 = vmatprep.subr.mxu0 0.0
    %967 = vmatpush1.msra.mxu0 0.0
    %968 = vmatprep.subr.mxu0 0.0
    %969 = vmatpush1.msra.mxu0 0.0
    %970 = vmatprep.subr.mxu0 0.0
    %971 = vmatpush1.msra.mxu0 0.0
    %972 = vmatprep.subr.mxu0 0.0
    %973 = vmatpush1.msra.mxu0 0.0
    %974 = vmatprep.subr.mxu0 0.0
    %975 = vmatpush1.msra.mxu0 0.0
    %976 = vmatprep.subr.mxu0 0.0
    %977 = vmatpush1.msra.mxu0 0.0
    %978 = vmatprep.subr.mxu0 0.0
    %979 = vmatpush1.msra.mxu0 0.0
    %980 = vmatprep.subr.mxu0 0.0
    %981 = vmatpush1.msra.mxu0 0.0
    %982 = vmatprep.subr.mxu0 0.0
    %983 = vmatpush1.msra.mxu0 0.0
    %984 = vmatprep.subr.mxu0 0.0
    %985 = vmatpush1.msra.mxu0 0.0
    %986 = vmatprep.subr.mxu0 0.0
    %987 = vmatpush1.msra.mxu0 0.0
    %988 = vmatprep.subr.mxu0 0.0
    %989 = vmatpush1.msra.mxu0 0.0
    %990 = vmatprep.subr.mxu0 0.0
    %991 = vmatpush1.msra.mxu0 0.0
    %992 = vmatprep.subr.mxu0 0.0
    %993 = vmatpush1.msra.mxu0 %v960
    %994 = vmatprep.subr.mxu0 0.0
    %995 = vmatpush2.msra.mxu0 0.0
    %996 = vmatprep.subr.mxu0 0.0
    %997 = vmatpush2.msra.mxu0 0.0
    %998 = vmatprep.subr.mxu0 0.0
    %999 = vmatpush2.msra.mxu0 0.0
    %1000 = vmatprep.subr.mxu0 0.0
    %1001 = vmatpush2.msra.mxu0 0.0
    %1002 = vmatprep.subr.mxu0 0.0
    %1003 = vmatpush2.msra.mxu0 0.0
    %1004 = vmatprep.subr.mxu0 0.0
    %1005 = vmatpush2.msra.mxu0 0.0
    %1006 = vmatprep.subr.mxu0 0.0
    %1007 = vmatpush2.msra.mxu0 0.0
    %1008 = vmatprep.subr.mxu0 0.0
    %1009 = vmatpush2.msra.mxu0 0.0
    %1010 = vmatprep.subr.mxu0 0.0
    %1011 = vmatpush2.msra.mxu0 0.0
    %1012 = vmatprep.subr.mxu0 0.0
    %1013 = vmatpush2.msra.mxu0 0.0
    %1014 = vmatprep.subr.mxu0 0.0
    %1015 = vmatpush2.msra.mxu0 0.0
    %1016 = vmatprep.subr.mxu0 0.0
    %1017 = vmatpush2.msra.mxu0 0.0
    %1018 = vmatprep.subr.mxu0 0.0
    %1019 = vmatpush2.msra.mxu0 0.0
    %1020 = vmatprep.subr.mxu0 0.0
    %1021 = vmatpush2.msra.mxu0 0.0
    %1022 = vmatprep.subr.mxu0 0.0
    %1023 = vmatpush2.msra.mxu0 0.0
    %1024 = vmatprep.subr.mxu0 0.0
    %1025 = vmatpush2.msra.mxu0 0.0
    %1026 = vmatprep.mubr.f32.mxu0 0.0
    %1027 = vmatmul.mubr.f32.gmra.mxu0 %v956
    %v1028 = vpop.f32.mrf.mxu0
    %v1029 = vadd.f32 0.0, %v1028
    %v1030 = vpop.f32.mrf.mxu0
    %1031 = vdwg.mxu0
    %1032 = vmatprep.subr.mxu0 0.0
    %1033 = vmatpush1.msra.mxu0 0.0
    %1034 = vmatprep.subr.mxu0 0.0
    %1035 = vmatpush1.msra.mxu0 0.0
    %1036 = vmatprep.subr.mxu0 0.0
    %1037 = vmatpush1.msra.mxu0 0.0
    %1038 = vmatprep.subr.mxu0 0.0
    %1039 = vmatpush1.msra.mxu0 0.0
    %1040 = vmatprep.subr.mxu0 0.0
    %1041 = vmatpush1.msra.mxu0 0.0
    %1042 = vmatprep.subr.mxu0 0.0
    %1043 = vmatpush1.msra.mxu0 0.0
    %1044 = vmatprep.subr.mxu0 0.0
    %1045 = vmatpush1.msra.mxu0 0.0
    %1046 = vmatprep.subr.mxu0 0.0
    %1047 = vmatpush1.msra.mxu0 0.0
    %1048 = vmatprep.subr.mxu0 0.0
    %1049 = vmatpush1.msra.mxu0 0.0
    %1050 = vmatprep.subr.mxu0 0.0
    %1051 = vmatpush1.msra.mxu0 0.0
    %1052 = vmatprep.subr.mxu0 0.0
    %1053 = vmatpush1.msra.mxu0 0.0
    %1054 = vmatprep.subr.mxu0 0.0
    %1055 = vmatpush1.msra.mxu0 0.0
    %1056 = vmatprep.subr.mxu0 0.0
    %1057 = vmatpush1.msra.mxu0 %v952
    %1058 = vmatprep.subr.mxu0 0.0
    %1059 = vmatpush1.msra.mxu0 %v951
    %1060 = vmatprep.subr.mxu0 0.0
    %1061 = vmatpush1.msra.mxu0 %v950
    %1062 = vmatprep.subr.mxu0 0.0
    %1063 = vmatpush1.msra.mxu0 %v949
    %1064 = vmatprep.subr.mxu0 0.0
    %1065 = vmatpush2.msra.mxu0 0.0
    %1066 = vmatprep.subr.mxu0 0.0
    %1067 = vmatpush2.msra.mxu0 0.0
    %1068 = vmatprep.subr.mxu0 0.0
    %1069 = vmatpush2.msra.mxu0 0.0
    %1070 = vmatprep.subr.mxu0 0.0
    %1071 = vmatpush2.msra.mxu0 0.0
    %1072 = vmatprep.subr.mxu0 0.0
    %1073 = vmatpush2.msra.mxu0 0.0
    %1074 = vmatprep.subr.mxu0 0.0
    %1075 = vmatpush2.msra.mxu0 0.0
    %1076 = vmatprep.subr.mxu0 0.0
    %1077 = vmatpush2.msra.mxu0 0.0
    %1078 = vmatprep.subr.mxu0 0.0
    %1079 = vmatpush2.msra.mxu0 0.0
    %1080 = vmatprep.subr.mxu0 0.0
    %1081 = vmatpush2.msra.mxu0 0.0
    %1082 = vmatprep.subr.mxu0 0.0
    %1083 = vmatpush2.msra.mxu0 0.0
    %1084 = vmatprep.subr.mxu0 0.0
    %1085 = vmatpush2.msra.mxu0 0.0
    %1086 = vmatprep.subr.mxu0 0.0
    %1087 = vmatpush2.msra.mxu0 0.0
    %1088 = vmatprep.subr.mxu0 0.0
    %1089 = vmatpush2.msra.mxu0 0.0
    %1090 = vmatprep.subr.mxu0 0.0
    %1091 = vmatpush2.msra.mxu0 0.0
    %1092 = vmatprep.subr.mxu0 0.0
    %1093 = vmatpush2.msra.mxu0 0.0
    %1094 = vmatprep.subr.mxu0 0.0
    %1095 = vmatpush2.msra.mxu0 0.0
    %1096 = vmatprep.mubr.f32.mxu0 0.0
    %1097 = vmatmul.mubr.f32.gmra.mxu0 %v877
    %v1098 = vpop.f32.mrf.mxu0
    %v1099 = vadd.f32 %v1029, %v1098
    %v1100 = vpop.f32.mrf.mxu0
    %1101 = vdwg.mxu0
    %v1102 = vld [vmem:[%s11] sm:$0x1]
    %v1104 = vlaneseq
    %v1105 = vshrl.u32 %v1104, 7
    %v1106 = vsub.s32 0, %v1105
    %v1107 = vrot.slane %v1102, %v1106
    %v1109 = vadd.f32 %v1099, %v1107
    %1110 = vst.msk [vmem:[%s12] sm:$0xff] %vm954, %v946
    %1111 = vst.msk [vmem:[%s13] sm:$0xff] %vm954, %v1109
  $region65: #{gnn_forward_prepared.5} parent=0 // pred_fallthru
    _
  // Predicated region
  $region66: #{gnn_forward_prepared.5} parent=0 // pred_check
    _
  $region67: #{gnn_forward_prepared.5} parent=0 // pred_check_branch
    %1113 = sbr.rel (0) target = $region69
  $region68: #{gnn_forward_prepared.5} parent=0 // pred_region
    _
  $region69: #{gnn_forward_prepared.5} parent=0 // pred_fallthru
    _
  // Predicated region
  $region70: #{gnn_forward_prepared.5} parent=0 // pred_check
    _
  $region71: #{gnn_forward_prepared.5} parent=0 // pred_check_branch
    %1115 = sbr.rel (0) target = $region73
  $region72: #{gnn_forward_prepared.5} parent=0 // pred_region
    _
  $region73: #{gnn_forward_prepared.5} parent=0 // pred_fallthru
    _
  // Predicated region
  $region74: #{gnn_forward_prepared.5} parent=0 // pred_check
    _
  $region75: #{gnn_forward_prepared.5} parent=0 // pred_check_branch
    %1117 = sbr.rel (0) target = $region77
  $region76: #{gnn_forward_prepared.5} parent=0 // pred_region
    _
  $region77: #{gnn_forward_prepared.5} parent=0 // pred_fallthru
    _
  // Predicated region
  $region78: #{gnn_forward_prepared.5} parent=0 // pred_check
    _
  $region79: #{gnn_forward_prepared.5} parent=0 // pred_check_branch
    %1119 = sbr.rel (0) target = $region81
  $region80: #{gnn_forward_prepared.5} parent=0 // pred_region
    _
  $region81: #{gnn_forward_prepared.5} parent=0 // pred_fallthru
    _

// kernel: gnn_forward_prepared.4
$region0: #{gnn_forward_prepared.4}
  #allocation0 [shape = 'u32[]', space=smem, size = 0x4, offset = 0x4, fixed_abs, tag = 'smem constant byte address 0x4 - core index']
  #allocation1 [shape = 'u32[144,128]{1,0:T(1,128)}', space=vmem, size = 0x12000, scoped, tag = 'internal scratch']
  #allocation2 [shape = 'f32[128,32]{1,0:T(8,128)}', space=vmem, size = 0x10000, scoped, tag = 'scratch operand']
  %s0 = inlined_call_operand.vmem [shape: s8[128,128], index: 0, kind: input, shape index: {}]
  %s1 = inlined_call_operand.vmem [shape: bf16[128,32], index: 1, kind: input, shape index: {}, may-alias: {1,2}]
  %s2 = inlined_call_operand.vmem [shape: bf16[128,32], index: 2, kind: input, shape index: {}, may-alias: {1,2}]
  %s3 = inlined_call_operand.vmem [shape: f32[32,32], index: 3, kind: input, shape index: {}]
  %s4 = inlined_call_operand.vmem [shape: f32[32,32], index: 4, kind: input, shape index: {}]
  %s5 = inlined_call_operand.vmem [shape: f32[1,32], index: 5, kind: input, shape index: {}]
  %s6 = inlined_call_operand.vmem [shape: bf16[128,32], index: 6, kind: output, shape index: {}]
  %s7 = sld [smem:[#allocation0]]
  $region42: #{gnn_forward_prepared.4} parent=0
    _
  %s9 = ssub.s32 1, %s7
  %s10 = scalar_select 0, %s9, %s7
  // Predicated region
  $region2: #{gnn_forward_prepared.4} parent=0 // pred_check
    _
  $region3: #{gnn_forward_prepared.4} parent=0 // pred_check_branch
    %12 = sbr.rel (0) target = $region5
  $region4: #{gnn_forward_prepared.4} parent=0 // pred_region
    _
  $region5: #{gnn_forward_prepared.4} parent=0 // pred_fallthru
    _
  // Predicated region
  $region6: #{gnn_forward_prepared.4} parent=0 // pred_check
    _
  $region7: #{gnn_forward_prepared.4} parent=0 // pred_check_branch
    %14 = sbr.rel (0) target = $region9
  $region8: #{gnn_forward_prepared.4} parent=0 // pred_region
    _
  $region9: #{gnn_forward_prepared.4} parent=0 // pred_fallthru
    _
  // Predicated region
  $region10: #{gnn_forward_prepared.4} parent=0 // pred_check
    _
  $region11: #{gnn_forward_prepared.4} parent=0 // pred_check_branch
    %16 = sbr.rel (0) target = $region13
  $region12: #{gnn_forward_prepared.4} parent=0 // pred_region
    _
  $region13: #{gnn_forward_prepared.4} parent=0 // pred_fallthru
    _
  // Predicated region
  $region14: #{gnn_forward_prepared.4} parent=0 // pred_check
    _
  $region15: #{gnn_forward_prepared.4} parent=0 // pred_check_branch
    %18 = sbr.rel (0) target = $region17
  $region16: #{gnn_forward_prepared.4} parent=0 // pred_region
    _
  $region17: #{gnn_forward_prepared.4} parent=0 // pred_fallthru
    _
  // Predicated region
  $region18: #{gnn_forward_prepared.4} parent=0 // pred_check
    _
  $region19: #{gnn_forward_prepared.4} parent=0 // pred_check_branch
    %20 = sbr.rel (0) target = $region21
  $region20: #{gnn_forward_prepared.4} parent=0 // pred_region
    _
  $region21: #{gnn_forward_prepared.4} parent=0 // pred_fallthru
    _
  // Predicated region
  $region22: #{gnn_forward_prepared.4} parent=0 // pred_check
    _
  $region23: #{gnn_forward_prepared.4} parent=0 // pred_check_branch
    %22 = sbr.rel (0) target = $region25
  $region24: #{gnn_forward_prepared.4} parent=0 // pred_region
    _
  $region25: #{gnn_forward_prepared.4} parent=0 // pred_fallthru
    _
  %p24 = scmp.eq.s32.totalorder 0, 0
  // Predicated region
  $region26: #{gnn_forward_prepared.4} parent=0 // pred_check
    %p25 = pneg %p24
  $region27: #{gnn_forward_prepared.4} parent=0 // pred_check_branch
    %27 = sbr.rel (%p25) target = $region29
  $region28: #{gnn_forward_prepared.4} parent=0 // pred_region
    %vm28 = vcmask 261120
    %29 = vst.msk [vmem:[#allocation2] sm:$0xff] %vm28, 0.0
    %30 = vst.msk [vmem:[#allocation2 + $0x8] sm:$0xff] %vm28, 0.0
    %31 = vst.msk [vmem:[#allocation2 + $0x10] sm:$0xff] %vm28, 0.0
    %32 = vst.msk [vmem:[#allocation2 + $0x18] sm:$0xff] %vm28, 0.0
    %33 = vst.msk [vmem:[#allocation2 + $0x20] sm:$0xff] %vm28, 0.0
    %34 = vst.msk [vmem:[#allocation2 + $0x28] sm:$0xff] %vm28, 0.0
    %35 = vst.msk [vmem:[#allocation2 + $0x30] sm:$0xff] %vm28, 0.0
    %36 = vst.msk [vmem:[#allocation2 + $0x38] sm:$0xff] %vm28, 0.0
    %37 = vst.msk [vmem:[#allocation2 + $0x40] sm:$0xff] %vm28, 0.0
    %38 = vst.msk [vmem:[#allocation2 + $0x48] sm:$0xff] %vm28, 0.0
    %39 = vst.msk [vmem:[#allocation2 + $0x50] sm:$0xff] %vm28, 0.0
    %40 = vst.msk [vmem:[#allocation2 + $0x58] sm:$0xff] %vm28, 0.0
    %41 = vst.msk [vmem:[#allocation2 + $0x60] sm:$0xff] %vm28, 0.0
    %42 = vst.msk [vmem:[#allocation2 + $0x68] sm:$0xff] %vm28, 0.0
    %43 = vst.msk [vmem:[#allocation2 + $0x70] sm:$0xff] %vm28, 0.0
    %44 = vst.msk [vmem:[#allocation2 + $0x78] sm:$0xff] %vm28, 0.0
  $region29: #{gnn_forward_prepared.4} parent=0 // pred_fallthru
    _
  %v45 = vld [vmem:[%s0] sm:$0xff]
  %v46 = vld [vmem:[%s0 + $0x8] sm:$0xff]
  %v47 = vld [vmem:[%s0 + $0x10] sm:$0xff]
  %v48 = vld [vmem:[%s0 + $0x18] sm:$0xff]
  %v49 = vunpack.c.l.s8.bf16 %v45
  %v50 = vunpack.c.h.s8.bf16 %v45
  %v51 = vunpack.c.l.s8.bf16 %v46
  %v52 = vunpack.c.h.s8.bf16 %v46
  %v53 = vunpack.c.l.s8.bf16 %v47
  %v54 = vunpack.c.h.s8.bf16 %v47
  %v55 = vunpack.c.l.s8.bf16 %v48
  %v56 = vunpack.c.h.s8.bf16 %v48
  %v57 = vld [vmem:[#allocation2] sm:$0xff]
  %v58 = vld [vmem:[#allocation2 + $0x8] sm:$0xff]
  %v59 = vld [vmem:[#allocation2 + $0x10] sm:$0xff]
  %v60 = vld [vmem:[#allocation2 + $0x18] sm:$0xff]
  %v61 = vld [vmem:[#allocation2 + $0x20] sm:$0xff]
  %v62 = vld [vmem:[#allocation2 + $0x28] sm:$0xff]
  %v63 = vld [vmem:[#allocation2 + $0x30] sm:$0xff]
  %v64 = vld [vmem:[#allocation2 + $0x38] sm:$0xff]
  %v65 = vld [vmem:[#allocation2 + $0x40] sm:$0xff]
  %v66 = vld [vmem:[#allocation2 + $0x48] sm:$0xff]
  %v67 = vld [vmem:[#allocation2 + $0x50] sm:$0xff]
  %v68 = vld [vmem:[#allocation2 + $0x58] sm:$0xff]
  %v69 = vld [vmem:[#allocation2 + $0x60] sm:$0xff]
  %v70 = vld [vmem:[#allocation2 + $0x68] sm:$0xff]
  %v71 = vld [vmem:[#allocation2 + $0x70] sm:$0xff]
  %v72 = vld [vmem:[#allocation2 + $0x78] sm:$0xff]
  %v73 = vld [vmem:[%s1] sm:$0xf]
  %v74 = vld [vmem:[%s1 + $0x4] sm:$0xf]
  %v75 = vld [vmem:[%s1 + $0x8] sm:$0xf]
  %v76 = vld [vmem:[%s1 + $0xc] sm:$0xf]
  %v77 = vld [vmem:[%s1 + $0x10] sm:$0xf]
  %v78 = vld [vmem:[%s1 + $0x14] sm:$0xf]
  %v79 = vld [vmem:[%s1 + $0x18] sm:$0xf]
  %v80 = vld [vmem:[%s1 + $0x1c] sm:$0xf]
  %v81 = vld [vmem:[%s1 + $0x20] sm:$0xf]
  %v82 = vld [vmem:[%s1 + $0x24] sm:$0xf]
  %v83 = vld [vmem:[%s1 + $0x28] sm:$0xf]
  %v84 = vld [vmem:[%s1 + $0x2c] sm:$0xf]
  %v85 = vld [vmem:[%s1 + $0x30] sm:$0xf]
  %v86 = vld [vmem:[%s1 + $0x34] sm:$0xf]
  %v87 = vld [vmem:[%s1 + $0x38] sm:$0xf]
  %v88 = vld [vmem:[%s1 + $0x3c] sm:$0xf]
  %v105 = vunpack.c.l.b16 %v73
  %v106 = vunpack.c.l.b16 %v74
  %v107 = vunpack.c.l.b16 %v75
  %v108 = vunpack.c.l.b16 %v76
  %v109 = vunpack.c.l.b16 %v77
  %v110 = vunpack.c.l.b16 %v78
  %v111 = vunpack.c.l.b16 %v79
  %v112 = vunpack.c.l.b16 %v80
  %v113 = vunpack.c.l.b16 %v81
  %v114 = vunpack.c.l.b16 %v82
  %v115 = vunpack.c.l.b16 %v83
  %v116 = vunpack.c.l.b16 %v84
  %v117 = vunpack.c.l.b16 %v85
  %v118 = vunpack.c.l.b16 %v86
  %v119 = vunpack.c.l.b16 %v87
  %v120 = vunpack.c.l.b16 %v88
  %v121 = vpack.c.b16 %v106, %v105
  %v122 = vpack.c.b16 %v108, %v107
  %v123 = vpack.c.b16 %v110, %v109
  %v124 = vpack.c.b16 %v112, %v111
  %v125 = vpack.c.b16 %v114, %v113
  %v126 = vpack.c.b16 %v116, %v115
  %v127 = vpack.c.b16 %v118, %v117
  %v128 = vpack.c.b16 %v120, %v119
  %137 = vmatprep.subr.bf16.mxu0 0
  %138 = vmatpush1.bf16.msra.mxu0 %v128
  %139 = vmatprep.subr.bf16.mxu0 0
  %140 = vmatpush1.bf16.msra.mxu0 %v127
  %141 = vmatprep.subr.bf16.mxu0 0
  %142 = vmatpush1.bf16.msra.mxu0 %v126
  %143 = vmatprep.subr.bf16.mxu0 0
  %144 = vmatpush1.bf16.msra.mxu0 %v125
  %145 = vmatprep.subr.bf16.mxu0 0
  %146 = vmatpush1.bf16.msra.mxu0 %v124
  %147 = vmatprep.subr.bf16.mxu0 0
  %148 = vmatpush1.bf16.msra.mxu0 %v123
  %149 = vmatprep.subr.bf16.mxu0 0
  %150 = vmatpush1.bf16.msra.mxu0 %v122
  %151 = vmatprep.subr.bf16.mxu0 0
  %152 = vmatpush1.bf16.msra.mxu0 %v121
  %153 = vmatprep.subr.bf16.mxu0 0
  %154 = vmatpush2.bf16.msra.mxu0 0
  %155 = vmatprep.subr.bf16.mxu0 0
  %156 = vmatpush2.bf16.msra.mxu0 0
  %157 = vmatprep.subr.bf16.mxu0 0
  %158 = vmatpush2.bf16.msra.mxu0 0
  %159 = vmatprep.subr.bf16.mxu0 0
  %160 = vmatpush2.bf16.msra.mxu0 0
  %161 = vmatprep.subr.bf16.mxu0 0
  %162 = vmatpush2.bf16.msra.mxu0 0
  %163 = vmatprep.subr.bf16.mxu0 0
  %164 = vmatpush2.bf16.msra.mxu0 0
  %165 = vmatprep.subr.bf16.mxu0 0
  %166 = vmatpush2.bf16.msra.mxu0 0
  %167 = vmatprep.subr.bf16.mxu0 0
  %168 = vmatpush2.bf16.msra.mxu0 0
  %169 = vmatprep.mubr.bf16.mxu0 0
  %170 = vmatmul.mubr.bf16.gmra.mxu0 %v49
  %v171 = vpop.f32.mrf.mxu0
  %v172 = vadd.f32 0.0, %v171
  %v173 = vpop.f32.mrf.mxu0
  %v174 = vpop.f32.mrf.mxu0
  %v175 = vadd.f32 0.0, %v174
  %v176 = vpop.f32.mrf.mxu0
  %177 = vmatprep.mubr.bf16.mxu0 0
  %178 = vmatmul.mubr.bf16.gmra.mxu0 %v50
  %v179 = vpop.f32.mrf.mxu0
  %v180 = vadd.f32 0.0, %v179
  %v181 = vpop.f32.mrf.mxu0
  %v182 = vpop.f32.mrf.mxu0
  %v183 = vadd.f32 0.0, %v182
  %v184 = vpop.f32.mrf.mxu0
  %185 = vmatprep.mubr.bf16.mxu0 0
  %186 = vmatmul.mubr.bf16.gmra.mxu0 %v51
  %v187 = vpop.f32.mrf.mxu0
  %v188 = vadd.f32 0.0, %v187
  %v189 = vpop.f32.mrf.mxu0
  %v190 = vpop.f32.mrf.mxu0
  %v191 = vadd.f32 0.0, %v190
  %v192 = vpop.f32.mrf.mxu0
  %193 = vmatprep.mubr.bf16.mxu0 0
  %194 = vmatmul.mubr.bf16.gmra.mxu0 %v52
  %v195 = vpop.f32.mrf.mxu0
  %v196 = vadd.f32 0.0, %v195
  %v197 = vpop.f32.mrf.mxu0
  %v198 = vpop.f32.mrf.mxu0
  %v199 = vadd.f32 0.0, %v198
  %v200 = vpop.f32.mrf.mxu0
  %201 = vmatprep.mubr.bf16.mxu0 0
  %202 = vmatmul.mubr.bf16.gmra.mxu0 %v53
  %v203 = vpop.f32.mrf.mxu0
  %v204 = vadd.f32 0.0, %v203
  %v205 = vpop.f32.mrf.mxu0
  %v206 = vpop.f32.mrf.mxu0
  %v207 = vadd.f32 0.0, %v206
  %v208 = vpop.f32.mrf.mxu0
  %209 = vmatprep.mubr.bf16.mxu0 0
  %210 = vmatmul.mubr.bf16.gmra.mxu0 %v54
  %v211 = vpop.f32.mrf.mxu0
  %v212 = vadd.f32 0.0, %v211
  %v213 = vpop.f32.mrf.mxu0
  %v214 = vpop.f32.mrf.mxu0
  %v215 = vadd.f32 0.0, %v214
  %v216 = vpop.f32.mrf.mxu0
  %217 = vmatprep.mubr.bf16.mxu0 0
  %218 = vmatmul.mubr.bf16.gmra.mxu0 %v55
  %v219 = vpop.f32.mrf.mxu0
  %v220 = vadd.f32 0.0, %v219
  %v221 = vpop.f32.mrf.mxu0
  %v222 = vpop.f32.mrf.mxu0
  %v223 = vadd.f32 0.0, %v222
  %v224 = vpop.f32.mrf.mxu0
  %225 = vmatprep.mubr.bf16.mxu0 0
  %226 = vmatmul.mubr.bf16.gmra.mxu0 %v56
  %v227 = vpop.f32.mrf.mxu0
  %v228 = vadd.f32 0.0, %v227
  %v229 = vpop.f32.mrf.mxu0
  %v230 = vpop.f32.mrf.mxu0
  %v231 = vadd.f32 0.0, %v230
  %v232 = vpop.f32.mrf.mxu0
  %233 = vdwg.mxu0
  %v234 = vadd.f32 %v57, %v172
  %v235 = vadd.f32 %v58, %v175
  %v236 = vadd.f32 %v59, %v180
  %v237 = vadd.f32 %v60, %v183
  %v238 = vadd.f32 %v61, %v188
  %v239 = vadd.f32 %v62, %v191
  %v240 = vadd.f32 %v63, %v196
  %v241 = vadd.f32 %v64, %v199
  %v242 = vadd.f32 %v65, %v204
  %v243 = vadd.f32 %v66, %v207
  %v244 = vadd.f32 %v67, %v212
  %v245 = vadd.f32 %v68, %v215
  %v246 = vadd.f32 %v69, %v220
  %v247 = vadd.f32 %v70, %v223
  %v248 = vadd.f32 %v71, %v228
  %v249 = vadd.f32 %v72, %v231
  %vm250 = vcmask 261120
  %251 = vst.msk [vmem:[#allocation2] sm:$0xff] %vm250, %v234
  %252 = vst.msk [vmem:[#allocation2 + $0x8] sm:$0xff] %vm250, %v235
  %253 = vst.msk [vmem:[#allocation2 + $0x10] sm:$0xff] %vm250, %v236
  %254 = vst.msk [vmem:[#allocation2 + $0x18] sm:$0xff] %vm250, %v237
  %255 = vst.msk [vmem:[#allocation2 + $0x20] sm:$0xff] %vm250, %v238
  %256 = vst.msk [vmem:[#allocation2 + $0x28] sm:$0xff] %vm250, %v239
  %257 = vst.msk [vmem:[#allocation2 + $0x30] sm:$0xff] %vm250, %v240
  %258 = vst.msk [vmem:[#allocation2 + $0x38] sm:$0xff] %vm250, %v241
  %259 = vst.msk [vmem:[#allocation2 + $0x40] sm:$0xff] %vm250, %v242
  %260 = vst.msk [vmem:[#allocation2 + $0x48] sm:$0xff] %vm250, %v243
  %261 = vst.msk [vmem:[#allocation2 + $0x50] sm:$0xff] %vm250, %v244
  %262 = vst.msk [vmem:[#allocation2 + $0x58] sm:$0xff] %vm250, %v245
  %263 = vst.msk [vmem:[#allocation2 + $0x60] sm:$0xff] %vm250, %v246
  %264 = vst.msk [vmem:[#allocation2 + $0x68] sm:$0xff] %vm250, %v247
  %265 = vst.msk [vmem:[#allocation2 + $0x70] sm:$0xff] %vm250, %v248
  %266 = vst.msk [vmem:[#allocation2 + $0x78] sm:$0xff] %vm250, %v249
  // Predicated region
  $region30: #{gnn_forward_prepared.4} parent=0 // pred_check
    %p267 = pneg %p24
  $region31: #{gnn_forward_prepared.4} parent=0 // pred_check_branch
    %269 = sbr.rel (%p267) target = $region33
  $region32: #{gnn_forward_prepared.4} parent=0 // pred_region
    %v270 = vld [vmem:[#allocation2] sm:$0xff]
    %v271 = vld [vmem:[#allocation2 + $0x8] sm:$0xff]
    %v272 = vld [vmem:[#allocation2 + $0x10] sm:$0xff]
    %v273 = vld [vmem:[#allocation2 + $0x18] sm:$0xff]
    %v274 = vld [vmem:[#allocation2 + $0x20] sm:$0xff]
    %v275 = vld [vmem:[#allocation2 + $0x28] sm:$0xff]
    %v276 = vld [vmem:[#allocation2 + $0x30] sm:$0xff]
    %v277 = vld [vmem:[#allocation2 + $0x38] sm:$0xff]
    %v278 = vld [vmem:[#allocation2 + $0x40] sm:$0xff]
    %v279 = vld [vmem:[#allocation2 + $0x48] sm:$0xff]
    %v280 = vld [vmem:[#allocation2 + $0x50] sm:$0xff]
    %v281 = vld [vmem:[#allocation2 + $0x58] sm:$0xff]
    %v282 = vld [vmem:[#allocation2 + $0x60] sm:$0xff]
    %v283 = vld [vmem:[#allocation2 + $0x68] sm:$0xff]
    %v284 = vld [vmem:[#allocation2 + $0x70] sm:$0xff]
    %v285 = vld [vmem:[#allocation2 + $0x78] sm:$0xff]
    %v286 = vld [vmem:[%s3] sm:$0xff]
    %v287 = vld [vmem:[%s3 + $0x8] sm:$0xff]
    %v288 = vld [vmem:[%s3 + $0x10] sm:$0xff]
    %v289 = vld [vmem:[%s3 + $0x18] sm:$0xff]
    %v290 = vld [vmem:[%s2] sm:$0xf]
    %v291 = vld [vmem:[%s2 + $0x4] sm:$0xf]
    %v292 = vld [vmem:[%s2 + $0x8] sm:$0xf]
    %v293 = vld [vmem:[%s2 + $0xc] sm:$0xf]
    %v294 = vld [vmem:[%s2 + $0x10] sm:$0xf]
    %v295 = vld [vmem:[%s2 + $0x14] sm:$0xf]
    %v296 = vld [vmem:[%s2 + $0x18] sm:$0xf]
    %v297 = vld [vmem:[%s2 + $0x1c] sm:$0xf]
    %v298 = vld [vmem:[%s2 + $0x20] sm:$0xf]
    %v299 = vld [vmem:[%s2 + $0x24] sm:$0xf]
    %v300 = vld [vmem:[%s2 + $0x28] sm:$0xf]
    %v301 = vld [vmem:[%s2 + $0x2c] sm:$0xf]
    %v302 = vld [vmem:[%s2 + $0x30] sm:$0xf]
    %v303 = vld [vmem:[%s2 + $0x34] sm:$0xf]
    %v304 = vld [vmem:[%s2 + $0x38] sm:$0xf]
    %v305 = vld [vmem:[%s2 + $0x3c] sm:$0xf]
    %v306 = vunpack.c.l.bf16 %v290
    %v307 = vunpack.c.l.bf16 %v291
    %v308 = vunpack.c.l.bf16 %v292
    %v309 = vunpack.c.l.bf16 %v293
    %v310 = vunpack.c.l.bf16 %v294
    %v311 = vunpack.c.l.bf16 %v295
    %v312 = vunpack.c.l.bf16 %v296
    %v313 = vunpack.c.l.bf16 %v297
    %v314 = vunpack.c.l.bf16 %v298
    %v315 = vunpack.c.l.bf16 %v299
    %v316 = vunpack.c.l.bf16 %v300
    %v317 = vunpack.c.l.bf16 %v301
    %v318 = vunpack.c.l.bf16 %v302
    %v319 = vunpack.c.l.bf16 %v303
    %v320 = vunpack.c.l.bf16 %v304
    %v321 = vunpack.c.l.bf16 %v305
    %v322 = vld [vmem:[%s4] sm:$0xff]
    %v323 = vld [vmem:[%s4 + $0x8] sm:$0xff]
    %v324 = vld [vmem:[%s4 + $0x10] sm:$0xff]
    %v325 = vld [vmem:[%s4 + $0x18] sm:$0xff]
    %v327 = vsel %vm250, %v306, 0
    %v330 = vsel %vm250, %v307, 0
    %v333 = vsel %vm250, %v308, 0
    %v336 = vsel %vm250, %v309, 0
    %v339 = vsel %vm250, %v310, 0
    %v342 = vsel %vm250, %v311, 0
    %v345 = vsel %vm250, %v312, 0
    %v348 = vsel %vm250, %v313, 0
    %v351 = vsel %vm250, %v314, 0
    %v354 = vsel %vm250, %v315, 0
    %v357 = vsel %vm250, %v316, 0
    %v360 = vsel %vm250, %v317, 0
    %v363 = vsel %vm250, %v318, 0
    %v366 = vsel %vm250, %v319, 0
    %v369 = vsel %vm250, %v320, 0
    %v372 = vsel %vm250, %v321, 0
    %374 = vmatprep.subr.mxu0 0.0
    %375 = vmatpush1.msra.mxu0 0.0
    %376 = vmatprep.subr.mxu0 0.0
    %377 = vmatpush1.msra.mxu0 0.0
    %378 = vmatprep.subr.mxu0 0.0
    %379 = vmatpush1.msra.mxu0 0.0
    %380 = vmatprep.subr.mxu0 0.0
    %381 = vmatpush1.msra.mxu0 0.0
    %382 = vmatprep.subr.mxu0 0.0
    %383 = vmatpush1.msra.mxu0 0.0
    %384 = vmatprep.subr.mxu0 0.0
    %385 = vmatpush1.msra.mxu0 0.0
    %386 = vmatprep.subr.mxu0 0.0
    %387 = vmatpush1.msra.mxu0 0.0
    %388 = vmatprep.subr.mxu0 0.0
    %389 = vmatpush1.msra.mxu0 0.0
    %390 = vmatprep.subr.mxu0 0.0
    %391 = vmatpush1.msra.mxu0 0.0
    %392 = vmatprep.subr.mxu0 0.0
    %393 = vmatpush1.msra.mxu0 0.0
    %394 = vmatprep.subr.mxu0 0.0
    %395 = vmatpush1.msra.mxu0 0.0
    %396 = vmatprep.subr.mxu0 0.0
    %397 = vmatpush1.msra.mxu0 0.0
    %398 = vmatprep.subr.mxu0 0.0
    %399 = vmatpush1.msra.mxu0 %v325
    %400 = vmatprep.subr.mxu0 0.0
    %401 = vmatpush1.msra.mxu0 %v324
    %402 = vmatprep.subr.mxu0 0.0
    %403 = vmatpush1.msra.mxu0 %v323
    %404 = vmatprep.subr.mxu0 0.0
    %405 = vmatpush1.msra.mxu0 %v322
    %406 = vmatprep.subr.mxu0 0.0
    %407 = vmatpush2.msra.mxu0 0.0
    %408 = vmatprep.subr.mxu0 0.0
    %409 = vmatpush2.msra.mxu0 0.0
    %410 = vmatprep.subr.mxu0 0.0
    %411 = vmatpush2.msra.mxu0 0.0
    %412 = vmatprep.subr.mxu0 0.0
    %413 = vmatpush2.msra.mxu0 0.0
    %414 = vmatprep.subr.mxu0 0.0
    %415 = vmatpush2.msra.mxu0 0.0
    %416 = vmatprep.subr.mxu0 0.0
    %417 = vmatpush2.msra.mxu0 0.0
    %418 = vmatprep.subr.mxu0 0.0
    %419 = vmatpush2.msra.mxu0 0.0
    %420 = vmatprep.subr.mxu0 0.0
    %421 = vmatpush2.msra.mxu0 0.0
    %422 = vmatprep.subr.mxu0 0.0
    %423 = vmatpush2.msra.mxu0 0.0
    %424 = vmatprep.subr.mxu0 0.0
    %425 = vmatpush2.msra.mxu0 0.0
    %426 = vmatprep.subr.mxu0 0.0
    %427 = vmatpush2.msra.mxu0 0.0
    %428 = vmatprep.subr.mxu0 0.0
    %429 = vmatpush2.msra.mxu0 0.0
    %430 = vmatprep.subr.mxu0 0.0
    %431 = vmatpush2.msra.mxu0 0.0
    %432 = vmatprep.subr.mxu0 0.0
    %433 = vmatpush2.msra.mxu0 0.0
    %434 = vmatprep.subr.mxu0 0.0
    %435 = vmatpush2.msra.mxu0 0.0
    %436 = vmatprep.subr.mxu0 0.0
    %437 = vmatpush2.msra.mxu0 0.0
    %438 = vmatprep.mubr.f32.mxu0 0.0
    %439 = vmatmul.mubr.f32.gmra.mxu0 %v327
    %v440 = vpop.f32.mrf.mxu0
    %v441 = vadd.f32 0.0, %v440
    %v442 = vpop.f32.mrf.mxu0
    %443 = vmatprep.mubr.f32.mxu0 0.0
    %444 = vmatmul.mubr.f32.gmra.mxu0 %v330
    %v445 = vpop.f32.mrf.mxu0
    %v446 = vadd.f32 0.0, %v445
    %v447 = vpop.f32.mrf.mxu0
    %448 = vmatprep.mubr.f32.mxu0 0.0
    %449 = vmatmul.mubr.f32.gmra.mxu0 %v333
    %v450 = vpop.f32.mrf.mxu0
    %v451 = vadd.f32 0.0, %v450
    %v452 = vpop.f32.mrf.mxu0
    %453 = vmatprep.mubr.f32.mxu0 0.0
    %454 = vmatmul.mubr.f32.gmra.mxu0 %v336
    %v455 = vpop.f32.mrf.mxu0
    %v456 = vadd.f32 0.0, %v455
    %v457 = vpop.f32.mrf.mxu0
    %458 = vmatprep.mubr.f32.mxu0 0.0
    %459 = vmatmul.mubr.f32.gmra.mxu0 %v339
    %v460 = vpop.f32.mrf.mxu0
    %v461 = vadd.f32 0.0, %v460
    %v462 = vpop.f32.mrf.mxu0
    %463 = vmatprep.mubr.f32.mxu0 0.0
    %464 = vmatmul.mubr.f32.gmra.mxu0 %v342
    %v465 = vpop.f32.mrf.mxu0
    %v466 = vadd.f32 0.0, %v465
    %v467 = vpop.f32.mrf.mxu0
    %468 = vmatprep.mubr.f32.mxu0 0.0
    %469 = vmatmul.mubr.f32.gmra.mxu0 %v345
    %v470 = vpop.f32.mrf.mxu0
    %v471 = vadd.f32 0.0, %v470
    %v472 = vpop.f32.mrf.mxu0
    %473 = vmatprep.mubr.f32.mxu0 0.0
    %474 = vmatmul.mubr.f32.gmra.mxu0 %v348
    %v475 = vpop.f32.mrf.mxu0
    %v476 = vadd.f32 0.0, %v475
    %v477 = vpop.f32.mrf.mxu0
    %478 = vmatprep.mubr.f32.mxu0 0.0
    %479 = vmatmul.mubr.f32.gmra.mxu0 %v351
    %v480 = vpop.f32.mrf.mxu0
    %v481 = vadd.f32 0.0, %v480
    %v482 = vpop.f32.mrf.mxu0
    %483 = vmatprep.mubr.f32.mxu0 0.0
    %484 = vmatmul.mubr.f32.gmra.mxu0 %v354
    %v485 = vpop.f32.mrf.mxu0
    %v486 = vadd.f32 0.0, %v485
    %v487 = vpop.f32.mrf.mxu0
    %488 = vmatprep.mubr.f32.mxu0 0.0
    %489 = vmatmul.mubr.f32.gmra.mxu0 %v357
    %v490 = vpop.f32.mrf.mxu0
    %v491 = vadd.f32 0.0, %v490
    %v492 = vpop.f32.mrf.mxu0
    %493 = vmatprep.mubr.f32.mxu0 0.0
    %494 = vmatmul.mubr.f32.gmra.mxu0 %v360
    %v495 = vpop.f32.mrf.mxu0
    %v496 = vadd.f32 0.0, %v495
    %v497 = vpop.f32.mrf.mxu0
    %498 = vmatprep.mubr.f32.mxu0 0.0
    %499 = vmatmul.mubr.f32.gmra.mxu0 %v363
    %v500 = vpop.f32.mrf.mxu0
    %v501 = vadd.f32 0.0, %v500
    %v502 = vpop.f32.mrf.mxu0
    %503 = vmatprep.mubr.f32.mxu0 0.0
    %504 = vmatmul.mubr.f32.gmra.mxu0 %v366
    %v505 = vpop.f32.mrf.mxu0
    %v506 = vadd.f32 0.0, %v505
    %v507 = vpop.f32.mrf.mxu0
    %508 = vmatprep.mubr.f32.mxu0 0.0
    %509 = vmatmul.mubr.f32.gmra.mxu0 %v369
    %v510 = vpop.f32.mrf.mxu0
    %v511 = vadd.f32 0.0, %v510
    %v512 = vpop.f32.mrf.mxu0
    %513 = vmatprep.mubr.f32.mxu0 0.0
    %514 = vmatmul.mubr.f32.gmra.mxu0 %v372
    %v515 = vpop.f32.mrf.mxu0
    %v516 = vadd.f32 0.0, %v515
    %v517 = vpop.f32.mrf.mxu0
    %518 = vdwg.mxu0
    %v520 = vsel %vm250, %v270, 0
    %v523 = vsel %vm250, %v271, 0
    %v526 = vsel %vm250, %v272, 0
    %v529 = vsel %vm250, %v273, 0
    %v532 = vsel %vm250, %v274, 0
    %v535 = vsel %vm250, %v275, 0
    %v538 = vsel %vm250, %v276, 0
    %v541 = vsel %vm250, %v277, 0
    %v544 = vsel %vm250, %v278, 0
    %v547 = vsel %vm250, %v279, 0
    %v550 = vsel %vm250, %v280, 0
    %v553 = vsel %vm250, %v281, 0
    %v556 = vsel %vm250, %v282, 0
    %v559 = vsel %vm250, %v283, 0
    %v562 = vsel %vm250, %v284, 0
    %v565 = vsel %vm250, %v285, 0
    %567 = vmatprep.subr.mxu0 0.0
    %568 = vmatpush1.msra.mxu0 0.0
    %569 = vmatprep.subr.mxu0 0.0
    %570 = vmatpush1.msra.mxu0 0.0
    %571 = vmatprep.subr.mxu0 0.0
    %572 = vmatpush1.msra.mxu0 0.0
    %573 = vmatprep.subr.mxu0 0.0
    %574 = vmatpush1.msra.mxu0 0.0
    %575 = vmatprep.subr.mxu0 0.0
    %576 = vmatpush1.msra.mxu0 0.0
    %577 = vmatprep.subr.mxu0 0.0
    %578 = vmatpush1.msra.mxu0 0.0
    %579 = vmatprep.subr.mxu0 0.0
    %580 = vmatpush1.msra.mxu0 0.0
    %581 = vmatprep.subr.mxu0 0.0
    %582 = vmatpush1.msra.mxu0 0.0
    %583 = vmatprep.subr.mxu0 0.0
    %584 = vmatpush1.msra.mxu0 0.0
    %585 = vmatprep.subr.mxu0 0.0
    %586 = vmatpush1.msra.mxu0 0.0
    %587 = vmatprep.subr.mxu0 0.0
    %588 = vmatpush1.msra.mxu0 0.0
    %589 = vmatprep.subr.mxu0 0.0
    %590 = vmatpush1.msra.mxu0 0.0
    %591 = vmatprep.subr.mxu0 0.0
    %592 = vmatpush1.msra.mxu0 %v289
    %593 = vmatprep.subr.mxu0 0.0
    %594 = vmatpush1.msra.mxu0 %v288
    %595 = vmatprep.subr.mxu0 0.0
    %596 = vmatpush1.msra.mxu0 %v287
    %597 = vmatprep.subr.mxu0 0.0
    %598 = vmatpush1.msra.mxu0 %v286
    %599 = vmatprep.subr.mxu0 0.0
    %600 = vmatpush2.msra.mxu0 0.0
    %601 = vmatprep.subr.mxu0 0.0
    %602 = vmatpush2.msra.mxu0 0.0
    %603 = vmatprep.subr.mxu0 0.0
    %604 = vmatpush2.msra.mxu0 0.0
    %605 = vmatprep.subr.mxu0 0.0
    %606 = vmatpush2.msra.mxu0 0.0
    %607 = vmatprep.subr.mxu0 0.0
    %608 = vmatpush2.msra.mxu0 0.0
    %609 = vmatprep.subr.mxu0 0.0
    %610 = vmatpush2.msra.mxu0 0.0
    %611 = vmatprep.subr.mxu0 0.0
    %612 = vmatpush2.msra.mxu0 0.0
    %613 = vmatprep.subr.mxu0 0.0
    %614 = vmatpush2.msra.mxu0 0.0
    %615 = vmatprep.subr.mxu0 0.0
    %616 = vmatpush2.msra.mxu0 0.0
    %617 = vmatprep.subr.mxu0 0.0
    %618 = vmatpush2.msra.mxu0 0.0
    %619 = vmatprep.subr.mxu0 0.0
    %620 = vmatpush2.msra.mxu0 0.0
    %621 = vmatprep.subr.mxu0 0.0
    %622 = vmatpush2.msra.mxu0 0.0
    %623 = vmatprep.subr.mxu0 0.0
    %624 = vmatpush2.msra.mxu0 0.0
    %625 = vmatprep.subr.mxu0 0.0
    %626 = vmatpush2.msra.mxu0 0.0
    %627 = vmatprep.subr.mxu0 0.0
    %628 = vmatpush2.msra.mxu0 0.0
    %629 = vmatprep.subr.mxu0 0.0
    %630 = vmatpush2.msra.mxu0 0.0
    %631 = vmatprep.mubr.f32.mxu0 0.0
    %632 = vmatmul.mubr.f32.gmra.mxu0 %v520
    %v633 = vpop.f32.mrf.mxu0
    %v634 = vadd.f32 %v441, %v633
    %v635 = vpop.f32.mrf.mxu0
    %636 = vmatprep.mubr.f32.mxu0 0.0
    %637 = vmatmul.mubr.f32.gmra.mxu0 %v523
    %v638 = vpop.f32.mrf.mxu0
    %v639 = vadd.f32 %v446, %v638
    %v640 = vpop.f32.mrf.mxu0
    %641 = vmatprep.mubr.f32.mxu0 0.0
    %642 = vmatmul.mubr.f32.gmra.mxu0 %v526
    %v643 = vpop.f32.mrf.mxu0
    %v644 = vadd.f32 %v451, %v643
    %v645 = vpop.f32.mrf.mxu0
    %646 = vmatprep.mubr.f32.mxu0 0.0
    %647 = vmatmul.mubr.f32.gmra.mxu0 %v529
    %v648 = vpop.f32.mrf.mxu0
    %v649 = vadd.f32 %v456, %v648
    %v650 = vpop.f32.mrf.mxu0
    %651 = vmatprep.mubr.f32.mxu0 0.0
    %652 = vmatmul.mubr.f32.gmra.mxu0 %v532
    %v653 = vpop.f32.mrf.mxu0
    %v654 = vadd.f32 %v461, %v653
    %v655 = vpop.f32.mrf.mxu0
    %656 = vmatprep.mubr.f32.mxu0 0.0
    %657 = vmatmul.mubr.f32.gmra.mxu0 %v535
    %v658 = vpop.f32.mrf.mxu0
    %v659 = vadd.f32 %v466, %v658
    %v660 = vpop.f32.mrf.mxu0
    %661 = vmatprep.mubr.f32.mxu0 0.0
    %662 = vmatmul.mubr.f32.gmra.mxu0 %v538
    %v663 = vpop.f32.mrf.mxu0
    %v664 = vadd.f32 %v471, %v663
    %v665 = vpop.f32.mrf.mxu0
    %666 = vmatprep.mubr.f32.mxu0 0.0
    %667 = vmatmul.mubr.f32.gmra.mxu0 %v541
    %v668 = vpop.f32.mrf.mxu0
    %v669 = vadd.f32 %v476, %v668
    %v670 = vpop.f32.mrf.mxu0
    %671 = vmatprep.mubr.f32.mxu0 0.0
    %672 = vmatmul.mubr.f32.gmra.mxu0 %v544
    %v673 = vpop.f32.mrf.mxu0
    %v674 = vadd.f32 %v481, %v673
    %v675 = vpop.f32.mrf.mxu0
    %676 = vmatprep.mubr.f32.mxu0 0.0
    %677 = vmatmul.mubr.f32.gmra.mxu0 %v547
    %v678 = vpop.f32.mrf.mxu0
    %v679 = vadd.f32 %v486, %v678
    %v680 = vpop.f32.mrf.mxu0
    %681 = vmatprep.mubr.f32.mxu0 0.0
    %682 = vmatmul.mubr.f32.gmra.mxu0 %v550
    %v683 = vpop.f32.mrf.mxu0
    %v684 = vadd.f32 %v491, %v683
    %v685 = vpop.f32.mrf.mxu0
    %686 = vmatprep.mubr.f32.mxu0 0.0
    %687 = vmatmul.mubr.f32.gmra.mxu0 %v553
    %v688 = vpop.f32.mrf.mxu0
    %v689 = vadd.f32 %v496, %v688
    %v690 = vpop.f32.mrf.mxu0
    %691 = vmatprep.mubr.f32.mxu0 0.0
    %692 = vmatmul.mubr.f32.gmra.mxu0 %v556
    %v693 = vpop.f32.mrf.mxu0
    %v694 = vadd.f32 %v501, %v693
    %v695 = vpop.f32.mrf.mxu0
    %696 = vmatprep.mubr.f32.mxu0 0.0
    %697 = vmatmul.mubr.f32.gmra.mxu0 %v559
    %v698 = vpop.f32.mrf.mxu0
    %v699 = vadd.f32 %v506, %v698
    %v700 = vpop.f32.mrf.mxu0
    %701 = vmatprep.mubr.f32.mxu0 0.0
    %702 = vmatmul.mubr.f32.gmra.mxu0 %v562
    %v703 = vpop.f32.mrf.mxu0
    %v704 = vadd.f32 %v511, %v703
    %v705 = vpop.f32.mrf.mxu0
    %706 = vmatprep.mubr.f32.mxu0 0.0
    %707 = vmatmul.mubr.f32.gmra.mxu0 %v565
    %v708 = vpop.f32.mrf.mxu0
    %v709 = vadd.f32 %v516, %v708
    %v710 = vpop.f32.mrf.mxu0
    %711 = vdwg.mxu0
    %v712 = vld [vmem:[%s5] sm:$0x1]
    %v714 = vlaneseq
    %v715 = vshrl.u32 %v714, 7
    %v716 = vsub.s32 0, %v715
    %v717 = vrot.slane %v712, %v716
    %v719 = vadd.f32 %v634, %v717
    %v720 = vadd.f32 %v639, %v717
    %v721 = vadd.f32 %v644, %v717
    %v722 = vadd.f32 %v649, %v717
    %v723 = vadd.f32 %v654, %v717
    %v724 = vadd.f32 %v659, %v717
    %v725 = vadd.f32 %v664, %v717
    %v726 = vadd.f32 %v669, %v717
    %v727 = vadd.f32 %v674, %v717
    %v728 = vadd.f32 %v679, %v717
    %v729 = vadd.f32 %v684, %v717
    %v730 = vadd.f32 %v689, %v717
    %v731 = vadd.f32 %v694, %v717
    %v732 = vadd.f32 %v699, %v717
    %v733 = vadd.f32 %v704, %v717
    %v734 = vadd.f32 %v709, %v717
    %v735 = vmax.f32 %v719, 0.0
    %v736 = vmax.f32 %v720, 0.0
    %v737 = vmax.f32 %v721, 0.0
    %v738 = vmax.f32 %v722, 0.0
    %v739 = vmax.f32 %v723, 0.0
    %v740 = vmax.f32 %v724, 0.0
    %v741 = vmax.f32 %v725, 0.0
    %v742 = vmax.f32 %v726, 0.0
    %v743 = vmax.f32 %v727, 0.0
    %v744 = vmax.f32 %v728, 0.0
    %v745 = vmax.f32 %v729, 0.0
    %v746 = vmax.f32 %v730, 0.0
    %v747 = vmax.f32 %v731, 0.0
    %v748 = vmax.f32 %v732, 0.0
    %v749 = vmax.f32 %v733, 0.0
    %v750 = vmax.f32 %v734, 0.0
    %v751 = vpack.c.bf16 %v736, %v735
    %v752 = vpack.c.bf16 %v738, %v737
    %v753 = vpack.c.bf16 %v740, %v739
    %v754 = vpack.c.bf16 %v742, %v741
    %v755 = vpack.c.bf16 %v744, %v743
    %v756 = vpack.c.bf16 %v746, %v745
    %v757 = vpack.c.bf16 %v748, %v747
    %v758 = vpack.c.bf16 %v750, %v749
    %v767 = vunpack.c.l.b16 %v751
    %v768 = vunpack.c.h.b16 %v751
    %v769 = vunpack.c.l.b16 %v752
    %v770 = vunpack.c.h.b16 %v752
    %v771 = vunpack.c.l.b16 %v753
    %v772 = vunpack.c.h.b16 %v753
    %v773 = vunpack.c.l.b16 %v754
    %v774 = vunpack.c.h.b16 %v754
    %v775 = vunpack.c.l.b16 %v755
    %v776 = vunpack.c.h.b16 %v755
    %v777 = vunpack.c.l.b16 %v756
    %v778 = vunpack.c.h.b16 %v756
    %v779 = vunpack.c.l.b16 %v757
    %v780 = vunpack.c.h.b16 %v757
    %v781 = vunpack.c.l.b16 %v758
    %v782 = vunpack.c.h.b16 %v758
    %v783 = vpack.c.b16 %v767, %v767
    %v784 = vpack.c.b16 %v768, %v768
    %v785 = vpack.c.b16 %v769, %v769
    %v786 = vpack.c.b16 %v770, %v770
    %v787 = vpack.c.b16 %v771, %v771
    %v788 = vpack.c.b16 %v772, %v772
    %v789 = vpack.c.b16 %v773, %v773
    %v790 = vpack.c.b16 %v774, %v774
    %v791 = vpack.c.b16 %v775, %v775
    %v792 = vpack.c.b16 %v776, %v776
    %v793 = vpack.c.b16 %v777, %v777
    %v794 = vpack.c.b16 %v778, %v778
    %v795 = vpack.c.b16 %v779, %v779
    %v796 = vpack.c.b16 %v780, %v780
    %v797 = vpack.c.b16 %v781, %v781
    %v798 = vpack.c.b16 %v782, %v782
    %vm815 = vcmask 257024
    %816 = vst.msk [vmem:[%s6] sm:$0xf] %vm815, %v783
    %817 = vst.msk [vmem:[%s6 + $0x4] sm:$0xf] %vm815, %v784
    %818 = vst.msk [vmem:[%s6 + $0x8] sm:$0xf] %vm815, %v785
    %819 = vst.msk [vmem:[%s6 + $0xc] sm:$0xf] %vm815, %v786
    %820 = vst.msk [vmem:[%s6 + $0x10] sm:$0xf] %vm815, %v787
    %821 = vst.msk [vmem:[%s6 + $0x14] sm:$0xf] %vm815, %v788
    %822 = vst.msk [vmem:[%s6 + $0x18] sm:$0xf] %vm815, %v789
    %823 = vst.msk [vmem:[%s6 + $0x1c] sm:$0xf] %vm815, %v790
    %824 = vst.msk [vmem:[%s6 + $0x20] sm:$0xf] %vm815, %v791
    %825 = vst.msk [vmem:[%s6 + $0x24] sm:$0xf] %vm815, %v792
    %826 = vst.msk [vmem:[%s6 + $0x28] sm:$0xf] %vm815, %v793
    %827 = vst.msk [vmem:[%s6 + $0x2c] sm:$0xf] %vm815, %v794
    %828 = vst.msk [vmem:[%s6 + $0x30] sm:$0xf] %vm815, %v795
    %829 = vst.msk [vmem:[%s6 + $0x34] sm:$0xf] %vm815, %v796
    %830 = vst.msk [vmem:[%s6 + $0x38] sm:$0xf] %vm815, %v797
    %831 = vst.msk [vmem:[%s6 + $0x3c] sm:$0xf] %vm815, %v798
  $region33: #{gnn_forward_prepared.4} parent=0 // pred_fallthru
    _
  // Predicated region
  $region34: #{gnn_forward_prepared.4} parent=0 // pred_check
    _
  $region35: #{gnn_forward_prepared.4} parent=0 // pred_check_branch
    %833 = sbr.rel (0) target = $region37
  $region36: #{gnn_forward_prepared.4} parent=0 // pred_region
    _
  $region37: #{gnn_forward_prepared.4} parent=0 // pred_fallthru
    _
  // Predicated region
  $region38: #{gnn_forward_prepared.4} parent=0 // pred_check
    _
  $region39: #{gnn_forward_prepared.4} parent=0 // pred_check_branch
    %835 = sbr.rel (0) target = $region41
  $region40: #{gnn_forward_prepared.4} parent=0 // pred_region
    _
  $region41: #{gnn_forward_prepared.4} parent=0 // pred_fallthru
    _

// kernel: gnn_forward_prepared.3
$region0: #{gnn_forward_prepared.3}
  #allocation0 [shape = 'u32[]', space=smem, size = 0x4, offset = 0x4, fixed_abs, tag = 'smem constant byte address 0x4 - core index']
  #allocation1 [shape = 'u32[144,128]{1,0:T(1,128)}', space=vmem, size = 0x12000, scoped, tag = 'internal scratch']
  #allocation2 [shape = 'f32[128,32]{1,0:T(8,128)}', space=vmem, size = 0x10000, scoped, tag = 'scratch operand']
  %s0 = inlined_call_operand.vmem [shape: s8[128,128], index: 0, kind: input, shape index: {}]
  %s1 = inlined_call_operand.vmem [shape: bf16[128,32], index: 1, kind: input, shape index: {}]
  %s2 = inlined_call_operand.vmem [shape: f32[128,2], index: 2, kind: input, shape index: {}]
  %s3 = inlined_call_operand.vmem [shape: f32[32,32], index: 3, kind: input, shape index: {}]
  %s4 = inlined_call_operand.vmem [shape: f32[2,32], index: 4, kind: input, shape index: {}]
  %s5 = inlined_call_operand.vmem [shape: f32[1,32], index: 5, kind: input, shape index: {}]
  %s6 = inlined_call_operand.vmem [shape: bf16[128,32], index: 6, kind: output, shape index: {}]
  %s7 = sld [smem:[#allocation0]]
  $region42: #{gnn_forward_prepared.3} parent=0
    _
  %s9 = ssub.s32 1, %s7
  %s10 = scalar_select 0, %s9, %s7
  // Predicated region
  $region2: #{gnn_forward_prepared.3} parent=0 // pred_check
    _
  $region3: #{gnn_forward_prepared.3} parent=0 // pred_check_branch
    %12 = sbr.rel (0) target = $region5
  $region4: #{gnn_forward_prepared.3} parent=0 // pred_region
    _
  $region5: #{gnn_forward_prepared.3} parent=0 // pred_fallthru
    _
  // Predicated region
  $region6: #{gnn_forward_prepared.3} parent=0 // pred_check
    _
  $region7: #{gnn_forward_prepared.3} parent=0 // pred_check_branch
    %14 = sbr.rel (0) target = $region9
  $region8: #{gnn_forward_prepared.3} parent=0 // pred_region
    _
  $region9: #{gnn_forward_prepared.3} parent=0 // pred_fallthru
    _
  // Predicated region
  $region10: #{gnn_forward_prepared.3} parent=0 // pred_check
    _
  $region11: #{gnn_forward_prepared.3} parent=0 // pred_check_branch
    %16 = sbr.rel (0) target = $region13
  $region12: #{gnn_forward_prepared.3} parent=0 // pred_region
    _
  $region13: #{gnn_forward_prepared.3} parent=0 // pred_fallthru
    _
  // Predicated region
  $region14: #{gnn_forward_prepared.3} parent=0 // pred_check
    _
  $region15: #{gnn_forward_prepared.3} parent=0 // pred_check_branch
    %18 = sbr.rel (0) target = $region17
  $region16: #{gnn_forward_prepared.3} parent=0 // pred_region
    _
  $region17: #{gnn_forward_prepared.3} parent=0 // pred_fallthru
    _
  // Predicated region
  $region18: #{gnn_forward_prepared.3} parent=0 // pred_check
    _
  $region19: #{gnn_forward_prepared.3} parent=0 // pred_check_branch
    %20 = sbr.rel (0) target = $region21
  $region20: #{gnn_forward_prepared.3} parent=0 // pred_region
    _
  $region21: #{gnn_forward_prepared.3} parent=0 // pred_fallthru
    _
  // Predicated region
  $region22: #{gnn_forward_prepared.3} parent=0 // pred_check
    _
  $region23: #{gnn_forward_prepared.3} parent=0 // pred_check_branch
    %22 = sbr.rel (0) target = $region25
  $region24: #{gnn_forward_prepared.3} parent=0 // pred_region
    _
  $region25: #{gnn_forward_prepared.3} parent=0 // pred_fallthru
    _
  %p24 = scmp.eq.s32.totalorder 0, 0
  // Predicated region
  $region26: #{gnn_forward_prepared.3} parent=0 // pred_check
    %p25 = pneg %p24
  $region27: #{gnn_forward_prepared.3} parent=0 // pred_check_branch
    %27 = sbr.rel (%p25) target = $region29
  $region28: #{gnn_forward_prepared.3} parent=0 // pred_region
    %vm28 = vcmask 261120
    %29 = vst.msk [vmem:[#allocation2] sm:$0xff] %vm28, 0.0
    %30 = vst.msk [vmem:[#allocation2 + $0x8] sm:$0xff] %vm28, 0.0
    %31 = vst.msk [vmem:[#allocation2 + $0x10] sm:$0xff] %vm28, 0.0
    %32 = vst.msk [vmem:[#allocation2 + $0x18] sm:$0xff] %vm28, 0.0
    %33 = vst.msk [vmem:[#allocation2 + $0x20] sm:$0xff] %vm28, 0.0
    %34 = vst.msk [vmem:[#allocation2 + $0x28] sm:$0xff] %vm28, 0.0
    %35 = vst.msk [vmem:[#allocation2 + $0x30] sm:$0xff] %vm28, 0.0
    %36 = vst.msk [vmem:[#allocation2 + $0x38] sm:$0xff] %vm28, 0.0
    %37 = vst.msk [vmem:[#allocation2 + $0x40] sm:$0xff] %vm28, 0.0
    %38 = vst.msk [vmem:[#allocation2 + $0x48] sm:$0xff] %vm28, 0.0
    %39 = vst.msk [vmem:[#allocation2 + $0x50] sm:$0xff] %vm28, 0.0
    %40 = vst.msk [vmem:[#allocation2 + $0x58] sm:$0xff] %vm28, 0.0
    %41 = vst.msk [vmem:[#allocation2 + $0x60] sm:$0xff] %vm28, 0.0
    %42 = vst.msk [vmem:[#allocation2 + $0x68] sm:$0xff] %vm28, 0.0
    %43 = vst.msk [vmem:[#allocation2 + $0x70] sm:$0xff] %vm28, 0.0
    %44 = vst.msk [vmem:[#allocation2 + $0x78] sm:$0xff] %vm28, 0.0
  $region29: #{gnn_forward_prepared.3} parent=0 // pred_fallthru
    _
  %v45 = vld [vmem:[%s0] sm:$0xff]
  %v46 = vld [vmem:[%s0 + $0x8] sm:$0xff]
  %v47 = vld [vmem:[%s0 + $0x10] sm:$0xff]
  %v48 = vld [vmem:[%s0 + $0x18] sm:$0xff]
  %v49 = vunpack.c.l.s8.bf16 %v45
  %v50 = vunpack.c.h.s8.bf16 %v45
  %v51 = vunpack.c.l.s8.bf16 %v46
  %v52 = vunpack.c.h.s8.bf16 %v46
  %v53 = vunpack.c.l.s8.bf16 %v47
  %v54 = vunpack.c.h.s8.bf16 %v47
  %v55 = vunpack.c.l.s8.bf16 %v48
  %v56 = vunpack.c.h.s8.bf16 %v48
  %v57 = vld [vmem:[#allocation2] sm:$0xff]
  %v58 = vld [vmem:[#allocation2 + $0x8] sm:$0xff]
  %v59 = vld [vmem:[#allocation2 + $0x10] sm:$0xff]
  %v60 = vld [vmem:[#allocation2 + $0x18] sm:$0xff]
  %v61 = vld [vmem:[#allocation2 + $0x20] sm:$0xff]
  %v62 = vld [vmem:[#allocation2 + $0x28] sm:$0xff]
  %v63 = vld [vmem:[#allocation2 + $0x30] sm:$0xff]
  %v64 = vld [vmem:[#allocation2 + $0x38] sm:$0xff]
  %v65 = vld [vmem:[#allocation2 + $0x40] sm:$0xff]
  %v66 = vld [vmem:[#allocation2 + $0x48] sm:$0xff]
  %v67 = vld [vmem:[#allocation2 + $0x50] sm:$0xff]
  %v68 = vld [vmem:[#allocation2 + $0x58] sm:$0xff]
  %v69 = vld [vmem:[#allocation2 + $0x60] sm:$0xff]
  %v70 = vld [vmem:[#allocation2 + $0x68] sm:$0xff]
  %v71 = vld [vmem:[#allocation2 + $0x70] sm:$0xff]
  %v72 = vld [vmem:[#allocation2 + $0x78] sm:$0xff]
  %v73 = vld [vmem:[%s1] sm:$0xf]
  %v74 = vld [vmem:[%s1 + $0x4] sm:$0xf]
  %v75 = vld [vmem:[%s1 + $0x8] sm:$0xf]
  %v76 = vld [vmem:[%s1 + $0xc] sm:$0xf]
  %v77 = vld [vmem:[%s1 + $0x10] sm:$0xf]
  %v78 = vld [vmem:[%s1 + $0x14] sm:$0xf]
  %v79 = vld [vmem:[%s1 + $0x18] sm:$0xf]
  %v80 = vld [vmem:[%s1 + $0x1c] sm:$0xf]
  %v81 = vld [vmem:[%s1 + $0x20] sm:$0xf]
  %v82 = vld [vmem:[%s1 + $0x24] sm:$0xf]
  %v83 = vld [vmem:[%s1 + $0x28] sm:$0xf]
  %v84 = vld [vmem:[%s1 + $0x2c] sm:$0xf]
  %v85 = vld [vmem:[%s1 + $0x30] sm:$0xf]
  %v86 = vld [vmem:[%s1 + $0x34] sm:$0xf]
  %v87 = vld [vmem:[%s1 + $0x38] sm:$0xf]
  %v88 = vld [vmem:[%s1 + $0x3c] sm:$0xf]
  %v105 = vunpack.c.l.b16 %v73
  %v106 = vunpack.c.l.b16 %v74
  %v107 = vunpack.c.l.b16 %v75
  %v108 = vunpack.c.l.b16 %v76
  %v109 = vunpack.c.l.b16 %v77
  %v110 = vunpack.c.l.b16 %v78
  %v111 = vunpack.c.l.b16 %v79
  %v112 = vunpack.c.l.b16 %v80
  %v113 = vunpack.c.l.b16 %v81
  %v114 = vunpack.c.l.b16 %v82
  %v115 = vunpack.c.l.b16 %v83
  %v116 = vunpack.c.l.b16 %v84
  %v117 = vunpack.c.l.b16 %v85
  %v118 = vunpack.c.l.b16 %v86
  %v119 = vunpack.c.l.b16 %v87
  %v120 = vunpack.c.l.b16 %v88
  %v121 = vpack.c.b16 %v106, %v105
  %v122 = vpack.c.b16 %v108, %v107
  %v123 = vpack.c.b16 %v110, %v109
  %v124 = vpack.c.b16 %v112, %v111
  %v125 = vpack.c.b16 %v114, %v113
  %v126 = vpack.c.b16 %v116, %v115
  %v127 = vpack.c.b16 %v118, %v117
  %v128 = vpack.c.b16 %v120, %v119
  %137 = vmatprep.subr.bf16.mxu0 0
  %138 = vmatpush1.bf16.msra.mxu0 %v128
  %139 = vmatprep.subr.bf16.mxu0 0
  %140 = vmatpush1.bf16.msra.mxu0 %v127
  %141 = vmatprep.subr.bf16.mxu0 0
  %142 = vmatpush1.bf16.msra.mxu0 %v126
  %143 = vmatprep.subr.bf16.mxu0 0
  %144 = vmatpush1.bf16.msra.mxu0 %v125
  %145 = vmatprep.subr.bf16.mxu0 0
  %146 = vmatpush1.bf16.msra.mxu0 %v124
  %147 = vmatprep.subr.bf16.mxu0 0
  %148 = vmatpush1.bf16.msra.mxu0 %v123
  %149 = vmatprep.subr.bf16.mxu0 0
  %150 = vmatpush1.bf16.msra.mxu0 %v122
  %151 = vmatprep.subr.bf16.mxu0 0
  %152 = vmatpush1.bf16.msra.mxu0 %v121
  %153 = vmatprep.subr.bf16.mxu0 0
  %154 = vmatpush2.bf16.msra.mxu0 0
  %155 = vmatprep.subr.bf16.mxu0 0
  %156 = vmatpush2.bf16.msra.mxu0 0
  %157 = vmatprep.subr.bf16.mxu0 0
  %158 = vmatpush2.bf16.msra.mxu0 0
  %159 = vmatprep.subr.bf16.mxu0 0
  %160 = vmatpush2.bf16.msra.mxu0 0
  %161 = vmatprep.subr.bf16.mxu0 0
  %162 = vmatpush2.bf16.msra.mxu0 0
  %163 = vmatprep.subr.bf16.mxu0 0
  %164 = vmatpush2.bf16.msra.mxu0 0
  %165 = vmatprep.subr.bf16.mxu0 0
  %166 = vmatpush2.bf16.msra.mxu0 0
  %167 = vmatprep.subr.bf16.mxu0 0
  %168 = vmatpush2.bf16.msra.mxu0 0
  %169 = vmatprep.mubr.bf16.mxu0 0
  %170 = vmatmul.mubr.bf16.gmra.mxu0 %v49
  %v171 = vpop.f32.mrf.mxu0
  %v172 = vadd.f32 0.0, %v171
  %v173 = vpop.f32.mrf.mxu0
  %v174 = vpop.f32.mrf.mxu0
  %v175 = vadd.f32 0.0, %v174
  %v176 = vpop.f32.mrf.mxu0
  %177 = vmatprep.mubr.bf16.mxu0 0
  %178 = vmatmul.mubr.bf16.gmra.mxu0 %v50
  %v179 = vpop.f32.mrf.mxu0
  %v180 = vadd.f32 0.0, %v179
  %v181 = vpop.f32.mrf.mxu0
  %v182 = vpop.f32.mrf.mxu0
  %v183 = vadd.f32 0.0, %v182
  %v184 = vpop.f32.mrf.mxu0
  %185 = vmatprep.mubr.bf16.mxu0 0
  %186 = vmatmul.mubr.bf16.gmra.mxu0 %v51
  %v187 = vpop.f32.mrf.mxu0
  %v188 = vadd.f32 0.0, %v187
  %v189 = vpop.f32.mrf.mxu0
  %v190 = vpop.f32.mrf.mxu0
  %v191 = vadd.f32 0.0, %v190
  %v192 = vpop.f32.mrf.mxu0
  %193 = vmatprep.mubr.bf16.mxu0 0
  %194 = vmatmul.mubr.bf16.gmra.mxu0 %v52
  %v195 = vpop.f32.mrf.mxu0
  %v196 = vadd.f32 0.0, %v195
  %v197 = vpop.f32.mrf.mxu0
  %v198 = vpop.f32.mrf.mxu0
  %v199 = vadd.f32 0.0, %v198
  %v200 = vpop.f32.mrf.mxu0
  %201 = vmatprep.mubr.bf16.mxu0 0
  %202 = vmatmul.mubr.bf16.gmra.mxu0 %v53
  %v203 = vpop.f32.mrf.mxu0
  %v204 = vadd.f32 0.0, %v203
  %v205 = vpop.f32.mrf.mxu0
  %v206 = vpop.f32.mrf.mxu0
  %v207 = vadd.f32 0.0, %v206
  %v208 = vpop.f32.mrf.mxu0
  %209 = vmatprep.mubr.bf16.mxu0 0
  %210 = vmatmul.mubr.bf16.gmra.mxu0 %v54
  %v211 = vpop.f32.mrf.mxu0
  %v212 = vadd.f32 0.0, %v211
  %v213 = vpop.f32.mrf.mxu0
  %v214 = vpop.f32.mrf.mxu0
  %v215 = vadd.f32 0.0, %v214
  %v216 = vpop.f32.mrf.mxu0
  %217 = vmatprep.mubr.bf16.mxu0 0
  %218 = vmatmul.mubr.bf16.gmra.mxu0 %v55
  %v219 = vpop.f32.mrf.mxu0
  %v220 = vadd.f32 0.0, %v219
  %v221 = vpop.f32.mrf.mxu0
  %v222 = vpop.f32.mrf.mxu0
  %v223 = vadd.f32 0.0, %v222
  %v224 = vpop.f32.mrf.mxu0
  %225 = vmatprep.mubr.bf16.mxu0 0
  %226 = vmatmul.mubr.bf16.gmra.mxu0 %v56
  %v227 = vpop.f32.mrf.mxu0
  %v228 = vadd.f32 0.0, %v227
  %v229 = vpop.f32.mrf.mxu0
  %v230 = vpop.f32.mrf.mxu0
  %v231 = vadd.f32 0.0, %v230
  %v232 = vpop.f32.mrf.mxu0
  %233 = vdwg.mxu0
  %v234 = vadd.f32 %v57, %v172
  %v235 = vadd.f32 %v58, %v175
  %v236 = vadd.f32 %v59, %v180
  %v237 = vadd.f32 %v60, %v183
  %v238 = vadd.f32 %v61, %v188
  %v239 = vadd.f32 %v62, %v191
  %v240 = vadd.f32 %v63, %v196
  %v241 = vadd.f32 %v64, %v199
  %v242 = vadd.f32 %v65, %v204
  %v243 = vadd.f32 %v66, %v207
  %v244 = vadd.f32 %v67, %v212
  %v245 = vadd.f32 %v68, %v215
  %v246 = vadd.f32 %v69, %v220
  %v247 = vadd.f32 %v70, %v223
  %v248 = vadd.f32 %v71, %v228
  %v249 = vadd.f32 %v72, %v231
  %vm250 = vcmask 261120
  %251 = vst.msk [vmem:[#allocation2] sm:$0xff] %vm250, %v234
  %252 = vst.msk [vmem:[#allocation2 + $0x8] sm:$0xff] %vm250, %v235
  %253 = vst.msk [vmem:[#allocation2 + $0x10] sm:$0xff] %vm250, %v236
  %254 = vst.msk [vmem:[#allocation2 + $0x18] sm:$0xff] %vm250, %v237
  %255 = vst.msk [vmem:[#allocation2 + $0x20] sm:$0xff] %vm250, %v238
  %256 = vst.msk [vmem:[#allocation2 + $0x28] sm:$0xff] %vm250, %v239
  %257 = vst.msk [vmem:[#allocation2 + $0x30] sm:$0xff] %vm250, %v240
  %258 = vst.msk [vmem:[#allocation2 + $0x38] sm:$0xff] %vm250, %v241
  %259 = vst.msk [vmem:[#allocation2 + $0x40] sm:$0xff] %vm250, %v242
  %260 = vst.msk [vmem:[#allocation2 + $0x48] sm:$0xff] %vm250, %v243
  %261 = vst.msk [vmem:[#allocation2 + $0x50] sm:$0xff] %vm250, %v244
  %262 = vst.msk [vmem:[#allocation2 + $0x58] sm:$0xff] %vm250, %v245
  %263 = vst.msk [vmem:[#allocation2 + $0x60] sm:$0xff] %vm250, %v246
  %264 = vst.msk [vmem:[#allocation2 + $0x68] sm:$0xff] %vm250, %v247
  %265 = vst.msk [vmem:[#allocation2 + $0x70] sm:$0xff] %vm250, %v248
  %266 = vst.msk [vmem:[#allocation2 + $0x78] sm:$0xff] %vm250, %v249
  // Predicated region
  $region30: #{gnn_forward_prepared.3} parent=0 // pred_check
    %p267 = pneg %p24
  $region31: #{gnn_forward_prepared.3} parent=0 // pred_check_branch
    %269 = sbr.rel (%p267) target = $region33
  $region32: #{gnn_forward_prepared.3} parent=0 // pred_region
    %v270 = vld [vmem:[#allocation2] sm:$0xff]
    %v271 = vld [vmem:[#allocation2 + $0x8] sm:$0xff]
    %v272 = vld [vmem:[#allocation2 + $0x10] sm:$0xff]
    %v273 = vld [vmem:[#allocation2 + $0x18] sm:$0xff]
    %v274 = vld [vmem:[#allocation2 + $0x20] sm:$0xff]
    %v275 = vld [vmem:[#allocation2 + $0x28] sm:$0xff]
    %v276 = vld [vmem:[#allocation2 + $0x30] sm:$0xff]
    %v277 = vld [vmem:[#allocation2 + $0x38] sm:$0xff]
    %v278 = vld [vmem:[#allocation2 + $0x40] sm:$0xff]
    %v279 = vld [vmem:[#allocation2 + $0x48] sm:$0xff]
    %v280 = vld [vmem:[#allocation2 + $0x50] sm:$0xff]
    %v281 = vld [vmem:[#allocation2 + $0x58] sm:$0xff]
    %v282 = vld [vmem:[#allocation2 + $0x60] sm:$0xff]
    %v283 = vld [vmem:[#allocation2 + $0x68] sm:$0xff]
    %v284 = vld [vmem:[#allocation2 + $0x70] sm:$0xff]
    %v285 = vld [vmem:[#allocation2 + $0x78] sm:$0xff]
    %v286 = vld [vmem:[%s3] sm:$0xff]
    %v287 = vld [vmem:[%s3 + $0x8] sm:$0xff]
    %v288 = vld [vmem:[%s3 + $0x10] sm:$0xff]
    %v289 = vld [vmem:[%s3 + $0x18] sm:$0xff]
    %v290 = vld [vmem:[%s2] sm:$0xff]
    %v291 = vld [vmem:[%s2 + $0x8] sm:$0xff]
    %v292 = vld [vmem:[%s2 + $0x10] sm:$0xff]
    %v293 = vld [vmem:[%s2 + $0x18] sm:$0xff]
    %v294 = vld [vmem:[%s2 + $0x20] sm:$0xff]
    %v295 = vld [vmem:[%s2 + $0x28] sm:$0xff]
    %v296 = vld [vmem:[%s2 + $0x30] sm:$0xff]
    %v297 = vld [vmem:[%s2 + $0x38] sm:$0xff]
    %v298 = vld [vmem:[%s2 + $0x40] sm:$0xff]
    %v299 = vld [vmem:[%s2 + $0x48] sm:$0xff]
    %v300 = vld [vmem:[%s2 + $0x50] sm:$0xff]
    %v301 = vld [vmem:[%s2 + $0x58] sm:$0xff]
    %v302 = vld [vmem:[%s2 + $0x60] sm:$0xff]
    %v303 = vld [vmem:[%s2 + $0x68] sm:$0xff]
    %v304 = vld [vmem:[%s2 + $0x70] sm:$0xff]
    %v305 = vld [vmem:[%s2 + $0x78] sm:$0xff]
    %v306 = vld [vmem:[%s4] sm:$0x3]
    %vm307 = vcmask 15360
    %v309 = vsel %vm307, %v290, 0
    %v312 = vsel %vm307, %v291, 0
    %v315 = vsel %vm307, %v292, 0
    %v318 = vsel %vm307, %v293, 0
    %v321 = vsel %vm307, %v294, 0
    %v324 = vsel %vm307, %v295, 0
    %v327 = vsel %vm307, %v296, 0
    %v330 = vsel %vm307, %v297, 0
    %v333 = vsel %vm307, %v298, 0
    %v336 = vsel %vm307, %v299, 0
    %v339 = vsel %vm307, %v300, 0
    %v342 = vsel %vm307, %v301, 0
    %v345 = vsel %vm307, %v302, 0
    %v348 = vsel %vm307, %v303, 0
    %v351 = vsel %vm307, %v304, 0
    %v354 = vsel %vm307, %v305, 0
    %vm356 = vcmask 1041408
    %v358 = vsel %vm356, %v306, 0
    %360 = vmatprep.subr.mxu0 0.0
    %361 = vmatpush1.msra.mxu0 0.0
    %362 = vmatprep.subr.mxu0 0.0
    %363 = vmatpush1.msra.mxu0 0.0
    %364 = vmatprep.subr.mxu0 0.0
    %365 = vmatpush1.msra.mxu0 0.0
    %366 = vmatprep.subr.mxu0 0.0
    %367 = vmatpush1.msra.mxu0 0.0
    %368 = vmatprep.subr.mxu0 0.0
    %369 = vmatpush1.msra.mxu0 0.0
    %370 = vmatprep.subr.mxu0 0.0
    %371 = vmatpush1.msra.mxu0 0.0
    %372 = vmatprep.subr.mxu0 0.0
    %373 = vmatpush1.msra.mxu0 0.0
    %374 = vmatprep.subr.mxu0 0.0
    %375 = vmatpush1.msra.mxu0 0.0
    %376 = vmatprep.subr.mxu0 0.0
    %377 = vmatpush1.msra.mxu0 0.0
    %378 = vmatprep.subr.mxu0 0.0
    %379 = vmatpush1.msra.mxu0 0.0
    %380 = vmatprep.subr.mxu0 0.0
    %381 = vmatpush1.msra.mxu0 0.0
    %382 = vmatprep.subr.mxu0 0.0
    %383 = vmatpush1.msra.mxu0 0.0
    %384 = vmatprep.subr.mxu0 0.0
    %385 = vmatpush1.msra.mxu0 0.0
    %386 = vmatprep.subr.mxu0 0.0
    %387 = vmatpush1.msra.mxu0 0.0
    %388 = vmatprep.subr.mxu0 0.0
    %389 = vmatpush1.msra.mxu0 0.0
    %390 = vmatprep.subr.mxu0 0.0
    %391 = vmatpush1.msra.mxu0 %v358
    %392 = vmatprep.subr.mxu0 0.0
    %393 = vmatpush2.msra.mxu0 0.0
    %394 = vmatprep.subr.mxu0 0.0
    %395 = vmatpush2.msra.mxu0 0.0
    %396 = vmatprep.subr.mxu0 0.0
    %397 = vmatpush2.msra.mxu0 0.0
    %398 = vmatprep.subr.mxu0 0.0
    %399 = vmatpush2.msra.mxu0 0.0
    %400 = vmatprep.subr.mxu0 0.0
    %401 = vmatpush2.msra.mxu0 0.0
    %402 = vmatprep.subr.mxu0 0.0
    %403 = vmatpush2.msra.mxu0 0.0
    %404 = vmatprep.subr.mxu0 0.0
    %405 = vmatpush2.msra.mxu0 0.0
    %406 = vmatprep.subr.mxu0 0.0
    %407 = vmatpush2.msra.mxu0 0.0
    %408 = vmatprep.subr.mxu0 0.0
    %409 = vmatpush2.msra.mxu0 0.0
    %410 = vmatprep.subr.mxu0 0.0
    %411 = vmatpush2.msra.mxu0 0.0
    %412 = vmatprep.subr.mxu0 0.0
    %413 = vmatpush2.msra.mxu0 0.0
    %414 = vmatprep.subr.mxu0 0.0
    %415 = vmatpush2.msra.mxu0 0.0
    %416 = vmatprep.subr.mxu0 0.0
    %417 = vmatpush2.msra.mxu0 0.0
    %418 = vmatprep.subr.mxu0 0.0
    %419 = vmatpush2.msra.mxu0 0.0
    %420 = vmatprep.subr.mxu0 0.0
    %421 = vmatpush2.msra.mxu0 0.0
    %422 = vmatprep.subr.mxu0 0.0
    %423 = vmatpush2.msra.mxu0 0.0
    %424 = vmatprep.mubr.f32.mxu0 0.0
    %425 = vmatmul.mubr.f32.gmra.mxu0 %v309
    %v426 = vpop.f32.mrf.mxu0
    %v427 = vadd.f32 0.0, %v426
    %v428 = vpop.f32.mrf.mxu0
    %429 = vmatprep.mubr.f32.mxu0 0.0
    %430 = vmatmul.mubr.f32.gmra.mxu0 %v312
    %v431 = vpop.f32.mrf.mxu0
    %v432 = vadd.f32 0.0, %v431
    %v433 = vpop.f32.mrf.mxu0
    %434 = vmatprep.mubr.f32.mxu0 0.0
    %435 = vmatmul.mubr.f32.gmra.mxu0 %v315
    %v436 = vpop.f32.mrf.mxu0
    %v437 = vadd.f32 0.0, %v436
    %v438 = vpop.f32.mrf.mxu0
    %439 = vmatprep.mubr.f32.mxu0 0.0
    %440 = vmatmul.mubr.f32.gmra.mxu0 %v318
    %v441 = vpop.f32.mrf.mxu0
    %v442 = vadd.f32 0.0, %v441
    %v443 = vpop.f32.mrf.mxu0
    %444 = vmatprep.mubr.f32.mxu0 0.0
    %445 = vmatmul.mubr.f32.gmra.mxu0 %v321
    %v446 = vpop.f32.mrf.mxu0
    %v447 = vadd.f32 0.0, %v446
    %v448 = vpop.f32.mrf.mxu0
    %449 = vmatprep.mubr.f32.mxu0 0.0
    %450 = vmatmul.mubr.f32.gmra.mxu0 %v324
    %v451 = vpop.f32.mrf.mxu0
    %v452 = vadd.f32 0.0, %v451
    %v453 = vpop.f32.mrf.mxu0
    %454 = vmatprep.mubr.f32.mxu0 0.0
    %455 = vmatmul.mubr.f32.gmra.mxu0 %v327
    %v456 = vpop.f32.mrf.mxu0
    %v457 = vadd.f32 0.0, %v456
    %v458 = vpop.f32.mrf.mxu0
    %459 = vmatprep.mubr.f32.mxu0 0.0
    %460 = vmatmul.mubr.f32.gmra.mxu0 %v330
    %v461 = vpop.f32.mrf.mxu0
    %v462 = vadd.f32 0.0, %v461
    %v463 = vpop.f32.mrf.mxu0
    %464 = vmatprep.mubr.f32.mxu0 0.0
    %465 = vmatmul.mubr.f32.gmra.mxu0 %v333
    %v466 = vpop.f32.mrf.mxu0
    %v467 = vadd.f32 0.0, %v466
    %v468 = vpop.f32.mrf.mxu0
    %469 = vmatprep.mubr.f32.mxu0 0.0
    %470 = vmatmul.mubr.f32.gmra.mxu0 %v336
    %v471 = vpop.f32.mrf.mxu0
    %v472 = vadd.f32 0.0, %v471
    %v473 = vpop.f32.mrf.mxu0
    %474 = vmatprep.mubr.f32.mxu0 0.0
    %475 = vmatmul.mubr.f32.gmra.mxu0 %v339
    %v476 = vpop.f32.mrf.mxu0
    %v477 = vadd.f32 0.0, %v476
    %v478 = vpop.f32.mrf.mxu0
    %479 = vmatprep.mubr.f32.mxu0 0.0
    %480 = vmatmul.mubr.f32.gmra.mxu0 %v342
    %v481 = vpop.f32.mrf.mxu0
    %v482 = vadd.f32 0.0, %v481
    %v483 = vpop.f32.mrf.mxu0
    %484 = vmatprep.mubr.f32.mxu0 0.0
    %485 = vmatmul.mubr.f32.gmra.mxu0 %v345
    %v486 = vpop.f32.mrf.mxu0
    %v487 = vadd.f32 0.0, %v486
    %v488 = vpop.f32.mrf.mxu0
    %489 = vmatprep.mubr.f32.mxu0 0.0
    %490 = vmatmul.mubr.f32.gmra.mxu0 %v348
    %v491 = vpop.f32.mrf.mxu0
    %v492 = vadd.f32 0.0, %v491
    %v493 = vpop.f32.mrf.mxu0
    %494 = vmatprep.mubr.f32.mxu0 0.0
    %495 = vmatmul.mubr.f32.gmra.mxu0 %v351
    %v496 = vpop.f32.mrf.mxu0
    %v497 = vadd.f32 0.0, %v496
    %v498 = vpop.f32.mrf.mxu0
    %499 = vmatprep.mubr.f32.mxu0 0.0
    %500 = vmatmul.mubr.f32.gmra.mxu0 %v354
    %v501 = vpop.f32.mrf.mxu0
    %v502 = vadd.f32 0.0, %v501
    %v503 = vpop.f32.mrf.mxu0
    %504 = vdwg.mxu0
    %v506 = vsel %vm250, %v270, 0
    %v509 = vsel %vm250, %v271, 0
    %v512 = vsel %vm250, %v272, 0
    %v515 = vsel %vm250, %v273, 0
    %v518 = vsel %vm250, %v274, 0
    %v521 = vsel %vm250, %v275, 0
    %v524 = vsel %vm250, %v276, 0
    %v527 = vsel %vm250, %v277, 0
    %v530 = vsel %vm250, %v278, 0
    %v533 = vsel %vm250, %v279, 0
    %v536 = vsel %vm250, %v280, 0
    %v539 = vsel %vm250, %v281, 0
    %v542 = vsel %vm250, %v282, 0
    %v545 = vsel %vm250, %v283, 0
    %v548 = vsel %vm250, %v284, 0
    %v551 = vsel %vm250, %v285, 0
    %553 = vmatprep.subr.mxu0 0.0
    %554 = vmatpush1.msra.mxu0 0.0
    %555 = vmatprep.subr.mxu0 0.0
    %556 = vmatpush1.msra.mxu0 0.0
    %557 = vmatprep.subr.mxu0 0.0
    %558 = vmatpush1.msra.mxu0 0.0
    %559 = vmatprep.subr.mxu0 0.0
    %560 = vmatpush1.msra.mxu0 0.0
    %561 = vmatprep.subr.mxu0 0.0
    %562 = vmatpush1.msra.mxu0 0.0
    %563 = vmatprep.subr.mxu0 0.0
    %564 = vmatpush1.msra.mxu0 0.0
    %565 = vmatprep.subr.mxu0 0.0
    %566 = vmatpush1.msra.mxu0 0.0
    %567 = vmatprep.subr.mxu0 0.0
    %568 = vmatpush1.msra.mxu0 0.0
    %569 = vmatprep.subr.mxu0 0.0
    %570 = vmatpush1.msra.mxu0 0.0
    %571 = vmatprep.subr.mxu0 0.0
    %572 = vmatpush1.msra.mxu0 0.0
    %573 = vmatprep.subr.mxu0 0.0
    %574 = vmatpush1.msra.mxu0 0.0
    %575 = vmatprep.subr.mxu0 0.0
    %576 = vmatpush1.msra.mxu0 0.0
    %577 = vmatprep.subr.mxu0 0.0
    %578 = vmatpush1.msra.mxu0 %v289
    %579 = vmatprep.subr.mxu0 0.0
    %580 = vmatpush1.msra.mxu0 %v288
    %581 = vmatprep.subr.mxu0 0.0
    %582 = vmatpush1.msra.mxu0 %v287
    %583 = vmatprep.subr.mxu0 0.0
    %584 = vmatpush1.msra.mxu0 %v286
    %585 = vmatprep.subr.mxu0 0.0
    %586 = vmatpush2.msra.mxu0 0.0
    %587 = vmatprep.subr.mxu0 0.0
    %588 = vmatpush2.msra.mxu0 0.0
    %589 = vmatprep.subr.mxu0 0.0
    %590 = vmatpush2.msra.mxu0 0.0
    %591 = vmatprep.subr.mxu0 0.0
    %592 = vmatpush2.msra.mxu0 0.0
    %593 = vmatprep.subr.mxu0 0.0
    %594 = vmatpush2.msra.mxu0 0.0
    %595 = vmatprep.subr.mxu0 0.0
    %596 = vmatpush2.msra.mxu0 0.0
    %597 = vmatprep.subr.mxu0 0.0
    %598 = vmatpush2.msra.mxu0 0.0
    %599 = vmatprep.subr.mxu0 0.0
    %600 = vmatpush2.msra.mxu0 0.0
    %601 = vmatprep.subr.mxu0 0.0
    %602 = vmatpush2.msra.mxu0 0.0
    %603 = vmatprep.subr.mxu0 0.0
    %604 = vmatpush2.msra.mxu0 0.0
    %605 = vmatprep.subr.mxu0 0.0
    %606 = vmatpush2.msra.mxu0 0.0
    %607 = vmatprep.subr.mxu0 0.0
    %608 = vmatpush2.msra.mxu0 0.0
    %609 = vmatprep.subr.mxu0 0.0
    %610 = vmatpush2.msra.mxu0 0.0
    %611 = vmatprep.subr.mxu0 0.0
    %612 = vmatpush2.msra.mxu0 0.0
    %613 = vmatprep.subr.mxu0 0.0
    %614 = vmatpush2.msra.mxu0 0.0
    %615 = vmatprep.subr.mxu0 0.0
    %616 = vmatpush2.msra.mxu0 0.0
    %617 = vmatprep.mubr.f32.mxu0 0.0
    %618 = vmatmul.mubr.f32.gmra.mxu0 %v506
    %v619 = vpop.f32.mrf.mxu0
    %v620 = vadd.f32 %v427, %v619
    %v621 = vpop.f32.mrf.mxu0
    %622 = vmatprep.mubr.f32.mxu0 0.0
    %623 = vmatmul.mubr.f32.gmra.mxu0 %v509
    %v624 = vpop.f32.mrf.mxu0
    %v625 = vadd.f32 %v432, %v624
    %v626 = vpop.f32.mrf.mxu0
    %627 = vmatprep.mubr.f32.mxu0 0.0
    %628 = vmatmul.mubr.f32.gmra.mxu0 %v512
    %v629 = vpop.f32.mrf.mxu0
    %v630 = vadd.f32 %v437, %v629
    %v631 = vpop.f32.mrf.mxu0
    %632 = vmatprep.mubr.f32.mxu0 0.0
    %633 = vmatmul.mubr.f32.gmra.mxu0 %v515
    %v634 = vpop.f32.mrf.mxu0
    %v635 = vadd.f32 %v442, %v634
    %v636 = vpop.f32.mrf.mxu0
    %637 = vmatprep.mubr.f32.mxu0 0.0
    %638 = vmatmul.mubr.f32.gmra.mxu0 %v518
    %v639 = vpop.f32.mrf.mxu0
    %v640 = vadd.f32 %v447, %v639
    %v641 = vpop.f32.mrf.mxu0
    %642 = vmatprep.mubr.f32.mxu0 0.0
    %643 = vmatmul.mubr.f32.gmra.mxu0 %v521
    %v644 = vpop.f32.mrf.mxu0
    %v645 = vadd.f32 %v452, %v644
    %v646 = vpop.f32.mrf.mxu0
    %647 = vmatprep.mubr.f32.mxu0 0.0
    %648 = vmatmul.mubr.f32.gmra.mxu0 %v524
    %v649 = vpop.f32.mrf.mxu0
    %v650 = vadd.f32 %v457, %v649
    %v651 = vpop.f32.mrf.mxu0
    %652 = vmatprep.mubr.f32.mxu0 0.0
    %653 = vmatmul.mubr.f32.gmra.mxu0 %v527
    %v654 = vpop.f32.mrf.mxu0
    %v655 = vadd.f32 %v462, %v654
    %v656 = vpop.f32.mrf.mxu0
    %657 = vmatprep.mubr.f32.mxu0 0.0
    %658 = vmatmul.mubr.f32.gmra.mxu0 %v530
    %v659 = vpop.f32.mrf.mxu0
    %v660 = vadd.f32 %v467, %v659
    %v661 = vpop.f32.mrf.mxu0
    %662 = vmatprep.mubr.f32.mxu0 0.0
    %663 = vmatmul.mubr.f32.gmra.mxu0 %v533
    %v664 = vpop.f32.mrf.mxu0
    %v665 = vadd.f32 %v472, %v664
    %v666 = vpop.f32.mrf.mxu0
    %667 = vmatprep.mubr.f32.mxu0 0.0
    %668 = vmatmul.mubr.f32.gmra.mxu0 %v536
    %v669 = vpop.f32.mrf.mxu0
    %v670 = vadd.f32 %v477, %v669
    %v671 = vpop.f32.mrf.mxu0
    %672 = vmatprep.mubr.f32.mxu0 0.0
    %673 = vmatmul.mubr.f32.gmra.mxu0 %v539
    %v674 = vpop.f32.mrf.mxu0
    %v675 = vadd.f32 %v482, %v674
    %v676 = vpop.f32.mrf.mxu0
    %677 = vmatprep.mubr.f32.mxu0 0.0
    %678 = vmatmul.mubr.f32.gmra.mxu0 %v542
    %v679 = vpop.f32.mrf.mxu0
    %v680 = vadd.f32 %v487, %v679
    %v681 = vpop.f32.mrf.mxu0
    %682 = vmatprep.mubr.f32.mxu0 0.0
    %683 = vmatmul.mubr.f32.gmra.mxu0 %v545
    %v684 = vpop.f32.mrf.mxu0
    %v685 = vadd.f32 %v492, %v684
    %v686 = vpop.f32.mrf.mxu0
    %687 = vmatprep.mubr.f32.mxu0 0.0
    %688 = vmatmul.mubr.f32.gmra.mxu0 %v548
    %v689 = vpop.f32.mrf.mxu0
    %v690 = vadd.f32 %v497, %v689
    %v691 = vpop.f32.mrf.mxu0
    %692 = vmatprep.mubr.f32.mxu0 0.0
    %693 = vmatmul.mubr.f32.gmra.mxu0 %v551
    %v694 = vpop.f32.mrf.mxu0
    %v695 = vadd.f32 %v502, %v694
    %v696 = vpop.f32.mrf.mxu0
    %697 = vdwg.mxu0
    %v698 = vld [vmem:[%s5] sm:$0x1]
    %v700 = vlaneseq
    %v701 = vshrl.u32 %v700, 7
    %v702 = vsub.s32 0, %v701
    %v703 = vrot.slane %v698, %v702
    %v705 = vadd.f32 %v620, %v703
    %v706 = vadd.f32 %v625, %v703
    %v707 = vadd.f32 %v630, %v703
    %v708 = vadd.f32 %v635, %v703
    %v709 = vadd.f32 %v640, %v703
    %v710 = vadd.f32 %v645, %v703
    %v711 = vadd.f32 %v650, %v703
    %v712 = vadd.f32 %v655, %v703
    %v713 = vadd.f32 %v660, %v703
    %v714 = vadd.f32 %v665, %v703
    %v715 = vadd.f32 %v670, %v703
    %v716 = vadd.f32 %v675, %v703
    %v717 = vadd.f32 %v680, %v703
    %v718 = vadd.f32 %v685, %v703
    %v719 = vadd.f32 %v690, %v703
    %v720 = vadd.f32 %v695, %v703
    %v721 = vmax.f32 %v705, 0.0
    %v722 = vmax.f32 %v706, 0.0
    %v723 = vmax.f32 %v707, 0.0
    %v724 = vmax.f32 %v708, 0.0
    %v725 = vmax.f32 %v709, 0.0
    %v726 = vmax.f32 %v710, 0.0
    %v727 = vmax.f32 %v711, 0.0
    %v728 = vmax.f32 %v712, 0.0
    %v729 = vmax.f32 %v713, 0.0
    %v730 = vmax.f32 %v714, 0.0
    %v731 = vmax.f32 %v715, 0.0
    %v732 = vmax.f32 %v716, 0.0
    %v733 = vmax.f32 %v717, 0.0
    %v734 = vmax.f32 %v718, 0.0
    %v735 = vmax.f32 %v719, 0.0
    %v736 = vmax.f32 %v720, 0.0
    %v737 = vpack.c.bf16 %v722, %v721
    %v738 = vpack.c.bf16 %v724, %v723
    %v739 = vpack.c.bf16 %v726, %v725
    %v740 = vpack.c.bf16 %v728, %v727
    %v741 = vpack.c.bf16 %v730, %v729
    %v742 = vpack.c.bf16 %v732, %v731
    %v743 = vpack.c.bf16 %v734, %v733
    %v744 = vpack.c.bf16 %v736, %v735
    %v753 = vunpack.c.l.b16 %v737
    %v754 = vunpack.c.h.b16 %v737
    %v755 = vunpack.c.l.b16 %v738
    %v756 = vunpack.c.h.b16 %v738
    %v757 = vunpack.c.l.b16 %v739
    %v758 = vunpack.c.h.b16 %v739
    %v759 = vunpack.c.l.b16 %v740
    %v760 = vunpack.c.h.b16 %v740
    %v761 = vunpack.c.l.b16 %v741
    %v762 = vunpack.c.h.b16 %v741
    %v763 = vunpack.c.l.b16 %v742
    %v764 = vunpack.c.h.b16 %v742
    %v765 = vunpack.c.l.b16 %v743
    %v766 = vunpack.c.h.b16 %v743
    %v767 = vunpack.c.l.b16 %v744
    %v768 = vunpack.c.h.b16 %v744
    %v769 = vpack.c.b16 %v753, %v753
    %v770 = vpack.c.b16 %v754, %v754
    %v771 = vpack.c.b16 %v755, %v755
    %v772 = vpack.c.b16 %v756, %v756
    %v773 = vpack.c.b16 %v757, %v757
    %v774 = vpack.c.b16 %v758, %v758
    %v775 = vpack.c.b16 %v759, %v759
    %v776 = vpack.c.b16 %v760, %v760
    %v777 = vpack.c.b16 %v761, %v761
    %v778 = vpack.c.b16 %v762, %v762
    %v779 = vpack.c.b16 %v763, %v763
    %v780 = vpack.c.b16 %v764, %v764
    %v781 = vpack.c.b16 %v765, %v765
    %v782 = vpack.c.b16 %v766, %v766
    %v783 = vpack.c.b16 %v767, %v767
    %v784 = vpack.c.b16 %v768, %v768
    %vm801 = vcmask 257024
    %802 = vst.msk [vmem:[%s6] sm:$0xf] %vm801, %v769
    %803 = vst.msk [vmem:[%s6 + $0x4] sm:$0xf] %vm801, %v770
    %804 = vst.msk [vmem:[%s6 + $0x8] sm:$0xf] %vm801, %v771
    %805 = vst.msk [vmem:[%s6 + $0xc] sm:$0xf] %vm801, %v772
    %806 = vst.msk [vmem:[%s6 + $0x10] sm:$0xf] %vm801, %v773
    %807 = vst.msk [vmem:[%s6 + $0x14] sm:$0xf] %vm801, %v774
    %808 = vst.msk [vmem:[%s6 + $0x18] sm:$0xf] %vm801, %v775
    %809 = vst.msk [vmem:[%s6 + $0x1c] sm:$0xf] %vm801, %v776
    %810 = vst.msk [vmem:[%s6 + $0x20] sm:$0xf] %vm801, %v777
    %811 = vst.msk [vmem:[%s6 + $0x24] sm:$0xf] %vm801, %v778
    %812 = vst.msk [vmem:[%s6 + $0x28] sm:$0xf] %vm801, %v779
    %813 = vst.msk [vmem:[%s6 + $0x2c] sm:$0xf] %vm801, %v780
    %814 = vst.msk [vmem:[%s6 + $0x30] sm:$0xf] %vm801, %v781
    %815 = vst.msk [vmem:[%s6 + $0x34] sm:$0xf] %vm801, %v782
    %816 = vst.msk [vmem:[%s6 + $0x38] sm:$0xf] %vm801, %v783
    %817 = vst.msk [vmem:[%s6 + $0x3c] sm:$0xf] %vm801, %v784
  $region33: #{gnn_forward_prepared.3} parent=0 // pred_fallthru
    _
  // Predicated region
  $region34: #{gnn_forward_prepared.3} parent=0 // pred_check
    _
  $region35: #{gnn_forward_prepared.3} parent=0 // pred_check_branch
    %819 = sbr.rel (0) target = $region37
  $region36: #{gnn_forward_prepared.3} parent=0 // pred_region
    _
  $region37: #{gnn_forward_prepared.3} parent=0 // pred_fallthru
    _
  // Predicated region
  $region38: #{gnn_forward_prepared.3} parent=0 // pred_check
    _
  $region39: #{gnn_forward_prepared.3} parent=0 // pred_check_branch
    %821 = sbr.rel (0) target = $region41
  $region40: #{gnn_forward_prepared.3} parent=0 // pred_region
    _
  $region41: #{gnn_forward_prepared.3} parent=0 // pred_fallthru
    _

</llo_original>
